<compile_context>
chip_gen: v7x
topology: tpu7x:2x2x1
jax: 0.10.0
libtpu: 0.0.40
codegen_flags: <defaults>
</compile_context>

<pallas_src>
import functools

import jax
import jax.numpy as jnp
import numpy as np
from jax import lax
from jax.experimental import pallas as pl
from jax.experimental.pallas import tpu as pltpu

_EPS = 1e-5
_MiB = 1024 * 1024


# -----------------------------------------------------------------------------
# Kernel
# -----------------------------------------------------------------------------
def tnet_kernel(
    x_ref,
    w1_ref, sc1_ref, sh1_ref,
    w2_ref, b2_ref, g2_ref, be2_ref,
    w3_ref, b3_ref, g3_ref, be3_ref,
    wf1_ref, bf1_ref, g4_ref, be4_ref,
    wf2_ref, bf2_ref, g5_ref, be5_ref,
    wf3_ref, bf3_ref, eye_ref,
    out_ref,
    s2_ref, q2_ref, s3_ref, q3_ref,
    hmax_ref, hmin_ref, bmax_ref, bmin_ref,
    *, acc_count):
  inv_count = 1.0 / float(acc_count)

  p = pl.program_id(0)              # pass index: 0 = bn2 stats, 1 = main pass
  b = pl.program_id(1)              # batch element
  t = pl.program_id(2)              # point tile within this batch element
  last_b = pl.num_programs(1) - 1
  last_t = pl.num_programs(2) - 1

  # ---- init the shared BN accumulators at the very first grid step ----
  @pl.when((p == 0) & (b == 0) & (t == 0))
  def _init():
    s2_ref[...] = jnp.zeros_like(s2_ref)
    q2_ref[...] = jnp.zeros_like(q2_ref)
    s3_ref[...] = jnp.zeros_like(s3_ref)
    q3_ref[...] = jnp.zeros_like(q3_ref)

  def mm(a, w_ref, bias_ref):
    # Operands may be bf16 (MXU fast path); accumulation is always f32.
    return (jnp.dot(a.astype(w_ref.dtype), w_ref[...],
                    preferred_element_type=jnp.float32) + bias_ref[...])

  def colsum(h):
    # Axis-0 column sum as a (1,T)x(T,C) MXU matmul: offloads the reduction
    # from the VPU/XLU onto idle MXU slack in the same pass.
    ones_row = jnp.ones((1, h.shape[0]), jnp.float32)
    return jnp.dot(ones_row, h, preferred_element_type=jnp.float32)

  def stats(s_ref, q_ref):
    # Biased variance from sum / sum-of-squares (training-mode BatchNorm).
    mu = s_ref[...] * inv_count
    var = jnp.maximum(q_ref[...] * inv_count - mu * mu, 0.0)
    return mu, lax.rsqrt(var + _EPS)

  # conv1 -> bn1(analytic) -> relu -> conv2 is needed by both passes.
  # x tile is (k, TILE_N): lane-dense along points, no wrapper transpose.
  x = x_ref[0]
  h1 = lax.dot_general(x.astype(w1_ref.dtype), w1_ref[...],
                       dimension_numbers=(((0,), (0,)), ((), ())),
                       preferred_element_type=jnp.float32)        # (TILE_N, 64)
  a1 = jnp.maximum(h1 * sc1_ref[...] + sh1_ref[...], 0.0)         # bn1 + relu
  h2 = mm(a1, w2_ref, b2_ref)                                     # (TILE_N, 128)

  @pl.when(p == 0)
  def _pass0():
    s2_ref[...] += colsum(h2)
    q2_ref[...] += colsum(h2 * h2)

  @pl.when(p == 1)
  def _pass1():
    mu2, inv2 = stats(s2_ref, q2_ref)
    a2 = jnp.maximum((h2 - mu2) * inv2 * g2_ref[...] + be2_ref[...], 0.0)
    h3 = mm(a2, w3_ref, b3_ref)              # (TILE_N, 1024) dominant matmul
    s3_ref[...] += colsum(h3)
    q3_ref[...] += colsum(h3 * h3)

    # Per-batch running max/min of the RAW conv3 output in a small scratch,
    # reset at the first tile of each batch and flushed once at the last tile
    # (no dynamic-row RMW on the (B,1024) buffer every grid step).
    @pl.when(t == 0)
    def _reset():
      bmax_ref[...] = jnp.full_like(bmax_ref, -jnp.inf)
      bmin_ref[...] = jnp.full_like(bmin_ref, jnp.inf)

    bmax_ref[...] = jnp.maximum(bmax_ref[...],
                                jnp.max(h3, axis=0, keepdims=True))
    bmin_ref[...] = jnp.minimum(bmin_ref[...],
                                jnp.min(h3, axis=0, keepdims=True))

    @pl.when(t == last_t)
    def _flush():
      hmax_ref[pl.ds(b, 1), :] = bmax_ref[...]
      hmin_ref[pl.ds(b, 1), :] = bmin_ref[...]

    # ---- finalize: bn3 + max-pool + FC head, once, at the last grid step ----
    @pl.when((b == last_b) & (t == last_t))
    def _finalize():
      mu3, inv3 = stats(s3_ref, q3_ref)
      scale3 = g3_ref[...] * inv3                                 # (1, 1024)
      shift3 = be3_ref[...] - mu3 * scale3
      # max_n relu(s*h + c) == relu(s * (max_n h) + c) for s>=0, min_n h else.
      hsel = jnp.where(scale3 >= 0.0, hmax_ref[...], hmin_ref[...])  # (B,1024)
      pooled = jnp.maximum(hsel * scale3 + shift3, 0.0)              # (B,1024)

      def bn_relu(h, g_ref, be_ref):
        mu = jnp.mean(h, axis=0, keepdims=True)
        var = jnp.mean(jnp.square(h - mu), axis=0, keepdims=True)
        return jnp.maximum(
            (h - mu) * lax.rsqrt(var + _EPS) * g_ref[...] + be_ref[...], 0.0)

      f = bn_relu(mm(pooled, wf1_ref, bf1_ref), g4_ref, be4_ref)   # (B, 512)
      f = bn_relu(mm(f, wf2_ref, bf2_ref), g5_ref, be5_ref)        # (B, 256)
      out_ref[...] = mm(f, wf3_ref, bf3_ref) + eye_ref[...]        # (B, k*k)


# -----------------------------------------------------------------------------
# Wrapper
# -----------------------------------------------------------------------------
_KERNEL_PARAMS = (
    "w1", "sc1", "sh1",
    "w2", "b2", "g2", "be2",
    "w3", "b3", "g3", "be3",
    "wf1", "bf1", "g4", "be4",
    "wf2", "bf2", "g5", "be5",
    "wf3", "bf3",
)
_BF16_WEIGHTS = ("w2", "w3", "wf1", "wf2")   # conv1 / fc3 stay f32 for accuracy

_VMEM_CAP_CACHE = []


def _vmem_capacity_bytes():
  """Per-TensorCore VMEM capacity; conservative fallback if query fails."""
  if _VMEM_CAP_CACHE:
    return _VMEM_CAP_CACHE[0]
  cap = None
  try:
    cap = int(pltpu.get_tpu_info().vmem_capacity_bytes)
  except Exception:
    cap = None
  if cap is None:
    try:
      kind = jax.devices()[0].device_kind.lower()
    except Exception:
      kind = ""
    if "v7" in kind:
      cap = 64 * _MiB
    elif any(v in kind for v in ("v4", "v5", "v6")):
      cap = 128 * _MiB
    else:
      cap = 32 * _MiB   # unknown / older part: stay conservative
  _VMEM_CAP_CACHE.append(cap)
  return cap


def _pick_tile_n(n, cap):
  """Largest lane-dense point tile <= cap that divides N (multiple of 128)."""
  if n <= cap:
    return n
  t = (cap // 128) * 128
  while t >= 128:
    if n % t == 0:
      return t
    t -= 128
  # TODO(synk): no 128-multiple divisor of N <= cap; fall back to a full-N
  # tile (always a legal block). A padded+masked path would be needed to tile
  # awkward huge N without corrupting the BN sums / max-min.
  return n


def _resident(shape):
  """BlockSpec that keeps a whole (small) array resident in VMEM."""
  nd = len(shape)
  return pl.BlockSpec(shape, lambda *_: (0,) * nd)


def init_tnet_params(key, k=3):
  """Deterministic synthetic parameters (PyTorch shapes, stored transposed)."""
  dims = [
      ("w1", (k, 64)), ("b1", (1, 64)), ("g1", (1, 64)), ("be1", (1, 64)),
      ("w2", (64, 128)), ("b2", (1, 128)), ("g2", (1, 128)), ("be2", (1, 128)),
      ("w3", (128, 1024)), ("b3", (1, 1024)), ("g3", (1, 1024)), ("be3", (1, 1024)),
      ("wf1", (1024, 512)), ("bf1", (1, 512)), ("g4", (1, 512)), ("be4", (1, 512)),
      ("wf2", (512, 256)), ("bf2", (1, 256)), ("g5", (1, 256)), ("be5", (1, 256)),
      ("wf3", (256, k * k)), ("bf3", (1, k * k)),
  ]
  params = {}
  keys = jax.random.split(key, len(dims))
  for (name, shape), kk in zip(dims, keys):
    if name.startswith("g"):        # BN gamma ~ 1
      params[name] = jnp.ones(shape, jnp.float32) + 0.05 * jax.random.normal(kk, shape, jnp.float32)
    elif name.startswith("be") or name.startswith("b"):   # biases / BN beta
      params[name] = 0.05 * jax.random.normal(kk, shape, jnp.float32)
    else:                           # weights
      params[name] = 0.1 * jax.random.normal(kk, shape, jnp.float32)
  return params


@functools.partial(jax.jit, static_argnames=("k", "matmul_dtype"))
def tnet_forward(x_ncw, params, k=3, matmul_dtype=jnp.bfloat16):
  """x_ncw: (B, k, N) float32, matching the PyTorch NCW Conv1d layout.

  matmul_dtype: bf16 by default (MXU fast path for w2/w3/wf1/wf2); BN math and
  conv1/fc3 stay in float32 regardless.
  """
  B, kin, N = x_ncw.shape
  assert kin == k
  cnt = B * N

  # ---- bn1 stats analytically (conv1 is affine): one cheap XLA reduction ----
  w1, b1 = params["w1"], params["b1"]
  xm = jnp.mean(x_ncw, axis=(0, 2))                                # (k,)
  gram = jnp.einsum("bin,bjn->ij", x_ncw, x_ncw) / cnt             # (k, k)
  cov = gram - jnp.outer(xm, xm)
  mu1 = xm[None, :] @ w1 + b1                                      # (1, 64)
  var1 = jnp.maximum(jnp.sum((cov @ w1) * w1, axis=0, keepdims=True), 0.0)
  inv1 = lax.rsqrt(var1 + _EPS)
  sc1 = params["g1"] * inv1
  # conv1 bias folded into the shift: bn1(x@w1 + b1) == (x@w1)*sc1 + sh1
  sh1 = params["be1"] + (b1 - mu1) * sc1

  # ---- per-generation point-tile size and VMEM budget ----
  vmem_cap = _vmem_capacity_bytes()
  if vmem_cap >= 96 * _MiB:          # v4 / v5e / v6e: 128 MiB VMEM
    tile_cap, vmem_limit = 4096, 100 * _MiB
  elif vmem_cap >= 48 * _MiB:        # v7x: 64 MiB per TensorCore
    tile_cap, vmem_limit = 2048, 56 * _MiB
  else:                              # unknown / older part
    tile_cap, vmem_limit = 1024, None
  tile_n = _pick_tile_n(N, tile_cap)
  num_tiles = N // tile_n
  assert tile_n * num_tiles == N

  kp = dict(params)
  kp["sc1"], kp["sh1"] = sc1, sh1
  flat = []
  for name in _KERNEL_PARAMS:
    arr = kp[name]
    if name in _BF16_WEIGHTS and matmul_dtype != jnp.float32:
      arr = arr.astype(matmul_dtype)
    flat.append(arr)
  eye_flat = jnp.eye(k, dtype=jnp.float32).reshape(1, k * k)

  in_specs = [pl.BlockSpec((1, k, tile_n), lambda p, b, t: (b, 0, t))]
  # TODO(synk): pipeline_mode=pl.Buffered(1) on these constant-index weight
  # blocks would reclaim ~half their VMEM on v7x; kept default for portability.
  in_specs += [_resident(a.shape) for a in flat]
  in_specs += [_resident((1, k * k))]
  out_specs = pl.BlockSpec((B, k * k), lambda p, b, t: (0, 0))

  scratch_shapes = [
      pltpu.VMEM((1, 128), jnp.float32),  pltpu.VMEM((1, 128), jnp.float32),
      pltpu.VMEM((1, 1024), jnp.float32), pltpu.VMEM((1, 1024), jnp.float32),
      pltpu.VMEM((B, 1024), jnp.float32), pltpu.VMEM((B, 1024), jnp.float32),
      pltpu.VMEM((1, 1024), jnp.float32), pltpu.VMEM((1, 1024), jnp.float32),
  ]

  param_bytes = int(sum(int(np.prod(a.shape)) * a.dtype.itemsize for a in flat))
  flops = int(B * N * (4 * k * 64 + 4 * 64 * 128 + 2 * 128 * 1024)
              + 2 * B * (1024 * 512 + 512 * 256 + 256 * k * k))
  bytes_accessed = int(2 * B * k * N * 4 + param_bytes + B * k * k * 4)

  kernel = functools.partial(tnet_kernel, acc_count=cnt)
  out_flat = pl.pallas_call(
      kernel,
      out_shape=jax.ShapeDtypeStruct((B, k * k), jnp.float32),
      grid_spec=pltpu.PrefetchScalarGridSpec(
          num_scalar_prefetch=0,
          grid=(2, B, num_tiles),
          in_specs=in_specs,
          out_specs=out_specs,
          scratch_shapes=scratch_shapes),
      compiler_params=pltpu.CompilerParams(
          # TODO(synk): on v7x, split the point-tile axis across the two
          # TensorCores (core_map + per-core partial accumulators) for ~2x.
          dimension_semantics=("arbitrary", "arbitrary", "arbitrary"),
          vmem_limit_bytes=vmem_limit),
      cost_estimate=pl.CostEstimate(
          flops=flops, transcendentals=0, bytes_accessed=bytes_accessed),
  )(x_ncw, *flat, eye_flat)
  return out_flat.reshape(B, k, k)


# -----------------------------------------------------------------------------
# Pure-JAX reference (same training-mode BN semantics as the PyTorch module)
# -----------------------------------------------------------------------------
def tnet_reference(x_ncw, params, k=3):
  B, _, N = x_ncw.shape
  x = jnp.transpose(x_ncw, (0, 2, 1)).reshape(B * N, k)

  def bn_relu(h, g, be):
    mu = jnp.mean(h, axis=0, keepdims=True)
    var = jnp.mean(jnp.square(h - mu), axis=0, keepdims=True)
    return jnp.maximum((h - mu) * lax.rsqrt(var + _EPS) * g + be, 0.0)

  h = bn_relu(x @ params["w1"] + params["b1"], params["g1"], params["be1"])
  h = bn_relu(h @ params["w2"] + params["b2"], params["g2"], params["be2"])
  h = bn_relu(h @ params["w3"] + params["b3"], params["g3"], params["be3"])
  pooled = jnp.max(h.reshape(B, N, -1), axis=1)
  f = bn_relu(pooled @ params["wf1"] + params["bf1"], params["g4"], params["be4"])
  f = bn_relu(f @ params["wf2"] + params["bf2"], params["g5"], params["be5"])
  f = f @ params["wf3"] + params["bf3"]
  return f.reshape(B, k, k) + jnp.eye(k, dtype=jnp.float32)[None]


if __name__ == "__main__":
  k = 3
  B, N = 2, 16                       # small demo shapes: batch=2, 16 points
  key = jax.random.PRNGKey(0)
  kx, kparams = jax.random.split(key)
  x = jax.random.normal(kx, (B, k, N), jnp.float32)   # NCW like PyTorch
  params = init_tnet_params(kparams, k=k)

  # Default path: bf16 matmul operands (MXU fast path). Training-mode
  # BatchNorm over a batch of 2 amplifies ulp-level differences into discrete
  # sign choices in the FC head, so this path is only sanity-checked; the
  # exact numerical check is done on the f32-operand path below.
  out = tnet_forward(x, params, k=k)
  jax.block_until_ready(out)
  assert out.shape == (B, k, k) and out.dtype == jnp.float32
  assert bool(jnp.all(jnp.isfinite(out)))

  # f32-operand path: tight check against the pure-JAX reference.
  out_f32 = tnet_forward(x, params, k=k, matmul_dtype=jnp.float32)
  jax.block_until_ready(out_f32)
  ref = tnet_reference(x, params, k=k)
  assert np.allclose(np.asarray(out_f32), np.asarray(ref), rtol=2e-3, atol=2e-3)

  print("KERNEL_OK")
</pallas_src>

<mosaic_0001>
module attributes {stable_mosaic.version = 11 : i64} {
  func.func @tnet_kernel(%arg0: i32, %arg1: i32, %arg2: i32, %arg3: memref<1x3x16xf32, #tpu.memory_space<vmem>>, %arg4: memref<3x64xf32, #tpu.memory_space<vmem>>, %arg5: memref<1x64xf32, #tpu.memory_space<vmem>>, %arg6: memref<1x64xf32, #tpu.memory_space<vmem>>, %arg7: memref<64x128xbf16, #tpu.memory_space<vmem>>, %arg8: memref<1x128xf32, #tpu.memory_space<vmem>>, %arg9: memref<1x128xf32, #tpu.memory_space<vmem>>, %arg10: memref<1x128xf32, #tpu.memory_space<vmem>>, %arg11: memref<128x1024xbf16, #tpu.memory_space<vmem>>, %arg12: memref<1x1024xf32, #tpu.memory_space<vmem>>, %arg13: memref<1x1024xf32, #tpu.memory_space<vmem>>, %arg14: memref<1x1024xf32, #tpu.memory_space<vmem>>, %arg15: memref<1024x512xbf16, #tpu.memory_space<vmem>>, %arg16: memref<1x512xf32, #tpu.memory_space<vmem>>, %arg17: memref<1x512xf32, #tpu.memory_space<vmem>>, %arg18: memref<1x512xf32, #tpu.memory_space<vmem>>, %arg19: memref<512x256xbf16, #tpu.memory_space<vmem>>, %arg20: memref<1x256xf32, #tpu.memory_space<vmem>>, %arg21: memref<1x256xf32, #tpu.memory_space<vmem>>, %arg22: memref<1x256xf32, #tpu.memory_space<vmem>>, %arg23: memref<256x9xf32, #tpu.memory_space<vmem>>, %arg24: memref<1x9xf32, #tpu.memory_space<vmem>>, %arg25: memref<1x9xf32, #tpu.memory_space<vmem>>, %arg26: memref<2x9xf32, #tpu.memory_space<vmem>>, %arg27: memref<1x128xf32, #tpu.memory_space<vmem>>, %arg28: memref<1x128xf32, #tpu.memory_space<vmem>>, %arg29: memref<1x1024xf32, #tpu.memory_space<vmem>>, %arg30: memref<1x1024xf32, #tpu.memory_space<vmem>>, %arg31: memref<2x1024xf32, #tpu.memory_space<vmem>>, %arg32: memref<2x1024xf32, #tpu.memory_space<vmem>>, %arg33: memref<1x1024xf32, #tpu.memory_space<vmem>>, %arg34: memref<1x1024xf32, #tpu.memory_space<vmem>>) attributes {dimension_semantics = [#tpu.dimension_semantics<arbitrary>, #tpu.dimension_semantics<arbitrary>, #tpu.dimension_semantics<arbitrary>], iteration_bounds = array<i64: 2, 2, 1>, scalar_prefetch = 0 : i64, scratch_operands = 8 : i64, tpu.core_type = #tpu.core_type<tc>, window_params = [{transform_indices = @transform_0, window_bounds = array<i64: 1, 3, 16>}, {pipeline_mode = #tpu.pipeline_mode<synchronous>, transform_indices = @transform_1, window_bounds = array<i64: 3, 64>}, {pipeline_mode = #tpu.pipeline_mode<synchronous>, transform_indices = @transform_2, window_bounds = array<i64: 1, 64>}, {pipeline_mode = #tpu.pipeline_mode<synchronous>, transform_indices = @transform_3, window_bounds = array<i64: 1, 64>}, {pipeline_mode = #tpu.pipeline_mode<synchronous>, transform_indices = @transform_4, window_bounds = array<i64: 64, 128>}, {pipeline_mode = #tpu.pipeline_mode<synchronous>, transform_indices = @transform_5, window_bounds = array<i64: 1, 128>}, {pipeline_mode = #tpu.pipeline_mode<synchronous>, transform_indices = @transform_6, window_bounds = array<i64: 1, 128>}, {pipeline_mode = #tpu.pipeline_mode<synchronous>, transform_indices = @transform_7, window_bounds = array<i64: 1, 128>}, {pipeline_mode = #tpu.pipeline_mode<synchronous>, transform_indices = @transform_8, window_bounds = array<i64: 128, 1024>}, {pipeline_mode = #tpu.pipeline_mode<synchronous>, transform_indices = @transform_9, window_bounds = array<i64: 1, 1024>}, {pipeline_mode = #tpu.pipeline_mode<synchronous>, transform_indices = @transform_10, window_bounds = array<i64: 1, 1024>}, {pipeline_mode = #tpu.pipeline_mode<synchronous>, transform_indices = @transform_11, window_bounds = array<i64: 1, 1024>}, {pipeline_mode = #tpu.pipeline_mode<synchronous>, transform_indices = @transform_12, window_bounds = array<i64: 1024, 512>}, {pipeline_mode = #tpu.pipeline_mode<synchronous>, transform_indices = @transform_13, window_bounds = array<i64: 1, 512>}, {pipeline_mode = #tpu.pipeline_mode<synchronous>, transform_indices = @transform_14, window_bounds = array<i64: 1, 512>}, {pipeline_mode = #tpu.pipeline_mode<synchronous>, transform_indices = @transform_15, window_bounds = array<i64: 1, 512>}, {pipeline_mode = #tpu.pipeline_mode<synchronous>, transform_indices = @transform_16, window_bounds = array<i64: 512, 256>}, {pipeline_mode = #tpu.pipeline_mode<synchronous>, transform_indices = @transform_17, window_bounds = array<i64: 1, 256>}, {pipeline_mode = #tpu.pipeline_mode<synchronous>, transform_indices = @transform_18, window_bounds = array<i64: 1, 256>}, {pipeline_mode = #tpu.pipeline_mode<synchronous>, transform_indices = @transform_19, window_bounds = array<i64: 1, 256>}, {pipeline_mode = #tpu.pipeline_mode<synchronous>, transform_indices = @transform_20, window_bounds = array<i64: 256, 9>}, {pipeline_mode = #tpu.pipeline_mode<synchronous>, transform_indices = @transform_21, window_bounds = array<i64: 1, 9>}, {pipeline_mode = #tpu.pipeline_mode<synchronous>, transform_indices = @transform_22, window_bounds = array<i64: 1, 9>}, {pipeline_mode = #tpu.pipeline_mode<synchronous>, transform_indices = @transform_23, window_bounds = array<i64: 2, 9>}]} {
    %c0_i32 = arith.constant 0 : i32
    %0 = arith.cmpi eq, %arg0, %c0_i32 : i32
    %c0_i32_0 = arith.constant 0 : i32
    %1 = arith.cmpi eq, %arg1, %c0_i32_0 : i32
    %2 = arith.andi %0, %1 : i1
    %c0_i32_1 = arith.constant 0 : i32
    %3 = arith.cmpi eq, %arg2, %c0_i32_1 : i32
    %4 = arith.andi %2, %3 : i1
    %5 = arith.extui %4 : i1 to i32
    %c0_i32_2 = arith.constant 0 : i32
    %6 = arith.cmpi ne, %5, %c0_i32_2 : i32
    scf.if %6 {
      %cst_20 = arith.constant 0.000000e+00 : f32
      %31 = vector.broadcast %cst_20 : f32 to vector<1x128xf32>
      %c0_21 = arith.constant 0 : index
      %c0_22 = arith.constant 0 : index
      %32 = vector.load %arg27[%c0_21, %c0_22] : memref<1x128xf32, #tpu.memory_space<vmem>>, vector<1x128xf32>
      tpu.vector_store %arg27[%c0_21, %c0_22], %31 {strides = array<i32>} : memref<1x128xf32, #tpu.memory_space<vmem>>, vector<1x128xf32>,
      %cst_23 = arith.constant 0.000000e+00 : f32
      %33 = vector.broadcast %cst_23 : f32 to vector<1x128xf32>
      %c0_24 = arith.constant 0 : index
      %c0_25 = arith.constant 0 : index
      %34 = vector.load %arg28[%c0_24, %c0_25] : memref<1x128xf32, #tpu.memory_space<vmem>>, vector<1x128xf32>
      tpu.vector_store %arg28[%c0_24, %c0_25], %33 {strides = array<i32>} : memref<1x128xf32, #tpu.memory_space<vmem>>, vector<1x128xf32>,
      %cst_26 = arith.constant 0.000000e+00 : f32
      %35 = vector.broadcast %cst_26 : f32 to vector<1x1024xf32>
      %c0_27 = arith.constant 0 : index
      %c0_28 = arith.constant 0 : index
      %36 = vector.load %arg29[%c0_27, %c0_28] : memref<1x1024xf32, #tpu.memory_space<vmem>>, vector<1x1024xf32>
      tpu.vector_store %arg29[%c0_27, %c0_28], %35 {strides = array<i32>} : memref<1x1024xf32, #tpu.memory_space<vmem>>, vector<1x1024xf32>,
      %cst_29 = arith.constant 0.000000e+00 : f32
      %37 = vector.broadcast %cst_29 : f32 to vector<1x1024xf32>
      %c0_30 = arith.constant 0 : index
      %c0_31 = arith.constant 0 : index
      %38 = vector.load %arg30[%c0_30, %c0_31] : memref<1x1024xf32, #tpu.memory_space<vmem>>, vector<1x1024xf32>
      tpu.vector_store %arg30[%c0_30, %c0_31], %37 {strides = array<i32>} : memref<1x1024xf32, #tpu.memory_space<vmem>>, vector<1x1024xf32>,
    } else {
    }
    %c0 = arith.constant 0 : index
    %c0_3 = arith.constant 0 : index
    %c0_4 = arith.constant 0 : index
    %7 = vector.load %arg3[%c0, %c0_3, %c0_4] : memref<1x3x16xf32, #tpu.memory_space<vmem>>, vector<1x3x16xf32>
    %8 = vector.shape_cast %7 : vector<1x3x16xf32> to vector<3x16xf32>
    %c0_5 = arith.constant 0 : index
    %c0_6 = arith.constant 0 : index
    %9 = vector.load %arg4[%c0_5, %c0_6] : memref<3x64xf32, #tpu.memory_space<vmem>>, vector<3x64xf32>
    %cst = arith.constant dense<0.000000e+00> : vector<16x64xf32>
    %10 = tpu.matmul %8, %9, %cst {dimension_numbers = #tpu.dot_dimension_numbers<[0], [0], [1], [1], [0, 1, 1, 1], [], []>} : vector<3x16xf32>, vector<3x64xf32>, vector<16x64xf32> -> vector<16x64xf32>
    %c0_7 = arith.constant 0 : index
    %c0_8 = arith.constant 0 : index
    %11 = vector.load %arg5[%c0_7, %c0_8] : memref<1x64xf32, #tpu.memory_space<vmem>>, vector<1x64xf32>
    %12 = vector.broadcast %11 : vector<1x64xf32> to vector<16x64xf32>
    %13 = arith.mulf %10, %12 : vector<16x64xf32>
    %c0_9 = arith.constant 0 : index
    %c0_10 = arith.constant 0 : index
    %14 = vector.load %arg6[%c0_9, %c0_10] : memref<1x64xf32, #tpu.memory_space<vmem>>, vector<1x64xf32>
    %15 = vector.broadcast %14 : vector<1x64xf32> to vector<16x64xf32>
    %16 = arith.addf %13, %15 : vector<16x64xf32>
    %cst_11 = arith.constant 0.000000e+00 : f32
    %17 = vector.broadcast %cst_11 : f32 to vector<16x64xf32>
    %18 = arith.maximumf %16, %17 : vector<16x64xf32>
    %19 = arith.truncf %18 : vector<16x64xf32> to vector<16x64xbf16>
    %c0_12 = arith.constant 0 : index
    %c0_13 = arith.constant 0 : index
    %20 = vector.load %arg7[%c0_12, %c0_13] : memref<64x128xbf16, #tpu.memory_space<vmem>>, vector<64x128xbf16>
    %cst_14 = arith.constant dense<0.000000e+00> : vector<16x128xf32>
    %21 = tpu.matmul %19, %20, %cst_14 {dimension_numbers = #tpu.dot_dimension_numbers<[1], [0], [0], [1], [0, 0, 1, 1], [], []>} : vector<16x64xbf16>, vector<64x128xbf16>, vector<16x128xf32> -> vector<16x128xf32>
    %c0_15 = arith.constant 0 : index
    %c0_16 = arith.constant 0 : index
    %22 = vector.load %arg8[%c0_15, %c0_16] : memref<1x128xf32, #tpu.memory_space<vmem>>, vector<1x128xf32>
    %23 = vector.broadcast %22 : vector<1x128xf32> to vector<16x128xf32>
    %24 = arith.addf %21, %23 : vector<16x128xf32>
    %c0_i32_17 = arith.constant 0 : i32
    %25 = arith.cmpi eq, %arg0, %c0_i32_17 : i32
    %26 = arith.extui %25 : i1 to i32
    %c0_i32_18 = arith.constant 0 : i32
    %27 = arith.cmpi ne, %26, %c0_i32_18 : i32
    scf.if %27 {
      %c0_20 = arith.constant 0 : index
      %c0_21 = arith.constant 0 : index
      %31 = vector.load %arg27[%c0_20, %c0_21] : memref<1x128xf32, #tpu.memory_space<vmem>>, vector<1x128xf32>
      %cst_22 = arith.constant 1.000000e+00 : f32
      %32 = vector.broadcast %cst_22 : f32 to vector<1x16xf32>
      %cst_23 = arith.constant dense<0.000000e+00> : vector<1x128xf32>
      %33 = tpu.matmul %32, %24, %cst_23 {dimension_numbers = #tpu.dot_dimension_numbers<[1], [0], [0], [1], [0, 0, 1, 1], [], []>} : vector<1x16xf32>, vector<16x128xf32>, vector<1x128xf32> -> vector<1x128xf32>
      %34 = arith.addf %31, %33 : vector<1x128xf32>
      %c0_24 = arith.constant 0 : index
      %c0_25 = arith.constant 0 : index
      %35 = vector.load %arg27[%c0_24, %c0_25] : memref<1x128xf32, #tpu.memory_space<vmem>>, vector<1x128xf32>
      tpu.vector_store %arg27[%c0_24, %c0_25], %34 {strides = array<i32>} : memref<1x128xf32, #tpu.memory_space<vmem>>, vector<1x128xf32>,
      %c0_26 = arith.constant 0 : index
      %c0_27 = arith.constant 0 : index
      %36 = vector.load %arg28[%c0_26, %c0_27] : memref<1x128xf32, #tpu.memory_space<vmem>>, vector<1x128xf32>
      %37 = arith.mulf %24, %24 : vector<16x128xf32>
      %cst_28 = arith.constant 1.000000e+00 : f32
      %38 = vector.broadcast %cst_28 : f32 to vector<1x16xf32>
      %cst_29 = arith.constant dense<0.000000e+00> : vector<1x128xf32>
      %39 = tpu.matmul %38, %37, %cst_29 {dimension_numbers = #tpu.dot_dimension_numbers<[1], [0], [0], [1], [0, 0, 1, 1], [], []>} : vector<1x16xf32>, vector<16x128xf32>, vector<1x128xf32> -> vector<1x128xf32>
      %40 = arith.addf %36, %39 : vector<1x128xf32>
      %c0_30 = arith.constant 0 : index
      %c0_31 = arith.constant 0 : index
      %41 = vector.load %arg28[%c0_30, %c0_31] : memref<1x128xf32, #tpu.memory_space<vmem>>, vector<1x128xf32>
      tpu.vector_store %arg28[%c0_30, %c0_31], %40 {strides = array<i32>} : memref<1x128xf32, #tpu.memory_space<vmem>>, vector<1x128xf32>,
    } else {
    }
    %c1_i32 = arith.constant 1 : i32
    %28 = arith.cmpi eq, %arg0, %c1_i32 : i32
    %29 = arith.extui %28 : i1 to i32
    %c0_i32_19 = arith.constant 0 : i32
    %30 = arith.cmpi ne, %29, %c0_i32_19 : i32
    scf.if %30 {
      %c0_20 = arith.constant 0 : index
      %c0_21 = arith.constant 0 : index
      %31 = vector.load %arg27[%c0_20, %c0_21] : memref<1x128xf32, #tpu.memory_space<vmem>>, vector<1x128xf32>
      %cst_22 = arith.constant 3.125000e-02 : f32
      %32 = vector.broadcast %cst_22 : f32 to vector<1x128xf32>
      %33 = arith.mulf %31, %32 : vector<1x128xf32>
      %c0_23 = arith.constant 0 : index
      %c0_24 = arith.constant 0 : index
      %34 = vector.load %arg28[%c0_23, %c0_24] : memref<1x128xf32, #tpu.memory_space<vmem>>, vector<1x128xf32>
      %cst_25 = arith.constant 3.125000e-02 : f32
      %35 = vector.broadcast %cst_25 : f32 to vector<1x128xf32>
      %36 = arith.mulf %34, %35 : vector<1x128xf32>
      %37 = arith.mulf %33, %33 : vector<1x128xf32>
      %38 = arith.subf %36, %37 : vector<1x128xf32>
      %cst_26 = arith.constant 0.000000e+00 : f32
      %39 = vector.broadcast %cst_26 : f32 to vector<1x128xf32>
      %40 = arith.maximumf %38, %39 : vector<1x128xf32>
      %cst_27 = arith.constant 9.99999974E-6 : f32
      %41 = vector.broadcast %cst_27 : f32 to vector<1x128xf32>
      %42 = arith.addf %40, %41 : vector<1x128xf32>
      %43 = math.rsqrt %42 : vector<1x128xf32>
      %44 = vector.broadcast %33 : vector<1x128xf32> to vector<16x128xf32>
      %45 = arith.subf %24, %44 : vector<16x128xf32>
      %46 = vector.broadcast %43 : vector<1x128xf32> to vector<16x128xf32>
      %47 = arith.mulf %45, %46 : vector<16x128xf32>
      %c0_28 = arith.constant 0 : index
      %c0_29 = arith.constant 0 : index
      %48 = vector.load %arg9[%c0_28, %c0_29] : memref<1x128xf32, #tpu.memory_space<vmem>>, vector<1x128xf32>
      %49 = vector.broadcast %48 : vector<1x128xf32> to vector<16x128xf32>
      %50 = arith.mulf %47, %49 : vector<16x128xf32>
      %c0_30 = arith.constant 0 : index
      %c0_31 = arith.constant 0 : index
      %51 = vector.load %arg10[%c0_30, %c0_31] : memref<1x128xf32, #tpu.memory_space<vmem>>, vector<1x128xf32>
      %52 = vector.broadcast %51 : vector<1x128xf32> to vector<16x128xf32>
      %53 = arith.addf %50, %52 : vector<16x128xf32>
      %cst_32 = arith.constant 0.000000e+00 : f32
      %54 = vector.broadcast %cst_32 : f32 to vector<16x128xf32>
      %55 = arith.maximumf %53, %54 : vector<16x128xf32>
      %56 = arith.truncf %55 : vector<16x128xf32> to vector<16x128xbf16>
      %c0_33 = arith.constant 0 : index
      %c0_34 = arith.constant 0 : index
      %57 = vector.load %arg11[%c0_33, %c0_34] : memref<128x1024xbf16, #tpu.memory_space<vmem>>, vector<128x1024xbf16>
      %cst_35 = arith.constant dense<0.000000e+00> : vector<16x1024xf32>
      %58 = tpu.matmul %56, %57, %cst_35 {dimension_numbers = #tpu.dot_dimension_numbers<[1], [0], [0], [1], [0, 0, 1, 1], [], []>} : vector<16x128xbf16>, vector<128x1024xbf16>, vector<16x1024xf32> -> vector<16x1024xf32>
      %c0_36 = arith.constant 0 : index
      %c0_37 = arith.constant 0 : index
      %59 = vector.load %arg12[%c0_36, %c0_37] : memref<1x1024xf32, #tpu.memory_space<vmem>>, vector<1x1024xf32>
      %60 = vector.broadcast %59 : vector<1x1024xf32> to vector<16x1024xf32>
      %61 = arith.addf %58, %60 : vector<16x1024xf32>
      %c0_38 = arith.constant 0 : index
      %c0_39 = arith.constant 0 : index
      %62 = vector.load %arg29[%c0_38, %c0_39] : memref<1x1024xf32, #tpu.memory_space<vmem>>, vector<1x1024xf32>
      %cst_40 = arith.constant 1.000000e+00 : f32
      %63 = vector.broadcast %cst_40 : f32 to vector<1x16xf32>
      %cst_41 = arith.constant dense<0.000000e+00> : vector<1x1024xf32>
      %64 = tpu.matmul %63, %61, %cst_41 {dimension_numbers = #tpu.dot_dimension_numbers<[1], [0], [0], [1], [0, 0, 1, 1], [], []>} : vector<1x16xf32>, vector<16x1024xf32>, vector<1x1024xf32> -> vector<1x1024xf32>
      %65 = arith.addf %62, %64 : vector<1x1024xf32>
      %c0_42 = arith.constant 0 : index
      %c0_43 = arith.constant 0 : index
      %66 = vector.load %arg29[%c0_42, %c0_43] : memref<1x1024xf32, #tpu.memory_space<vmem>>, vector<1x1024xf32>
      tpu.vector_store %arg29[%c0_42, %c0_43], %65 {strides = array<i32>} : memref<1x1024xf32, #tpu.memory_space<vmem>>, vector<1x1024xf32>,
      %c0_44 = arith.constant 0 : index
      %c0_45 = arith.constant 0 : index
      %67 = vector.load %arg30[%c0_44, %c0_45] : memref<1x1024xf32, #tpu.memory_space<vmem>>, vector<1x1024xf32>
      %68 = arith.mulf %61, %61 : vector<16x1024xf32>
      %cst_46 = arith.constant 1.000000e+00 : f32
      %69 = vector.broadcast %cst_46 : f32 to vector<1x16xf32>
      %cst_47 = arith.constant dense<0.000000e+00> : vector<1x1024xf32>
      %70 = tpu.matmul %69, %68, %cst_47 {dimension_numbers = #tpu.dot_dimension_numbers<[1], [0], [0], [1], [0, 0, 1, 1], [], []>} : vector<1x16xf32>, vector<16x1024xf32>, vector<1x1024xf32> -> vector<1x1024xf32>
      %71 = arith.addf %67, %70 : vector<1x1024xf32>
      %c0_48 = arith.constant 0 : index
      %c0_49 = arith.constant 0 : index
      %72 = vector.load %arg30[%c0_48, %c0_49] : memref<1x1024xf32, #tpu.memory_space<vmem>>, vector<1x1024xf32>
      tpu.vector_store %arg30[%c0_48, %c0_49], %71 {strides = array<i32>} : memref<1x1024xf32, #tpu.memory_space<vmem>>, vector<1x1024xf32>,
      %c0_i32_50 = arith.constant 0 : i32
      %73 = arith.cmpi eq, %arg2, %c0_i32_50 : i32
      %74 = arith.extui %73 : i1 to i32
      %c0_i32_51 = arith.constant 0 : i32
      %75 = arith.cmpi ne, %74, %c0_i32_51 : i32
      scf.if %75 {
        %cst_67 = arith.constant 0xFF800000 : f32
        %94 = vector.broadcast %cst_67 : f32 to vector<1x1024xf32>
        %c0_68 = arith.constant 0 : index
        %c0_69 = arith.constant 0 : index
        %95 = vector.load %arg33[%c0_68, %c0_69] : memref<1x1024xf32, #tpu.memory_space<vmem>>, vector<1x1024xf32>
        tpu.vector_store %arg33[%c0_68, %c0_69], %94 {strides = array<i32>} : memref<1x1024xf32, #tpu.memory_space<vmem>>, vector<1x1024xf32>,
        %cst_70 = arith.constant 0x7F800000 : f32
        %96 = vector.broadcast %cst_70 : f32 to vector<1x1024xf32>
        %c0_71 = arith.constant 0 : index
        %c0_72 = arith.constant 0 : index
        %97 = vector.load %arg34[%c0_71, %c0_72] : memref<1x1024xf32, #tpu.memory_space<vmem>>, vector<1x1024xf32>
        tpu.vector_store %arg34[%c0_71, %c0_72], %96 {strides = array<i32>} : memref<1x1024xf32, #tpu.memory_space<vmem>>, vector<1x1024xf32>,
      } else {
      }
      %c0_52 = arith.constant 0 : index
      %c0_53 = arith.constant 0 : index
      %76 = vector.load %arg33[%c0_52, %c0_53] : memref<1x1024xf32, #tpu.memory_space<vmem>>, vector<1x1024xf32>
      %cst_54 = arith.constant dense<0xFF800000> : vector<1024xf32>
      %77 = vector.multi_reduction <maximumf>, %61, %cst_54 [0] : vector<16x1024xf32> to vector<1024xf32>
      %78 = vector.shape_cast %77 : vector<1024xf32> to vector<1x1024xf32>
      %79 = arith.maximumf %76, %78 : vector<1x1024xf32>
      %c0_55 = arith.constant 0 : index
      %c0_56 = arith.constant 0 : index
      %80 = vector.load %arg33[%c0_55, %c0_56] : memref<1x1024xf32, #tpu.memory_space<vmem>>, vector<1x1024xf32>
      tpu.vector_store %arg33[%c0_55, %c0_56], %79 {strides = array<i32>} : memref<1x1024xf32, #tpu.memory_space<vmem>>, vector<1x1024xf32>,
      %c0_57 = arith.constant 0 : index
      %c0_58 = arith.constant 0 : index
      %81 = vector.load %arg34[%c0_57, %c0_58] : memref<1x1024xf32, #tpu.memory_space<vmem>>, vector<1x1024xf32>
      %cst_59 = arith.constant dense<0x7F800000> : vector<1024xf32>
      %82 = vector.multi_reduction <minimumf>, %61, %cst_59 [0] : vector<16x1024xf32> to vector<1024xf32>
      %83 = vector.shape_cast %82 : vector<1024xf32> to vector<1x1024xf32>
      %84 = arith.minimumf %81, %83 : vector<1x1024xf32>
      %c0_60 = arith.constant 0 : index
      %c0_61 = arith.constant 0 : index
      %85 = vector.load %arg34[%c0_60, %c0_61] : memref<1x1024xf32, #tpu.memory_space<vmem>>, vector<1x1024xf32>
      tpu.vector_store %arg34[%c0_60, %c0_61], %84 {strides = array<i32>} : memref<1x1024xf32, #tpu.memory_space<vmem>>, vector<1x1024xf32>,
      %c0_i32_62 = arith.constant 0 : i32
      %86 = arith.cmpi eq, %arg2, %c0_i32_62 : i32
      %87 = arith.extui %86 : i1 to i32
      %c0_i32_63 = arith.constant 0 : i32
      %88 = arith.cmpi ne, %87, %c0_i32_63 : i32
      scf.if %88 {
        %c0_67 = arith.constant 0 : index
        %c0_68 = arith.constant 0 : index
        %94 = vector.load %arg33[%c0_67, %c0_68] : memref<1x1024xf32, #tpu.memory_space<vmem>>, vector<1x1024xf32>
        %95 = arith.index_cast %arg1 : i32 to index
        %c0_69 = arith.constant 0 : index
        %96 = vector.load %arg31[%95, %c0_69] : memref<2x1024xf32, #tpu.memory_space<vmem>>, vector<1x1024xf32>
        tpu.vector_store %arg31[%95, %c0_69], %94 {strides = array<i32>} : memref<2x1024xf32, #tpu.memory_space<vmem>>, vector<1x1024xf32>,
        %c0_70 = arith.constant 0 : index
        %c0_71 = arith.constant 0 : index
        %97 = vector.load %arg34[%c0_70, %c0_71] : memref<1x1024xf32, #tpu.memory_space<vmem>>, vector<1x1024xf32>
        %98 = arith.index_cast %arg1 : i32 to index
        %c0_72 = arith.constant 0 : index
        %99 = vector.load %arg32[%98, %c0_72] : memref<2x1024xf32, #tpu.memory_space<vmem>>, vector<1x1024xf32>
        tpu.vector_store %arg32[%98, %c0_72], %97 {strides = array<i32>} : memref<2x1024xf32, #tpu.memory_space<vmem>>, vector<1x1024xf32>,
      } else {
      }
      %c1_i32_64 = arith.constant 1 : i32
      %89 = arith.cmpi eq, %arg1, %c1_i32_64 : i32
      %c0_i32_65 = arith.constant 0 : i32
      %90 = arith.cmpi eq, %arg2, %c0_i32_65 : i32
      %91 = arith.andi %89, %90 : i1
      %92 = arith.extui %91 : i1 to i32
      %c0_i32_66 = arith.constant 0 : i32
      %93 = arith.cmpi ne, %92, %c0_i32_66 : i32
      scf.if %93 {
        %c0_67 = arith.constant 0 : index
        %c0_68 = arith.constant 0 : index
        %94 = vector.load %arg29[%c0_67, %c0_68] : memref<1x1024xf32, #tpu.memory_space<vmem>>, vector<1x1024xf32>
        %cst_69 = arith.constant 3.125000e-02 : f32
        %95 = vector.broadcast %cst_69 : f32 to vector<1x1024xf32>
        %96 = arith.mulf %94, %95 : vector<1x1024xf32>
        %c0_70 = arith.constant 0 : index
        %c0_71 = arith.constant 0 : index
        %97 = vector.load %arg30[%c0_70, %c0_71] : memref<1x1024xf32, #tpu.memory_space<vmem>>, vector<1x1024xf32>
        %cst_72 = arith.constant 3.125000e-02 : f32
        %98 = vector.broadcast %cst_72 : f32 to vector<1x1024xf32>
        %99 = arith.mulf %97, %98 : vector<1x1024xf32>
        %100 = arith.mulf %96, %96 : vector<1x1024xf32>
        %101 = arith.subf %99, %100 : vector<1x1024xf32>
        %cst_73 = arith.constant 0.000000e+00 : f32
        %102 = vector.broadcast %cst_73 : f32 to vector<1x1024xf32>
        %103 = arith.maximumf %101, %102 : vector<1x1024xf32>
        %cst_74 = arith.constant 9.99999974E-6 : f32
        %104 = vector.broadcast %cst_74 : f32 to vector<1x1024xf32>
        %105 = arith.addf %103, %104 : vector<1x1024xf32>
        %106 = math.rsqrt %105 : vector<1x1024xf32>
        %c0_75 = arith.constant 0 : index
        %c0_76 = arith.constant 0 : index
        %107 = vector.load %arg13[%c0_75, %c0_76] : memref<1x1024xf32, #tpu.memory_space<vmem>>, vector<1x1024xf32>
        %108 = arith.mulf %107, %106 : vector<1x1024xf32>
        %c0_77 = arith.constant 0 : index
        %c0_78 = arith.constant 0 : index
        %109 = vector.load %arg14[%c0_77, %c0_78] : memref<1x1024xf32, #tpu.memory_space<vmem>>, vector<1x1024xf32>
        %110 = arith.mulf %96, %108 : vector<1x1024xf32>
        %111 = arith.subf %109, %110 : vector<1x1024xf32>
        %cst_79 = arith.constant 0.000000e+00 : f32
        %112 = vector.broadcast %cst_79 : f32 to vector<1x1024xf32>
        %113 = arith.cmpf oge, %108, %112 : vector<1x1024xf32>
        %c0_80 = arith.constant 0 : index
        %c0_81 = arith.constant 0 : index
        %114 = vector.load %arg31[%c0_80, %c0_81] : memref<2x1024xf32, #tpu.memory_space<vmem>>, vector<2x1024xf32>
        %c0_82 = arith.constant 0 : index
        %c0_83 = arith.constant 0 : index
        %115 = vector.load %arg32[%c0_82, %c0_83] : memref<2x1024xf32, #tpu.memory_space<vmem>>, vector<2x1024xf32>
        %116 = vector.shape_cast %113 : vector<1x1024xi1> to vector<1x1024xi1>
        %117 = vector.broadcast %116 : vector<1x1024xi1> to vector<2x1024xi1>
        %118 = arith.select %117, %114, %115 : vector<2x1024xi1>, vector<2x1024xf32>
        %119 = vector.broadcast %108 : vector<1x1024xf32> to vector<2x1024xf32>
        %120 = arith.mulf %118, %119 : vector<2x1024xf32>
        %121 = vector.broadcast %111 : vector<1x1024xf32> to vector<2x1024xf32>
        %122 = arith.addf %120, %121 : vector<2x1024xf32>
        %cst_84 = arith.constant 0.000000e+00 : f32
        %123 = vector.broadcast %cst_84 : f32 to vector<2x1024xf32>
        %124 = arith.maximumf %122, %123 : vector<2x1024xf32>
        %125 = arith.truncf %124 : vector<2x1024xf32> to vector<2x1024xbf16>
        %c0_85 = arith.constant 0 : index
        %c0_86 = arith.constant 0 : index
        %126 = vector.load %arg15[%c0_85, %c0_86] : memref<1024x512xbf16, #tpu.memory_space<vmem>>, vector<1024x512xbf16>
        %cst_87 = arith.constant dense<0.000000e+00> : vector<2x512xf32>
        %127 = tpu.matmul %125, %126, %cst_87 {dimension_numbers = #tpu.dot_dimension_numbers<[1], [0], [0], [1], [0, 0, 1, 1], [], []>} : vector<2x1024xbf16>, vector<1024x512xbf16>, vector<2x512xf32> -> vector<2x512xf32>
        %c0_88 = arith.constant 0 : index
        %c0_89 = arith.constant 0 : index
        %128 = vector.load %arg16[%c0_88, %c0_89] : memref<1x512xf32, #tpu.memory_space<vmem>>, vector<1x512xf32>
        %129 = vector.broadcast %128 : vector<1x512xf32> to vector<2x512xf32>
        %130 = arith.addf %127, %129 : vector<2x512xf32>
        %cst_90 = arith.constant dense<0.000000e+00> : vector<512xf32>
        %131 = vector.multi_reduction <add>, %130, %cst_90 [0] : vector<2x512xf32> to vector<512xf32>
        %132 = vector.shape_cast %131 : vector<512xf32> to vector<1x512xf32>
        %cst_91 = arith.constant 2.000000e+00 : f32
        %133 = vector.broadcast %cst_91 : f32 to vector<1x512xf32>
        %134 = arith.divf %132, %133 : vector<1x512xf32>
        %135 = vector.broadcast %134 : vector<1x512xf32> to vector<2x512xf32>
        %136 = arith.subf %130, %135 : vector<2x512xf32>
        %137 = arith.mulf %136, %136 : vector<2x512xf32>
        %cst_92 = arith.constant dense<0.000000e+00> : vector<512xf32>
        %138 = vector.multi_reduction <add>, %137, %cst_92 [0] : vector<2x512xf32> to vector<512xf32>
        %139 = vector.shape_cast %138 : vector<512xf32> to vector<1x512xf32>
        %cst_93 = arith.constant 2.000000e+00 : f32
        %140 = vector.broadcast %cst_93 : f32 to vector<1x512xf32>
        %141 = arith.divf %139, %140 : vector<1x512xf32>
        %142 = vector.broadcast %134 : vector<1x512xf32> to vector<2x512xf32>
        %143 = arith.subf %130, %142 : vector<2x512xf32>
        %cst_94 = arith.constant 9.99999974E-6 : f32
        %144 = vector.broadcast %cst_94 : f32 to vector<1x512xf32>
        %145 = arith.addf %141, %144 : vector<1x512xf32>
        %146 = math.rsqrt %145 : vector<1x512xf32>
        %147 = vector.broadcast %146 : vector<1x512xf32> to vector<2x512xf32>
        %148 = arith.mulf %143, %147 : vector<2x512xf32>
        %c0_95 = arith.constant 0 : index
        %c0_96 = arith.constant 0 : index
        %149 = vector.load %arg17[%c0_95, %c0_96] : memref<1x512xf32, #tpu.memory_space<vmem>>, vector<1x512xf32>
        %150 = vector.broadcast %149 : vector<1x512xf32> to vector<2x512xf32>
        %151 = arith.mulf %148, %150 : vector<2x512xf32>
        %c0_97 = arith.constant 0 : index
        %c0_98 = arith.constant 0 : index
        %152 = vector.load %arg18[%c0_97, %c0_98] : memref<1x512xf32, #tpu.memory_space<vmem>>, vector<1x512xf32>
        %153 = vector.broadcast %152 : vector<1x512xf32> to vector<2x512xf32>
        %154 = arith.addf %151, %153 : vector<2x512xf32>
        %cst_99 = arith.constant 0.000000e+00 : f32
        %155 = vector.broadcast %cst_99 : f32 to vector<2x512xf32>
        %156 = arith.maximumf %154, %155 : vector<2x512xf32>
        %157 = arith.truncf %156 : vector<2x512xf32> to vector<2x512xbf16>
        %c0_100 = arith.constant 0 : index
        %c0_101 = arith.constant 0 : index
        %158 = vector.load %arg19[%c0_100, %c0_101] : memref<512x256xbf16, #tpu.memory_space<vmem>>, vector<512x256xbf16>
        %cst_102 = arith.constant dense<0.000000e+00> : vector<2x256xf32>
        %159 = tpu.matmul %157, %158, %cst_102 {dimension_numbers = #tpu.dot_dimension_numbers<[1], [0], [0], [1], [0, 0, 1, 1], [], []>} : vector<2x512xbf16>, vector<512x256xbf16>, vector<2x256xf32> -> vector<2x256xf32>
        %c0_103 = arith.constant 0 : index
        %c0_104 = arith.constant 0 : index
        %160 = vector.load %arg20[%c0_103, %c0_104] : memref<1x256xf32, #tpu.memory_space<vmem>>, vector<1x256xf32>
        %161 = vector.broadcast %160 : vector<1x256xf32> to vector<2x256xf32>
        %162 = arith.addf %159, %161 : vector<2x256xf32>
        %cst_105 = arith.constant dense<0.000000e+00> : vector<256xf32>
        %163 = vector.multi_reduction <add>, %162, %cst_105 [0] : vector<2x256xf32> to vector<256xf32>
        %164 = vector.shape_cast %163 : vector<256xf32> to vector<1x256xf32>
        %cst_106 = arith.constant 2.000000e+00 : f32
        %165 = vector.broadcast %cst_106 : f32 to vector<1x256xf32>
        %166 = arith.divf %164, %165 : vector<1x256xf32>
        %167 = vector.broadcast %166 : vector<1x256xf32> to vector<2x256xf32>
        %168 = arith.subf %162, %167 : vector<2x256xf32>
        %169 = arith.mulf %168, %168 : vector<2x256xf32>
        %cst_107 = arith.constant dense<0.000000e+00> : vector<256xf32>
        %170 = vector.multi_reduction <add>, %169, %cst_107 [0] : vector<2x256xf32> to vector<256xf32>
        %171 = vector.shape_cast %170 : vector<256xf32> to vector<1x256xf32>
        %cst_108 = arith.constant 2.000000e+00 : f32
        %172 = vector.broadcast %cst_108 : f32 to vector<1x256xf32>
        %173 = arith.divf %171, %172 : vector<1x256xf32>
        %174 = vector.broadcast %166 : vector<1x256xf32> to vector<2x256xf32>
        %175 = arith.subf %162, %174 : vector<2x256xf32>
        %cst_109 = arith.constant 9.99999974E-6 : f32
        %176 = vector.broadcast %cst_109 : f32 to vector<1x256xf32>
        %177 = arith.addf %173, %176 : vector<1x256xf32>
        %178 = math.rsqrt %177 : vector<1x256xf32>
        %179 = vector.broadcast %178 : vector<1x256xf32> to vector<2x256xf32>
        %180 = arith.mulf %175, %179 : vector<2x256xf32>
        %c0_110 = arith.constant 0 : index
        %c0_111 = arith.constant 0 : index
        %181 = vector.load %arg21[%c0_110, %c0_111] : memref<1x256xf32, #tpu.memory_space<vmem>>, vector<1x256xf32>
        %182 = vector.broadcast %181 : vector<1x256xf32> to vector<2x256xf32>
        %183 = arith.mulf %180, %182 : vector<2x256xf32>
        %c0_112 = arith.constant 0 : index
        %c0_113 = arith.constant 0 : index
        %184 = vector.load %arg22[%c0_112, %c0_113] : memref<1x256xf32, #tpu.memory_space<vmem>>, vector<1x256xf32>
        %185 = vector.broadcast %184 : vector<1x256xf32> to vector<2x256xf32>
        %186 = arith.addf %183, %185 : vector<2x256xf32>
        %cst_114 = arith.constant 0.000000e+00 : f32
        %187 = vector.broadcast %cst_114 : f32 to vector<2x256xf32>
        %188 = arith.maximumf %186, %187 : vector<2x256xf32>
        %c0_115 = arith.constant 0 : index
        %c0_116 = arith.constant 0 : index
        %189 = vector.load %arg23[%c0_115, %c0_116] : memref<256x9xf32, #tpu.memory_space<vmem>>, vector<256x9xf32>
        %cst_117 = arith.constant dense<0.000000e+00> : vector<2x9xf32>
        %190 = tpu.matmul %188, %189, %cst_117 {dimension_numbers = #tpu.dot_dimension_numbers<[1], [0], [0], [1], [0, 0, 1, 1], [], []>} : vector<2x256xf32>, vector<256x9xf32>, vector<2x9xf32> -> vector<2x9xf32>
        %c0_118 = arith.constant 0 : index
        %c0_119 = arith.constant 0 : index
        %191 = vector.load %arg24[%c0_118, %c0_119] : memref<1x9xf32, #tpu.memory_space<vmem>>, vector<1x9xf32>
        %192 = vector.broadcast %191 : vector<1x9xf32> to vector<2x9xf32>
        %193 = arith.addf %190, %192 : vector<2x9xf32>
        %c0_120 = arith.constant 0 : index
        %c0_121 = arith.constant 0 : index
        %194 = vector.load %arg25[%c0_120, %c0_121] : memref<1x9xf32, #tpu.memory_space<vmem>>, vector<1x9xf32>
        %195 = vector.broadcast %194 : vector<1x9xf32> to vector<2x9xf32>
        %196 = arith.addf %193, %195 : vector<2x9xf32>
        %c0_122 = arith.constant 0 : index
        %c0_123 = arith.constant 0 : index
        %197 = vector.load %arg26[%c0_122, %c0_123] : memref<2x9xf32, #tpu.memory_space<vmem>>, vector<2x9xf32>
        tpu.vector_store %arg26[%c0_122, %c0_123], %196 {strides = array<i32>} : memref<2x9xf32, #tpu.memory_space<vmem>>, vector<2x9xf32>,
      } else {
      }
    } else {
    }
    return
  }
  func.func @transform_0(%arg0: i32, %arg1: i32, %arg2: i32) -> (i32, i32, i32) {
    %c0_i32 = arith.constant 0 : i32
    %c0_i32_0 = arith.constant 0 : i32
    return %arg1, %c0_i32, %arg2 : i32, i32, i32
  }
  func.func @transform_1(%arg0: i32, %arg1: i32, %arg2: i32) -> (i32, i32) {
    %c0_i32 = arith.constant 0 : i32
    %c0_i32_0 = arith.constant 0 : i32
    %c0_i32_1 = arith.constant 0 : i32
    return %c0_i32, %c0_i32_0 : i32, i32
  }
  func.func @transform_2(%arg0: i32, %arg1: i32, %arg2: i32) -> (i32, i32) {
    %c0_i32 = arith.constant 0 : i32
    %c0_i32_0 = arith.constant 0 : i32
    %c0_i32_1 = arith.constant 0 : i32
    return %c0_i32, %c0_i32_0 : i32, i32
  }
  func.func @transform_3(%arg0: i32, %arg1: i32, %arg2: i32) -> (i32, i32) {
    %c0_i32 = arith.constant 0 : i32
    %c0_i32_0 = arith.constant 0 : i32
    %c0_i32_1 = arith.constant 0 : i32
    return %c0_i32, %c0_i32_0 : i32, i32
  }
  func.func @transform_4(%arg0: i32, %arg1: i32, %arg2: i32) -> (i32, i32) {
    %c0_i32 = arith.constant 0 : i32
    %c0_i32_0 = arith.constant 0 : i32
    %c0_i32_1 = arith.constant 0 : i32
    return %c0_i32, %c0_i32_0 : i32, i32
  }
  func.func @transform_5(%arg0: i32, %arg1: i32, %arg2: i32) -> (i32, i32) {
    %c0_i32 = arith.constant 0 : i32
    %c0_i32_0 = arith.constant 0 : i32
    %c0_i32_1 = arith.constant 0 : i32
    return %c0_i32, %c0_i32_0 : i32, i32
  }
  func.func @transform_6(%arg0: i32, %arg1: i32, %arg2: i32) -> (i32, i32) {
    %c0_i32 = arith.constant 0 : i32
    %c0_i32_0 = arith.constant 0 : i32
    %c0_i32_1 = arith.constant 0 : i32
    return %c0_i32, %c0_i32_0 : i32, i32
  }
  func.func @transform_7(%arg0: i32, %arg1: i32, %arg2: i32) -> (i32, i32) {
    %c0_i32 = arith.constant 0 : i32
    %c0_i32_0 = arith.constant 0 : i32
    %c0_i32_1 = arith.constant 0 : i32
    return %c0_i32, %c0_i32_0 : i32, i32
  }
  func.func @transform_8(%arg0: i32, %arg1: i32, %arg2: i32) -> (i32, i32) {
    %c0_i32 = arith.constant 0 : i32
    %c0_i32_0 = arith.constant 0 : i32
    %c0_i32_1 = arith.constant 0 : i32
    return %c0_i32, %c0_i32_0 : i32, i32
  }
  func.func @transform_9(%arg0: i32, %arg1: i32, %arg2: i32) -> (i32, i32) {
    %c0_i32 = arith.constant 0 : i32
    %c0_i32_0 = arith.constant 0 : i32
    %c0_i32_1 = arith.constant 0 : i32
    return %c0_i32, %c0_i32_0 : i32, i32
  }
  func.func @transform_10(%arg0: i32, %arg1: i32, %arg2: i32) -> (i32, i32) {
    %c0_i32 = arith.constant 0 : i32
    %c0_i32_0 = arith.constant 0 : i32
    %c0_i32_1 = arith.constant 0 : i32
    return %c0_i32, %c0_i32_0 : i32, i32
  }
  func.func @transform_11(%arg0: i32, %arg1: i32, %arg2: i32) -> (i32, i32) {
    %c0_i32 = arith.constant 0 : i32
    %c0_i32_0 = arith.constant 0 : i32
    %c0_i32_1 = arith.constant 0 : i32
    return %c0_i32, %c0_i32_0 : i32, i32
  }
  func.func @transform_12(%arg0: i32, %arg1: i32, %arg2: i32) -> (i32, i32) {
    %c0_i32 = arith.constant 0 : i32
    %c0_i32_0 = arith.constant 0 : i32
    %c0_i32_1 = arith.constant 0 : i32
    return %c0_i32, %c0_i32_0 : i32, i32
  }
  func.func @transform_13(%arg0: i32, %arg1: i32, %arg2: i32) -> (i32, i32) {
    %c0_i32 = arith.constant 0 : i32
    %c0_i32_0 = arith.constant 0 : i32
    %c0_i32_1 = arith.constant 0 : i32
    return %c0_i32, %c0_i32_0 : i32, i32
  }
  func.func @transform_14(%arg0: i32, %arg1: i32, %arg2: i32) -> (i32, i32) {
    %c0_i32 = arith.constant 0 : i32
    %c0_i32_0 = arith.constant 0 : i32
    %c0_i32_1 = arith.constant 0 : i32
    return %c0_i32, %c0_i32_0 : i32, i32
  }
  func.func @transform_15(%arg0: i32, %arg1: i32, %arg2: i32) -> (i32, i32) {
    %c0_i32 = arith.constant 0 : i32
    %c0_i32_0 = arith.constant 0 : i32
    %c0_i32_1 = arith.constant 0 : i32
    return %c0_i32, %c0_i32_0 : i32, i32
  }
  func.func @transform_16(%arg0: i32, %arg1: i32, %arg2: i32) -> (i32, i32) {
    %c0_i32 = arith.constant 0 : i32
    %c0_i32_0 = arith.constant 0 : i32
    %c0_i32_1 = arith.constant 0 : i32
    return %c0_i32, %c0_i32_0 : i32, i32
  }
  func.func @transform_17(%arg0: i32, %arg1: i32, %arg2: i32) -> (i32, i32) {
    %c0_i32 = arith.constant 0 : i32
    %c0_i32_0 = arith.constant 0 : i32
    %c0_i32_1 = arith.constant 0 : i32
    return %c0_i32, %c0_i32_0 : i32, i32
  }
  func.func @transform_18(%arg0: i32, %arg1: i32, %arg2: i32) -> (i32, i32) {
    %c0_i32 = arith.constant 0 : i32
    %c0_i32_0 = arith.constant 0 : i32
    %c0_i32_1 = arith.constant 0 : i32
    return %c0_i32, %c0_i32_0 : i32, i32
  }
  func.func @transform_19(%arg0: i32, %arg1: i32, %arg2: i32) -> (i32, i32) {
    %c0_i32 = arith.constant 0 : i32
    %c0_i32_0 = arith.constant 0 : i32
    %c0_i32_1 = arith.constant 0 : i32
    return %c0_i32, %c0_i32_0 : i32, i32
  }
  func.func @transform_20(%arg0: i32, %arg1: i32, %arg2: i32) -> (i32, i32) {
    %c0_i32 = arith.constant 0 : i32
    %c0_i32_0 = arith.constant 0 : i32
    %c0_i32_1 = arith.constant 0 : i32
    return %c0_i32, %c0_i32_0 : i32, i32
  }
  func.func @transform_21(%arg0: i32, %arg1: i32, %arg2: i32) -> (i32, i32) {
    %c0_i32 = arith.constant 0 : i32
    %c0_i32_0 = arith.constant 0 : i32
    %c0_i32_1 = arith.constant 0 : i32
    return %c0_i32, %c0_i32_0 : i32, i32
  }
  func.func @transform_22(%arg0: i32, %arg1: i32, %arg2: i32) -> (i32, i32) {
    %c0_i32 = arith.constant 0 : i32
    %c0_i32_0 = arith.constant 0 : i32
    %c0_i32_1 = arith.constant 0 : i32
    return %c0_i32, %c0_i32_0 : i32, i32
  }
  func.func @transform_23(%arg0: i32, %arg1: i32, %arg2: i32) -> (i32, i32) {
    %c0_i32 = arith.constant 0 : i32
    %c0_i32_0 = arith.constant 0 : i32
    %c0_i32_1 = arith.constant 0 : i32
    return %c0_i32, %c0_i32_0 : i32, i32
  }
}

</mosaic_0001>

<llo_original>
// kernel: tnet_forward.1
$region0: #{tnet_forward.1}
  #allocation0 [shape = 'u32[]', space=smem, size = 0x4, offset = 0x4, fixed_abs, tag = 'smem constant byte address 0x4 - core index']
  #allocation1 [shape = 'u32[144,128]{1,0:T(1,128)}', space=vmem, size = 0x12000, scoped, tag = 'internal scratch']
  #allocation2 [shape = 'f32[1,128]{1,0:T(1,128)}', space=vmem, size = 0x200, scoped, tag = 'scratch operand']
  #allocation3 [shape = 'f32[1,128]{1,0:T(1,128)}', space=vmem, size = 0x200, scoped, tag = 'scratch operand']
  #allocation4 [shape = 'f32[1,1024]{1,0:T(1,128)}', space=vmem, size = 0x1000, scoped, tag = 'scratch operand']
  #allocation5 [shape = 'f32[1,1024]{1,0:T(1,128)}', space=vmem, size = 0x1000, scoped, tag = 'scratch operand']
  #allocation6 [shape = 'f32[2,1024]{1,0:T(2,128)}', space=vmem, size = 0x2000, scoped, tag = 'scratch operand']
  #allocation7 [shape = 'f32[2,1024]{1,0:T(2,128)}', space=vmem, size = 0x2000, scoped, tag = 'scratch operand']
  #allocation8 [shape = 'f32[1,1024]{1,0:T(1,128)}', space=vmem, size = 0x1000, scoped, tag = 'scratch operand']
  #allocation9 [shape = 'f32[1,1024]{1,0:T(1,128)}', space=vmem, size = 0x1000, scoped, tag = 'scratch operand']
  %s0 = inlined_call_operand.vmem [shape: f32[2,3,16], index: 0, kind: input, shape index: {}]
  %s1 = inlined_call_operand.vmem [shape: f32[3,64], index: 1, kind: input, shape index: {}]
  %s2 = inlined_call_operand.vmem [shape: f32[1,64], index: 2, kind: input, shape index: {}]
  %s3 = inlined_call_operand.vmem [shape: f32[1,64], index: 3, kind: input, shape index: {}]
  %s4 = inlined_call_operand.vmem [shape: bf16[64,128], index: 4, kind: input, shape index: {}]
  %s5 = inlined_call_operand.vmem [shape: f32[1,128], index: 5, kind: input, shape index: {}]
  %s6 = inlined_call_operand.vmem [shape: f32[1,128], index: 6, kind: input, shape index: {}]
  %s7 = inlined_call_operand.vmem [shape: f32[1,128], index: 7, kind: input, shape index: {}]
  %s8 = inlined_call_operand.vmem [shape: bf16[128,1024], index: 8, kind: input, shape index: {}]
  %s9 = inlined_call_operand.vmem [shape: f32[1,1024], index: 9, kind: input, shape index: {}]
  %s10 = inlined_call_operand.vmem [shape: f32[1,1024], index: 10, kind: input, shape index: {}]
  %s11 = inlined_call_operand.vmem [shape: f32[1,1024], index: 11, kind: input, shape index: {}]
  %s12 = inlined_call_operand.vmem [shape: bf16[1024,512], index: 12, kind: input, shape index: {}]
  %s13 = inlined_call_operand.vmem [shape: f32[1,512], index: 13, kind: input, shape index: {}]
  %s14 = inlined_call_operand.vmem [shape: f32[1,512], index: 14, kind: input, shape index: {}]
  %s15 = inlined_call_operand.vmem [shape: f32[1,512], index: 15, kind: input, shape index: {}]
  %s16 = inlined_call_operand.vmem [shape: bf16[512,256], index: 16, kind: input, shape index: {}]
  %s17 = inlined_call_operand.vmem [shape: f32[1,256], index: 17, kind: input, shape index: {}]
  %s18 = inlined_call_operand.vmem [shape: f32[1,256], index: 18, kind: input, shape index: {}]
  %s19 = inlined_call_operand.vmem [shape: f32[1,256], index: 19, kind: input, shape index: {}]
  %s20 = inlined_call_operand.vmem [shape: f32[256,9], index: 20, kind: input, shape index: {}]
  %s21 = inlined_call_operand.vmem [shape: f32[1,9], index: 21, kind: input, shape index: {}]
  %s22 = inlined_call_operand.vmem [shape: f32[1,9], index: 22, kind: input, shape index: {}]
  %s23 = inlined_call_operand.vmem [shape: f32[2,9], index: 23, kind: output, shape index: {}]
  %s24 = sld [smem:[#allocation0]]
  $region149: #{tnet_forward.1} parent=0
    _
  %s26 = ssub.s32 1, %s24
  %s27 = scalar_select 0, %s26, %s24
  loop: start=0, step=1, limit=6
  $region2: #{tnet_forward.1} parent=0 // loop_pre_header
    _
  $region3: #{tnet_forward.1} parent=0 // loop_header
    %s29 = sphi 0, %s33
    %p30 = scmp.ge.s32.totalorder %s29, 6
    %s36 = sphi 0, %s55
    %s37 = sphi 0, %s51
    %s38 = sphi 0, %s47
    %s39 = sphi 0, %s36
    %s40 = sphi 0, %s37
    %s41 = sphi 0, %s38
    %s42 = sphi 0, %s39
    %s43 = sphi 0, %s40
    %s44 = sphi 0, %s41
    %s60 = sphi 0, %s62
    %s63 = sphi 0, %s60
    %s64 = sphi 0, %s63
    %s80 = sphi 0, %s64
    %s84 = sphi 0, %s84
    %s86 = sphi 0, %s84
    %s87 = sphi 0, %s86
    %s101 = sphi 0, %s87
    %s105 = sphi 0, %s105
    %s107 = sphi 0, %s105
    %s108 = sphi 0, %s107
    %s122 = sphi 0, %s108
    %s126 = sphi 0, %s126
    %s128 = sphi 0, %s126
    %s129 = sphi 0, %s128
    %s143 = sphi 0, %s129
    %s147 = sphi 0, %s147
    %s149 = sphi 0, %s147
    %s150 = sphi 0, %s149
    %s164 = sphi 0, %s150
    %s168 = sphi 0, %s168
    %s170 = sphi 0, %s168
    %s171 = sphi 0, %s170
    %s185 = sphi 0, %s171
    %s189 = sphi 0, %s189
    %s191 = sphi 0, %s189
    %s192 = sphi 0, %s191
    %s206 = sphi 0, %s192
    %s210 = sphi 0, %s210
    %s212 = sphi 0, %s210
    %s213 = sphi 0, %s212
    %s227 = sphi 0, %s213
    %s231 = sphi 0, %s231
    %s233 = sphi 0, %s231
    %s234 = sphi 0, %s233
    %s248 = sphi 0, %s234
    %s252 = sphi 0, %s252
    %s254 = sphi 0, %s252
    %s255 = sphi 0, %s254
    %s269 = sphi 0, %s255
    %s273 = sphi 0, %s273
    %s275 = sphi 0, %s273
    %s276 = sphi 0, %s275
    %s290 = sphi 0, %s276
    %s294 = sphi 0, %s294
    %s296 = sphi 0, %s294
    %s297 = sphi 0, %s296
    %s311 = sphi 0, %s297
    %s315 = sphi 0, %s315
    %s317 = sphi 0, %s315
    %s318 = sphi 0, %s317
    %s332 = sphi 0, %s318
    %s336 = sphi 0, %s336
    %s338 = sphi 0, %s336
    %s339 = sphi 0, %s338
    %s353 = sphi 0, %s339
    %s357 = sphi 0, %s357
    %s359 = sphi 0, %s357
    %s360 = sphi 0, %s359
    %s374 = sphi 0, %s360
    %s378 = sphi 0, %s378
    %s380 = sphi 0, %s378
    %s381 = sphi 0, %s380
    %s395 = sphi 0, %s381
    %s399 = sphi 0, %s399
    %s401 = sphi 0, %s399
    %s402 = sphi 0, %s401
    %s416 = sphi 0, %s402
    %s420 = sphi 0, %s420
    %s422 = sphi 0, %s420
    %s423 = sphi 0, %s422
    %s437 = sphi 0, %s423
    %s441 = sphi 0, %s441
    %s443 = sphi 0, %s441
    %s444 = sphi 0, %s443
    %s458 = sphi 0, %s444
    %s462 = sphi 0, %s462
    %s464 = sphi 0, %s462
    %s465 = sphi 0, %s464
    %s479 = sphi 0, %s465
    %s483 = sphi 0, %s483
    %s485 = sphi 0, %s483
    %s486 = sphi 0, %s485
    %s500 = sphi 0, %s486
    %s504 = sphi 0, %s504
    %s506 = sphi 0, %s504
    %s507 = sphi 0, %s506
    %s521 = sphi 0, %s507
    %s525 = sphi 0, %s525
    %s527 = sphi 0, %s525
    %s528 = sphi 0, %s527
    %s542 = sphi 0, %s528
    %s546 = sphi 0, %s546
    %s548 = sphi 0, %s546
    %s549 = sphi 0, %s548
    %s563 = sphi 0, %s549
  $region4: #{tnet_forward.1} parent=0 // loop_header_branch
    %32 = sbr.rel (%p30) target = $region8
  $region5: #{tnet_forward.1} parent=0 // loop_body
    %s34 = ssub.s32 %s29, 1
    %s35 = ssub.s32 %s29, 2
    %s45 = sadd.s32 1, %s38
    %p46 = scmp.ge.s32.totalorder %s45, 1
    %s47 = scalar_select %p46, 0, %s45
    %s48 = sadd.s32 1, %s37
    %s49 = scalar_select %p46, %s48, %s37
    %p50 = scmp.ge.s32.totalorder %s49, 2
    %s51 = scalar_select %p50, 0, %s49
    %s52 = sadd.s32 1, %s36
    %s53 = scalar_select %p50, %s52, %s36
    %p54 = scmp.ge.s32.totalorder %s53, 2
    %s55 = scalar_select %p54, 0, %s53
    %s56 = ssub.s32 %s37, %s51
    %s57 = ssub.s32 %s38, %s47
    %s58 = sor.u32 %s56, %s57
    %p59 = scmp.eq.s32.totalorder %s58, 0
    %s61 = sadd.s32 %s60, 1
    %s62 = scalar_select %p59, %s60, %s61
    %p65 = pneg %p59
    %p66 = scmp.eq.s32.totalorder %s29, 3
    %p67 = por %p65, %p66
    %p68 = scmp.ne.s32.totalorder %s60, %s63
    %p69 = scmp.eq.s32.totalorder %s29, 0
    %p70 = por %p68, %p69
    %p71 = scmp.ne.s32.totalorder %s60, %s63
    %p72 = scmp.eq.s32.totalorder %s34, 3
    %p73 = por %p71, %p72
    %p74 = scmp.ne.s32.totalorder %s63, %s64
    %p75 = scmp.eq.s32.totalorder %s34, 0
    %p76 = por %p74, %p75
    %p77 = scmp.ne.s32.totalorder %s63, %s64
    %p78 = scmp.eq.s32.totalorder %s35, 3
    %p79 = por %p77, %p78
    %p81 = scmp.ne.s32.totalorder %s64, %s80
    %p82 = scmp.eq.s32.totalorder %s35, 0
    %p83 = por %p81, %p82
    %s85 = sadd.s32 %s84, 1
    %p88 = scmp.eq.s32.totalorder %s29, 3
    %p89 = scmp.ne.s32.totalorder %s84, %s86
    %p90 = scmp.eq.s32.totalorder %s29, 0
    %p91 = por %p89, %p90
    %p92 = scmp.ne.s32.totalorder %s84, %s86
    %p93 = scmp.eq.s32.totalorder %s34, 3
    %p94 = por %p92, %p93
    %p95 = scmp.ne.s32.totalorder %s86, %s87
    %p96 = scmp.eq.s32.totalorder %s34, 0
    %p97 = por %p95, %p96
    %p98 = scmp.ne.s32.totalorder %s86, %s87
    %p99 = scmp.eq.s32.totalorder %s35, 3
    %p100 = por %p98, %p99
    %p102 = scmp.ne.s32.totalorder %s87, %s101
    %p103 = scmp.eq.s32.totalorder %s35, 0
    %p104 = por %p102, %p103
    %s106 = sadd.s32 %s105, 1
    %p109 = scmp.eq.s32.totalorder %s29, 3
    %p110 = scmp.ne.s32.totalorder %s105, %s107
    %p111 = scmp.eq.s32.totalorder %s29, 0
    %p112 = por %p110, %p111
    %p113 = scmp.ne.s32.totalorder %s105, %s107
    %p114 = scmp.eq.s32.totalorder %s34, 3
    %p115 = por %p113, %p114
    %p116 = scmp.ne.s32.totalorder %s107, %s108
    %p117 = scmp.eq.s32.totalorder %s34, 0
    %p118 = por %p116, %p117
    %p119 = scmp.ne.s32.totalorder %s107, %s108
    %p120 = scmp.eq.s32.totalorder %s35, 3
    %p121 = por %p119, %p120
    %p123 = scmp.ne.s32.totalorder %s108, %s122
    %p124 = scmp.eq.s32.totalorder %s35, 0
    %p125 = por %p123, %p124
    %s127 = sadd.s32 %s126, 1
    %p130 = scmp.eq.s32.totalorder %s29, 3
    %p131 = scmp.ne.s32.totalorder %s126, %s128
    %p132 = scmp.eq.s32.totalorder %s29, 0
    %p133 = por %p131, %p132
    %p134 = scmp.ne.s32.totalorder %s126, %s128
    %p135 = scmp.eq.s32.totalorder %s34, 3
    %p136 = por %p134, %p135
    %p137 = scmp.ne.s32.totalorder %s128, %s129
    %p138 = scmp.eq.s32.totalorder %s34, 0
    %p139 = por %p137, %p138
    %p140 = scmp.ne.s32.totalorder %s128, %s129
    %p141 = scmp.eq.s32.totalorder %s35, 3
    %p142 = por %p140, %p141
    %p144 = scmp.ne.s32.totalorder %s129, %s143
    %p145 = scmp.eq.s32.totalorder %s35, 0
    %p146 = por %p144, %p145
    %s148 = sadd.s32 %s147, 1
    %p151 = scmp.eq.s32.totalorder %s29, 3
    %p152 = scmp.ne.s32.totalorder %s147, %s149
    %p153 = scmp.eq.s32.totalorder %s29, 0
    %p154 = por %p152, %p153
    %p155 = scmp.ne.s32.totalorder %s147, %s149
    %p156 = scmp.eq.s32.totalorder %s34, 3
    %p157 = por %p155, %p156
    %p158 = scmp.ne.s32.totalorder %s149, %s150
    %p159 = scmp.eq.s32.totalorder %s34, 0
    %p160 = por %p158, %p159
    %p161 = scmp.ne.s32.totalorder %s149, %s150
    %p162 = scmp.eq.s32.totalorder %s35, 3
    %p163 = por %p161, %p162
    %p165 = scmp.ne.s32.totalorder %s150, %s164
    %p166 = scmp.eq.s32.totalorder %s35, 0
    %p167 = por %p165, %p166
    %s169 = sadd.s32 %s168, 1
    %p172 = scmp.eq.s32.totalorder %s29, 3
    %p173 = scmp.ne.s32.totalorder %s168, %s170
    %p174 = scmp.eq.s32.totalorder %s29, 0
    %p175 = por %p173, %p174
    %p176 = scmp.ne.s32.totalorder %s168, %s170
    %p177 = scmp.eq.s32.totalorder %s34, 3
    %p178 = por %p176, %p177
    %p179 = scmp.ne.s32.totalorder %s170, %s171
    %p180 = scmp.eq.s32.totalorder %s34, 0
    %p181 = por %p179, %p180
    %p182 = scmp.ne.s32.totalorder %s170, %s171
    %p183 = scmp.eq.s32.totalorder %s35, 3
    %p184 = por %p182, %p183
    %p186 = scmp.ne.s32.totalorder %s171, %s185
    %p187 = scmp.eq.s32.totalorder %s35, 0
    %p188 = por %p186, %p187
    %s190 = sadd.s32 %s189, 1
    %p193 = scmp.eq.s32.totalorder %s29, 3
    %p194 = scmp.ne.s32.totalorder %s189, %s191
    %p195 = scmp.eq.s32.totalorder %s29, 0
    %p196 = por %p194, %p195
    %p197 = scmp.ne.s32.totalorder %s189, %s191
    %p198 = scmp.eq.s32.totalorder %s34, 3
    %p199 = por %p197, %p198
    %p200 = scmp.ne.s32.totalorder %s191, %s192
    %p201 = scmp.eq.s32.totalorder %s34, 0
    %p202 = por %p200, %p201
    %p203 = scmp.ne.s32.totalorder %s191, %s192
    %p204 = scmp.eq.s32.totalorder %s35, 3
    %p205 = por %p203, %p204
    %p207 = scmp.ne.s32.totalorder %s192, %s206
    %p208 = scmp.eq.s32.totalorder %s35, 0
    %p209 = por %p207, %p208
    %s211 = sadd.s32 %s210, 1
    %p214 = scmp.eq.s32.totalorder %s29, 3
    %p215 = scmp.ne.s32.totalorder %s210, %s212
    %p216 = scmp.eq.s32.totalorder %s29, 0
    %p217 = por %p215, %p216
    %p218 = scmp.ne.s32.totalorder %s210, %s212
    %p219 = scmp.eq.s32.totalorder %s34, 3
    %p220 = por %p218, %p219
    %p221 = scmp.ne.s32.totalorder %s212, %s213
    %p222 = scmp.eq.s32.totalorder %s34, 0
    %p223 = por %p221, %p222
    %p224 = scmp.ne.s32.totalorder %s212, %s213
    %p225 = scmp.eq.s32.totalorder %s35, 3
    %p226 = por %p224, %p225
    %p228 = scmp.ne.s32.totalorder %s213, %s227
    %p229 = scmp.eq.s32.totalorder %s35, 0
    %p230 = por %p228, %p229
    %s232 = sadd.s32 %s231, 1
    %p235 = scmp.eq.s32.totalorder %s29, 3
    %p236 = scmp.ne.s32.totalorder %s231, %s233
    %p237 = scmp.eq.s32.totalorder %s29, 0
    %p238 = por %p236, %p237
    %p239 = scmp.ne.s32.totalorder %s231, %s233
    %p240 = scmp.eq.s32.totalorder %s34, 3
    %p241 = por %p239, %p240
    %p242 = scmp.ne.s32.totalorder %s233, %s234
    %p243 = scmp.eq.s32.totalorder %s34, 0
    %p244 = por %p242, %p243
    %p245 = scmp.ne.s32.totalorder %s233, %s234
    %p246 = scmp.eq.s32.totalorder %s35, 3
    %p247 = por %p245, %p246
    %p249 = scmp.ne.s32.totalorder %s234, %s248
    %p250 = scmp.eq.s32.totalorder %s35, 0
    %p251 = por %p249, %p250
    %s253 = sadd.s32 %s252, 1
    %p256 = scmp.eq.s32.totalorder %s29, 3
    %p257 = scmp.ne.s32.totalorder %s252, %s254
    %p258 = scmp.eq.s32.totalorder %s29, 0
    %p259 = por %p257, %p258
    %p260 = scmp.ne.s32.totalorder %s252, %s254
    %p261 = scmp.eq.s32.totalorder %s34, 3
    %p262 = por %p260, %p261
    %p263 = scmp.ne.s32.totalorder %s254, %s255
    %p264 = scmp.eq.s32.totalorder %s34, 0
    %p265 = por %p263, %p264
    %p266 = scmp.ne.s32.totalorder %s254, %s255
    %p267 = scmp.eq.s32.totalorder %s35, 3
    %p268 = por %p266, %p267
    %p270 = scmp.ne.s32.totalorder %s255, %s269
    %p271 = scmp.eq.s32.totalorder %s35, 0
    %p272 = por %p270, %p271
    %s274 = sadd.s32 %s273, 1
    %p277 = scmp.eq.s32.totalorder %s29, 3
    %p278 = scmp.ne.s32.totalorder %s273, %s275
    %p279 = scmp.eq.s32.totalorder %s29, 0
    %p280 = por %p278, %p279
    %p281 = scmp.ne.s32.totalorder %s273, %s275
    %p282 = scmp.eq.s32.totalorder %s34, 3
    %p283 = por %p281, %p282
    %p284 = scmp.ne.s32.totalorder %s275, %s276
    %p285 = scmp.eq.s32.totalorder %s34, 0
    %p286 = por %p284, %p285
    %p287 = scmp.ne.s32.totalorder %s275, %s276
    %p288 = scmp.eq.s32.totalorder %s35, 3
    %p289 = por %p287, %p288
    %p291 = scmp.ne.s32.totalorder %s276, %s290
    %p292 = scmp.eq.s32.totalorder %s35, 0
    %p293 = por %p291, %p292
    %s295 = sadd.s32 %s294, 1
    %p298 = scmp.eq.s32.totalorder %s29, 3
    %p299 = scmp.ne.s32.totalorder %s294, %s296
    %p300 = scmp.eq.s32.totalorder %s29, 0
    %p301 = por %p299, %p300
    %p302 = scmp.ne.s32.totalorder %s294, %s296
    %p303 = scmp.eq.s32.totalorder %s34, 3
    %p304 = por %p302, %p303
    %p305 = scmp.ne.s32.totalorder %s296, %s297
    %p306 = scmp.eq.s32.totalorder %s34, 0
    %p307 = por %p305, %p306
    %p308 = scmp.ne.s32.totalorder %s296, %s297
    %p309 = scmp.eq.s32.totalorder %s35, 3
    %p310 = por %p308, %p309
    %p312 = scmp.ne.s32.totalorder %s297, %s311
    %p313 = scmp.eq.s32.totalorder %s35, 0
    %p314 = por %p312, %p313
    %s316 = sadd.s32 %s315, 1
    %p319 = scmp.eq.s32.totalorder %s29, 3
    %p320 = scmp.ne.s32.totalorder %s315, %s317
    %p321 = scmp.eq.s32.totalorder %s29, 0
    %p322 = por %p320, %p321
    %p323 = scmp.ne.s32.totalorder %s315, %s317
    %p324 = scmp.eq.s32.totalorder %s34, 3
    %p325 = por %p323, %p324
    %p326 = scmp.ne.s32.totalorder %s317, %s318
    %p327 = scmp.eq.s32.totalorder %s34, 0
    %p328 = por %p326, %p327
    %p329 = scmp.ne.s32.totalorder %s317, %s318
    %p330 = scmp.eq.s32.totalorder %s35, 3
    %p331 = por %p329, %p330
    %p333 = scmp.ne.s32.totalorder %s318, %s332
    %p334 = scmp.eq.s32.totalorder %s35, 0
    %p335 = por %p333, %p334
    %s337 = sadd.s32 %s336, 1
    %p340 = scmp.eq.s32.totalorder %s29, 3
    %p341 = scmp.ne.s32.totalorder %s336, %s338
    %p342 = scmp.eq.s32.totalorder %s29, 0
    %p343 = por %p341, %p342
    %p344 = scmp.ne.s32.totalorder %s336, %s338
    %p345 = scmp.eq.s32.totalorder %s34, 3
    %p346 = por %p344, %p345
    %p347 = scmp.ne.s32.totalorder %s338, %s339
    %p348 = scmp.eq.s32.totalorder %s34, 0
    %p349 = por %p347, %p348
    %p350 = scmp.ne.s32.totalorder %s338, %s339
    %p351 = scmp.eq.s32.totalorder %s35, 3
    %p352 = por %p350, %p351
    %p354 = scmp.ne.s32.totalorder %s339, %s353
    %p355 = scmp.eq.s32.totalorder %s35, 0
    %p356 = por %p354, %p355
    %s358 = sadd.s32 %s357, 1
    %p361 = scmp.eq.s32.totalorder %s29, 3
    %p362 = scmp.ne.s32.totalorder %s357, %s359
    %p363 = scmp.eq.s32.totalorder %s29, 0
    %p364 = por %p362, %p363
    %p365 = scmp.ne.s32.totalorder %s357, %s359
    %p366 = scmp.eq.s32.totalorder %s34, 3
    %p367 = por %p365, %p366
    %p368 = scmp.ne.s32.totalorder %s359, %s360
    %p369 = scmp.eq.s32.totalorder %s34, 0
    %p370 = por %p368, %p369
    %p371 = scmp.ne.s32.totalorder %s359, %s360
    %p372 = scmp.eq.s32.totalorder %s35, 3
    %p373 = por %p371, %p372
    %p375 = scmp.ne.s32.totalorder %s360, %s374
    %p376 = scmp.eq.s32.totalorder %s35, 0
    %p377 = por %p375, %p376
    %s379 = sadd.s32 %s378, 1
    %p382 = scmp.eq.s32.totalorder %s29, 3
    %p383 = scmp.ne.s32.totalorder %s378, %s380
    %p384 = scmp.eq.s32.totalorder %s29, 0
    %p385 = por %p383, %p384
    %p386 = scmp.ne.s32.totalorder %s378, %s380
    %p387 = scmp.eq.s32.totalorder %s34, 3
    %p388 = por %p386, %p387
    %p389 = scmp.ne.s32.totalorder %s380, %s381
    %p390 = scmp.eq.s32.totalorder %s34, 0
    %p391 = por %p389, %p390
    %p392 = scmp.ne.s32.totalorder %s380, %s381
    %p393 = scmp.eq.s32.totalorder %s35, 3
    %p394 = por %p392, %p393
    %p396 = scmp.ne.s32.totalorder %s381, %s395
    %p397 = scmp.eq.s32.totalorder %s35, 0
    %p398 = por %p396, %p397
    %s400 = sadd.s32 %s399, 1
    %p403 = scmp.eq.s32.totalorder %s29, 3
    %p404 = scmp.ne.s32.totalorder %s399, %s401
    %p405 = scmp.eq.s32.totalorder %s29, 0
    %p406 = por %p404, %p405
    %p407 = scmp.ne.s32.totalorder %s399, %s401
    %p408 = scmp.eq.s32.totalorder %s34, 3
    %p409 = por %p407, %p408
    %p410 = scmp.ne.s32.totalorder %s401, %s402
    %p411 = scmp.eq.s32.totalorder %s34, 0
    %p412 = por %p410, %p411
    %p413 = scmp.ne.s32.totalorder %s401, %s402
    %p414 = scmp.eq.s32.totalorder %s35, 3
    %p415 = por %p413, %p414
    %p417 = scmp.ne.s32.totalorder %s402, %s416
    %p418 = scmp.eq.s32.totalorder %s35, 0
    %p419 = por %p417, %p418
    %s421 = sadd.s32 %s420, 1
    %p424 = scmp.eq.s32.totalorder %s29, 3
    %p425 = scmp.ne.s32.totalorder %s420, %s422
    %p426 = scmp.eq.s32.totalorder %s29, 0
    %p427 = por %p425, %p426
    %p428 = scmp.ne.s32.totalorder %s420, %s422
    %p429 = scmp.eq.s32.totalorder %s34, 3
    %p430 = por %p428, %p429
    %p431 = scmp.ne.s32.totalorder %s422, %s423
    %p432 = scmp.eq.s32.totalorder %s34, 0
    %p433 = por %p431, %p432
    %p434 = scmp.ne.s32.totalorder %s422, %s423
    %p435 = scmp.eq.s32.totalorder %s35, 3
    %p436 = por %p434, %p435
    %p438 = scmp.ne.s32.totalorder %s423, %s437
    %p439 = scmp.eq.s32.totalorder %s35, 0
    %p440 = por %p438, %p439
    %s442 = sadd.s32 %s441, 1
    %p445 = scmp.eq.s32.totalorder %s29, 3
    %p446 = scmp.ne.s32.totalorder %s441, %s443
    %p447 = scmp.eq.s32.totalorder %s29, 0
    %p448 = por %p446, %p447
    %p449 = scmp.ne.s32.totalorder %s441, %s443
    %p450 = scmp.eq.s32.totalorder %s34, 3
    %p451 = por %p449, %p450
    %p452 = scmp.ne.s32.totalorder %s443, %s444
    %p453 = scmp.eq.s32.totalorder %s34, 0
    %p454 = por %p452, %p453
    %p455 = scmp.ne.s32.totalorder %s443, %s444
    %p456 = scmp.eq.s32.totalorder %s35, 3
    %p457 = por %p455, %p456
    %p459 = scmp.ne.s32.totalorder %s444, %s458
    %p460 = scmp.eq.s32.totalorder %s35, 0
    %p461 = por %p459, %p460
    %s463 = sadd.s32 %s462, 1
    %p466 = scmp.eq.s32.totalorder %s29, 3
    %p467 = scmp.ne.s32.totalorder %s462, %s464
    %p468 = scmp.eq.s32.totalorder %s29, 0
    %p469 = por %p467, %p468
    %p470 = scmp.ne.s32.totalorder %s462, %s464
    %p471 = scmp.eq.s32.totalorder %s34, 3
    %p472 = por %p470, %p471
    %p473 = scmp.ne.s32.totalorder %s464, %s465
    %p474 = scmp.eq.s32.totalorder %s34, 0
    %p475 = por %p473, %p474
    %p476 = scmp.ne.s32.totalorder %s464, %s465
    %p477 = scmp.eq.s32.totalorder %s35, 3
    %p478 = por %p476, %p477
    %p480 = scmp.ne.s32.totalorder %s465, %s479
    %p481 = scmp.eq.s32.totalorder %s35, 0
    %p482 = por %p480, %p481
    %s484 = sadd.s32 %s483, 1
    %p487 = scmp.eq.s32.totalorder %s29, 3
    %p488 = scmp.ne.s32.totalorder %s483, %s485
    %p489 = scmp.eq.s32.totalorder %s29, 0
    %p490 = por %p488, %p489
    %p491 = scmp.ne.s32.totalorder %s483, %s485
    %p492 = scmp.eq.s32.totalorder %s34, 3
    %p493 = por %p491, %p492
    %p494 = scmp.ne.s32.totalorder %s485, %s486
    %p495 = scmp.eq.s32.totalorder %s34, 0
    %p496 = por %p494, %p495
    %p497 = scmp.ne.s32.totalorder %s485, %s486
    %p498 = scmp.eq.s32.totalorder %s35, 3
    %p499 = por %p497, %p498
    %p501 = scmp.ne.s32.totalorder %s486, %s500
    %p502 = scmp.eq.s32.totalorder %s35, 0
    %p503 = por %p501, %p502
    %s505 = sadd.s32 %s504, 1
    %p508 = scmp.eq.s32.totalorder %s29, 3
    %p509 = scmp.ne.s32.totalorder %s504, %s506
    %p510 = scmp.eq.s32.totalorder %s29, 0
    %p511 = por %p509, %p510
    %p512 = scmp.ne.s32.totalorder %s504, %s506
    %p513 = scmp.eq.s32.totalorder %s34, 3
    %p514 = por %p512, %p513
    %p515 = scmp.ne.s32.totalorder %s506, %s507
    %p516 = scmp.eq.s32.totalorder %s34, 0
    %p517 = por %p515, %p516
    %p518 = scmp.ne.s32.totalorder %s506, %s507
    %p519 = scmp.eq.s32.totalorder %s35, 3
    %p520 = por %p518, %p519
    %p522 = scmp.ne.s32.totalorder %s507, %s521
    %p523 = scmp.eq.s32.totalorder %s35, 0
    %p524 = por %p522, %p523
    %s526 = sadd.s32 %s525, 1
    %p529 = scmp.eq.s32.totalorder %s29, 3
    %p530 = scmp.ne.s32.totalorder %s525, %s527
    %p531 = scmp.eq.s32.totalorder %s29, 0
    %p532 = por %p530, %p531
    %p533 = scmp.ne.s32.totalorder %s525, %s527
    %p534 = scmp.eq.s32.totalorder %s34, 3
    %p535 = por %p533, %p534
    %p536 = scmp.ne.s32.totalorder %s527, %s528
    %p537 = scmp.eq.s32.totalorder %s34, 0
    %p538 = por %p536, %p537
    %p539 = scmp.ne.s32.totalorder %s527, %s528
    %p540 = scmp.eq.s32.totalorder %s35, 3
    %p541 = por %p539, %p540
    %p543 = scmp.ne.s32.totalorder %s528, %s542
    %p544 = scmp.eq.s32.totalorder %s35, 0
    %p545 = por %p543, %p544
    %s547 = sadd.s32 %s546, 1
    %p550 = scmp.eq.s32.totalorder %s29, 3
    %p551 = scmp.ne.s32.totalorder %s546, %s548
    %p552 = scmp.eq.s32.totalorder %s29, 0
    %p553 = por %p551, %p552
    %p554 = scmp.ne.s32.totalorder %s546, %s548
    %p555 = scmp.eq.s32.totalorder %s34, 3
    %p556 = por %p554, %p555
    %p557 = scmp.ne.s32.totalorder %s548, %s549
    %p558 = scmp.eq.s32.totalorder %s34, 0
    %p559 = por %p557, %p558
    %p560 = scmp.ne.s32.totalorder %s548, %s549
    %p561 = scmp.eq.s32.totalorder %s35, 3
    %p562 = por %p560, %p561
    %p564 = scmp.ne.s32.totalorder %s549, %s563
    %p565 = scmp.eq.s32.totalorder %s35, 0
    %p566 = por %p564, %p565
    %p567 = scmp.le.s32.totalorder 1, %s29
    %p568 = scmp.lt.s32.totalorder %s29, 5
    %p569 = pnand %p567, %p568
    %p570 = pneg %p569
    // Predicated region
    $region9: #{tnet_forward.1} parent=5 // pred_check
      _
    $region10: #{tnet_forward.1} parent=5 // pred_check_branch
      %572 = sbr.rel (%p569) target = $region12
    $region11: #{tnet_forward.1} parent=5 // pred_region
      %s573 = ssub.s32 %s29, 1
      // Predicated region
      $region13: #{tnet_forward.1} parent=11 // pred_check
        %p574 = pneg %p97
      $region14: #{tnet_forward.1} parent=11 // pred_check_branch
        %576 = sbr.rel (%p574) target = $region16
      $region15: #{tnet_forward.1} parent=11 // pred_region
        _
      $region16: #{tnet_forward.1} parent=11 // pred_fallthru
        _
      // Predicated region
      $region17: #{tnet_forward.1} parent=11 // pred_check
        %p577 = pneg %p118
      $region18: #{tnet_forward.1} parent=11 // pred_check_branch
        %579 = sbr.rel (%p577) target = $region20
      $region19: #{tnet_forward.1} parent=11 // pred_region
        _
      $region20: #{tnet_forward.1} parent=11 // pred_fallthru
        _
      // Predicated region
      $region21: #{tnet_forward.1} parent=11 // pred_check
        %p580 = pneg %p139
      $region22: #{tnet_forward.1} parent=11 // pred_check_branch
        %582 = sbr.rel (%p580) target = $region24
      $region23: #{tnet_forward.1} parent=11 // pred_region
        _
      $region24: #{tnet_forward.1} parent=11 // pred_fallthru
        _
      // Predicated region
      $region25: #{tnet_forward.1} parent=11 // pred_check
        %p583 = pneg %p160
      $region26: #{tnet_forward.1} parent=11 // pred_check_branch
        %585 = sbr.rel (%p583) target = $region28
      $region27: #{tnet_forward.1} parent=11 // pred_region
        _
      $region28: #{tnet_forward.1} parent=11 // pred_fallthru
        _
      // Predicated region
      $region29: #{tnet_forward.1} parent=11 // pred_check
        %p586 = pneg %p181
      $region30: #{tnet_forward.1} parent=11 // pred_check_branch
        %588 = sbr.rel (%p586) target = $region32
      $region31: #{tnet_forward.1} parent=11 // pred_region
        _
      $region32: #{tnet_forward.1} parent=11 // pred_fallthru
        _
      // Predicated region
      $region33: #{tnet_forward.1} parent=11 // pred_check
        %p589 = pneg %p202
      $region34: #{tnet_forward.1} parent=11 // pred_check_branch
        %591 = sbr.rel (%p589) target = $region36
      $region35: #{tnet_forward.1} parent=11 // pred_region
        _
      $region36: #{tnet_forward.1} parent=11 // pred_fallthru
        _
      // Predicated region
      $region37: #{tnet_forward.1} parent=11 // pred_check
        %p592 = pneg %p223
      $region38: #{tnet_forward.1} parent=11 // pred_check_branch
        %594 = sbr.rel (%p592) target = $region40
      $region39: #{tnet_forward.1} parent=11 // pred_region
        _
      $region40: #{tnet_forward.1} parent=11 // pred_fallthru
        _
      // Predicated region
      $region41: #{tnet_forward.1} parent=11 // pred_check
        %p595 = pneg %p244
      $region42: #{tnet_forward.1} parent=11 // pred_check_branch
        %597 = sbr.rel (%p595) target = $region44
      $region43: #{tnet_forward.1} parent=11 // pred_region
        _
      $region44: #{tnet_forward.1} parent=11 // pred_fallthru
        _
      // Predicated region
      $region45: #{tnet_forward.1} parent=11 // pred_check
        %p598 = pneg %p265
      $region46: #{tnet_forward.1} parent=11 // pred_check_branch
        %600 = sbr.rel (%p598) target = $region48
      $region47: #{tnet_forward.1} parent=11 // pred_region
        _
      $region48: #{tnet_forward.1} parent=11 // pred_fallthru
        _
      // Predicated region
      $region49: #{tnet_forward.1} parent=11 // pred_check
        %p601 = pneg %p286
      $region50: #{tnet_forward.1} parent=11 // pred_check_branch
        %603 = sbr.rel (%p601) target = $region52
      $region51: #{tnet_forward.1} parent=11 // pred_region
        _
      $region52: #{tnet_forward.1} parent=11 // pred_fallthru
        _
      // Predicated region
      $region53: #{tnet_forward.1} parent=11 // pred_check
        %p604 = pneg %p307
      $region54: #{tnet_forward.1} parent=11 // pred_check_branch
        %606 = sbr.rel (%p604) target = $region56
      $region55: #{tnet_forward.1} parent=11 // pred_region
        _
      $region56: #{tnet_forward.1} parent=11 // pred_fallthru
        _
      // Predicated region
      $region57: #{tnet_forward.1} parent=11 // pred_check
        %p607 = pneg %p328
      $region58: #{tnet_forward.1} parent=11 // pred_check_branch
        %609 = sbr.rel (%p607) target = $region60
      $region59: #{tnet_forward.1} parent=11 // pred_region
        _
      $region60: #{tnet_forward.1} parent=11 // pred_fallthru
        _
      // Predicated region
      $region61: #{tnet_forward.1} parent=11 // pred_check
        %p610 = pneg %p349
      $region62: #{tnet_forward.1} parent=11 // pred_check_branch
        %612 = sbr.rel (%p610) target = $region64
      $region63: #{tnet_forward.1} parent=11 // pred_region
        _
      $region64: #{tnet_forward.1} parent=11 // pred_fallthru
        _
      // Predicated region
      $region65: #{tnet_forward.1} parent=11 // pred_check
        %p613 = pneg %p370
      $region66: #{tnet_forward.1} parent=11 // pred_check_branch
        %615 = sbr.rel (%p613) target = $region68
      $region67: #{tnet_forward.1} parent=11 // pred_region
        _
      $region68: #{tnet_forward.1} parent=11 // pred_fallthru
        _
      // Predicated region
      $region69: #{tnet_forward.1} parent=11 // pred_check
        %p616 = pneg %p391
      $region70: #{tnet_forward.1} parent=11 // pred_check_branch
        %618 = sbr.rel (%p616) target = $region72
      $region71: #{tnet_forward.1} parent=11 // pred_region
        _
      $region72: #{tnet_forward.1} parent=11 // pred_fallthru
        _
      // Predicated region
      $region73: #{tnet_forward.1} parent=11 // pred_check
        %p619 = pneg %p412
      $region74: #{tnet_forward.1} parent=11 // pred_check_branch
        %621 = sbr.rel (%p619) target = $region76
      $region75: #{tnet_forward.1} parent=11 // pred_region
        _
      $region76: #{tnet_forward.1} parent=11 // pred_fallthru
        _
      // Predicated region
      $region77: #{tnet_forward.1} parent=11 // pred_check
        %p622 = pneg %p433
      $region78: #{tnet_forward.1} parent=11 // pred_check_branch
        %624 = sbr.rel (%p622) target = $region80
      $region79: #{tnet_forward.1} parent=11 // pred_region
        _
      $region80: #{tnet_forward.1} parent=11 // pred_fallthru
        _
      // Predicated region
      $region81: #{tnet_forward.1} parent=11 // pred_check
        %p625 = pneg %p454
      $region82: #{tnet_forward.1} parent=11 // pred_check_branch
        %627 = sbr.rel (%p625) target = $region84
      $region83: #{tnet_forward.1} parent=11 // pred_region
        _
      $region84: #{tnet_forward.1} parent=11 // pred_fallthru
        _
      // Predicated region
      $region85: #{tnet_forward.1} parent=11 // pred_check
        %p628 = pneg %p475
      $region86: #{tnet_forward.1} parent=11 // pred_check_branch
        %630 = sbr.rel (%p628) target = $region88
      $region87: #{tnet_forward.1} parent=11 // pred_region
        _
      $region88: #{tnet_forward.1} parent=11 // pred_fallthru
        _
      // Predicated region
      $region89: #{tnet_forward.1} parent=11 // pred_check
        %p631 = pneg %p496
      $region90: #{tnet_forward.1} parent=11 // pred_check_branch
        %633 = sbr.rel (%p631) target = $region92
      $region91: #{tnet_forward.1} parent=11 // pred_region
        _
      $region92: #{tnet_forward.1} parent=11 // pred_fallthru
        _
      // Predicated region
      $region93: #{tnet_forward.1} parent=11 // pred_check
        %p634 = pneg %p517
      $region94: #{tnet_forward.1} parent=11 // pred_check_branch
        %636 = sbr.rel (%p634) target = $region96
      $region95: #{tnet_forward.1} parent=11 // pred_region
        _
      $region96: #{tnet_forward.1} parent=11 // pred_fallthru
        _
      // Predicated region
      $region97: #{tnet_forward.1} parent=11 // pred_check
        %p637 = pneg %p538
      $region98: #{tnet_forward.1} parent=11 // pred_check_branch
        %639 = sbr.rel (%p637) target = $region100
      $region99: #{tnet_forward.1} parent=11 // pred_region
        _
      $region100: #{tnet_forward.1} parent=11 // pred_fallthru
        _
    $region12: #{tnet_forward.1} parent=5 // pred_fallthru
      _
    %p640 = scmp.lt.s32.totalorder %s29, 4
    // Predicated region
    $region101: #{tnet_forward.1} parent=5 // pred_check
      %p641 = pneg %p640
    $region102: #{tnet_forward.1} parent=5 // pred_check_branch
      %643 = sbr.rel (%p641) target = $region104
    $region103: #{tnet_forward.1} parent=5 // pred_region
      // Predicated region
      $region105: #{tnet_forward.1} parent=103 // pred_check
        %p644 = pneg %p70
      $region106: #{tnet_forward.1} parent=103 // pred_check_branch
        %646 = sbr.rel (%p644) target = $region108
      $region107: #{tnet_forward.1} parent=103 // pred_region
        %p647 = scmp.lt.s32.totalorder %s37, 1
        %s648 = scalar_select %p647, %s37, 1
        %p649 = scmp.lt.s32.totalorder %s38, 0
        %s650 = scalar_select %p649, %s38, 0
        %s651 = sadd.s32 %s650, %s648
        %s652 = smul.addr %s651, 4
        %s653 = scalar_lea.vmem %s0, %s652
      $region108: #{tnet_forward.1} parent=103 // pred_fallthru
        _
    $region104: #{tnet_forward.1} parent=5 // pred_fallthru
      _
    %p654 = scmp.le.s32.totalorder 1, %s29
    %p655 = scmp.lt.s32.totalorder %s29, 5
    %p656 = pnand %p654, %p655
    %p657 = pneg %p656
    // Predicated region
    $region109: #{tnet_forward.1} parent=5 // pred_check
      _
    $region110: #{tnet_forward.1} parent=5 // pred_check_branch
      %659 = sbr.rel (%p656) target = $region112
    $region111: #{tnet_forward.1} parent=5 // pred_region
      %s660 = ssub.s32 %s29, 1
      %p661 = scmp.lt.s32.totalorder %s40, 1
      %s662 = scalar_select %p661, %s40, 1
      %p663 = scmp.lt.s32.totalorder %s41, 0
      %s664 = scalar_select %p663, %s41, 0
      %s665 = sadd.s32 %s664, %s662
      %s666 = smul.addr %s665, 4
      %s667 = scalar_lea.vmem %s0, %s666
      %p668 = pneg %p76
      %p669 = pneg %p73
      %p670 = pneg %p97
      %p671 = pneg %p94
      %p672 = pneg %p118
      %p673 = pneg %p115
      %p674 = pneg %p139
      %p675 = pneg %p136
      %p676 = pneg %p160
      %p677 = pneg %p157
      %p678 = pneg %p181
      %p679 = pneg %p178
      %p680 = pneg %p202
      %p681 = pneg %p199
      %p682 = pneg %p223
      %p683 = pneg %p220
      %p684 = pneg %p244
      %p685 = pneg %p241
      %p686 = pneg %p265
      %p687 = pneg %p262
      %p688 = pneg %p286
      %p689 = pneg %p283
      %p690 = pneg %p307
      %p691 = pneg %p304
      %p692 = pneg %p328
      %p693 = pneg %p325
      %p694 = pneg %p349
      %p695 = pneg %p346
      %p696 = pneg %p370
      %p697 = pneg %p367
      %p698 = pneg %p391
      %p699 = pneg %p388
      %p700 = pneg %p412
      %p701 = pneg %p409
      %p702 = pneg %p433
      %p703 = pneg %p430
      %p704 = pneg %p454
      %p705 = pneg %p451
      %p706 = pneg %p475
      %p707 = pneg %p472
      %p708 = pneg %p496
      %p709 = pneg %p493
      %p710 = pneg %p517
      %p711 = pneg %p514
      %p712 = pneg %p538
      %p713 = pneg %p535
      %p714 = pneg %p559
      %p715 = pneg %p556
      %p716 = scmp.lt.s32.totalorder %s40, 1
      %s717 = scalar_select %p716, %s40, 1
      %p718 = scmp.lt.s32.totalorder %s41, 0
      %s719 = scalar_select %p718, %s41, 0
      %s720 = sadd.s32 %s719, %s717
      %s721 = smul.addr %s720, 4
      %s722 = scalar_lea.vmem %s0, %s721
      %p724 = scmp.eq.s32.totalorder %s39, 0
      %p725 = scmp.eq.s32.totalorder %s40, 0
      %p726 = pnand %p724, %p725
      %p727 = pneg %p726
      %p728 = scmp.eq.s32.totalorder %s41, 0
      %p729 = pnand %p727, %p728
      %p730 = pneg %p729
      // Predicated region
      $region113: #{tnet_forward.1} parent=111 // pred_check
        _
      $region114: #{tnet_forward.1} parent=111 // pred_check_branch
        %732 = sbr.rel (%p729) target = $region116
      $region115: #{tnet_forward.1} parent=111 // pred_region
        %733 = vst [vmem:[#allocation2] sm:$0x1] 0.0
        %734 = vst [vmem:[#allocation3] sm:$0x1] 0.0
        %735 = vst [vmem:[#allocation4] sm:$0xff] 0.0
        %736 = vst [vmem:[#allocation5] sm:$0xff] 0.0
      $region116: #{tnet_forward.1} parent=111 // pred_fallthru
        _
      %v737 = vld [vmem:[%s722] sm:$0x7]
      %v738 = vld [vmem:[%s1] sm:$0x7]
      %739 = vxpose.xlu0.b32.start [1/16] %v737, 128
      %740 = vxpose.xlu0.b32.cont [2/16] 0.0, 128
      %741 = vxpose.xlu0.b32.cont [3/16] 0.0, 128
      %742 = vxpose.xlu0.b32.cont [4/16] 0.0, 128
      %743 = vxpose.xlu0.b32.cont [5/16] 0.0, 128
      %744 = vxpose.xlu0.b32.cont [6/16] 0.0, 128
      %745 = vxpose.xlu0.b32.cont [7/16] 0.0, 128
      %746 = vxpose.xlu0.b32.cont [8/16] 0.0, 128
      %747 = vxpose.xlu0.b32.cont [9/16] 0.0, 128
      %748 = vxpose.xlu0.b32.cont [10/16] 0.0, 128
      %749 = vxpose.xlu0.b32.cont [11/16] 0.0, 128
      %750 = vxpose.xlu0.b32.cont [12/16] 0.0, 128
      %751 = vxpose.xlu0.b32.cont [13/16] 0.0, 128
      %752 = vxpose.xlu0.b32.cont [14/16] 0.0, 128
      %753 = vxpose.xlu0.b32.cont [15/16] 0.0, 128
      %754 = vxpose.xlu0.b32.end [16/16] 0.0, 128
      %v755 = vpop.trf.xlu0
      %v756 = vpop.trf.xlu0
      %v757 = vpop.trf.xlu0
      %v758 = vpop.trf.xlu0
      %v759 = vpop.trf.xlu0
      %v760 = vpop.trf.xlu0
      %v761 = vpop.trf.xlu0
      %v762 = vpop.trf.xlu0
      %v763 = vpop.trf.xlu0
      %v764 = vpop.trf.xlu0
      %v765 = vpop.trf.xlu0
      %v766 = vpop.trf.xlu0
      %v767 = vpop.trf.xlu0
      %v768 = vpop.trf.xlu0
      %v769 = vpop.trf.xlu0
      %v770 = vpop.trf.xlu0
      %vm771 = vcmask 23552
      %v773 = vsel %vm771, %v755, 0
      %v776 = vsel %vm771, %v756, 0
      %vm778 = vcmask 1042432
      %v780 = vsel %vm778, %v738, 0
      %782 = vmatprep.subr.mxu0 0.0
      %783 = vmatpush1.msra.mxu0 %v780
      %784 = vmatprep.subr.mxu0 0.0
      %785 = vmatpush1.msra.mxu0 0.0
      %786 = vmatprep.subr.mxu0 0.0
      %787 = vmatpush1.msra.mxu0 0.0
      %788 = vmatprep.subr.mxu0 0.0
      %789 = vmatpush1.msra.mxu0 0.0
      %790 = vmatprep.subr.mxu0 0.0
      %791 = vmatpush1.msra.mxu0 0.0
      %792 = vmatprep.subr.mxu0 0.0
      %793 = vmatpush1.msra.mxu0 0.0
      %794 = vmatprep.subr.mxu0 0.0
      %795 = vmatpush1.msra.mxu0 0.0
      %796 = vmatprep.subr.mxu0 0.0
      %797 = vmatpush1.msra.mxu0 0.0
      %798 = vmatprep.subr.mxu0 0.0
      %799 = vmatpush1.msra.mxu0 0.0
      %800 = vmatprep.subr.mxu0 0.0
      %801 = vmatpush1.msra.mxu0 0.0
      %802 = vmatprep.subr.mxu0 0.0
      %803 = vmatpush1.msra.mxu0 0.0
      %804 = vmatprep.subr.mxu0 0.0
      %805 = vmatpush1.msra.mxu0 0.0
      %806 = vmatprep.subr.mxu0 0.0
      %807 = vmatpush1.msra.mxu0 0.0
      %808 = vmatprep.subr.mxu0 0.0
      %809 = vmatpush1.msra.mxu0 0.0
      %810 = vmatprep.subr.mxu0 0.0
      %811 = vmatpush1.msra.mxu0 0.0
      %812 = vmatprep.subr.mxu0 0.0
      %813 = vmatpush1.msra.mxu0 0.0
      %814 = vmatprep.subr.mxu0 0.0
      %815 = vmatpush1.msra.mxu0 0.0
      %816 = vmatprep.subr.mxu0 0.0
      %817 = vmatpush1.msra.mxu0 0.0
      %818 = vmatprep.subr.mxu0 0.0
      %819 = vmatpush1.msra.mxu0 0.0
      %820 = vmatprep.subr.mxu0 0.0
      %821 = vmatpush1.msra.mxu0 0.0
      %822 = vmatprep.subr.mxu0 0.0
      %823 = vmatpush1.msra.mxu0 0.0
      %824 = vmatprep.subr.mxu0 0.0
      %825 = vmatpush1.msra.mxu0 0.0
      %826 = vmatprep.subr.mxu0 0.0
      %827 = vmatpush1.msra.mxu0 0.0
      %828 = vmatprep.subr.mxu0 0.0
      %829 = vmatpush1.msra.mxu0 0.0
      %830 = vmatprep.subr.mxu0 0.0
      %831 = vmatpush1.msra.mxu0 0.0
      %832 = vmatprep.subr.mxu0 0.0
      %833 = vmatpush1.msra.mxu0 0.0
      %834 = vmatprep.subr.mxu0 0.0
      %835 = vmatpush1.msra.mxu0 0.0
      %836 = vmatprep.subr.mxu0 0.0
      %837 = vmatpush1.msra.mxu0 0.0
      %838 = vmatprep.subr.mxu0 0.0
      %839 = vmatpush1.msra.mxu0 0.0
      %840 = vmatprep.subr.mxu0 0.0
      %841 = vmatpush1.msra.mxu0 0.0
      %842 = vmatprep.subr.mxu0 0.0
      %843 = vmatpush1.msra.mxu0 0.0
      %844 = vmatprep.subr.mxu0 0.0
      %845 = vmatpush1.msra.mxu0 0.0
      %846 = vmatprep.mubr.f32.mxu0 0.0
      %847 = vmatmul.mubr.f32.gmra.mrb[0].mxu0 %v773
      %v848 = vpop.f32.mrb[0].mxu0
      %v849 = vadd.f32 0.0, %v848
      %v850 = vpop.f32.mrb[0].mxu0
      %851 = vmatprep.mubr.f32.mxu0 0.0
      %852 = vmatmul.mubr.f32.gmra.mrb[0].mxu0 %v776
      %v853 = vpop.f32.mrb[0].mxu0
      %v854 = vadd.f32 0.0, %v853
      %v855 = vpop.f32.mrb[0].mxu0
      %856 = vdwg.mxu0
      %v857 = vld [vmem:[%s2] sm:$0x1]
      %v859 = vlaneseq
      %v860 = vshrl.u32 %v859, 7
      %v861 = vsub.s32 0, %v860
      %v862 = vrot.slane %v857, %v861
      %v864 = vmul.f32 %v849, %v862
      %v865 = vmul.f32 %v854, %v862
      %v866 = vld [vmem:[%s3] sm:$0x1]
      %v868 = vlaneseq
      %v869 = vshrl.u32 %v868, 7
      %v870 = vsub.s32 0, %v869
      %v871 = vrot.slane %v866, %v870
      %v873 = vadd.f32 %v864, %v871
      %v874 = vadd.f32 %v865, %v871
      %v875 = vmax.f32 %v873, 0.0
      %v876 = vmax.f32 %v874, 0.0
      %v877 = vpack.c.bf16 %v876, %v875
      %v878 = vld [vmem:[%s4] sm:$0xf]
      %v879 = vld [vmem:[%s4 + $0x4] sm:$0xf]
      %v880 = vld [vmem:[%s4 + $0x8] sm:$0xf]
      %v881 = vld [vmem:[%s4 + $0xc] sm:$0xf]
      %v882 = vld [vmem:[%s4 + $0x10] sm:$0xf]
      %v883 = vld [vmem:[%s4 + $0x14] sm:$0xf]
      %v884 = vld [vmem:[%s4 + $0x18] sm:$0xf]
      %v885 = vld [vmem:[%s4 + $0x1c] sm:$0xf]
      %v886 = vld [vmem:[%s5] sm:$0x1]
      %v888 = vlaneseq
      %v889 = vshrl.u32 %v888, 7
      %v890 = vsub.s32 0, %v889
      %v891 = vrot.slane %v886, %v890
      %v901 = vunpack.c.l.b16 %v878
      %v902 = vunpack.c.l.b16 %v879
      %v903 = vunpack.c.l.b16 %v880
      %v904 = vunpack.c.l.b16 %v881
      %v905 = vunpack.c.l.b16 %v882
      %v906 = vunpack.c.l.b16 %v883
      %v907 = vunpack.c.l.b16 %v884
      %v908 = vunpack.c.l.b16 %v885
      %v909 = vpack.c.b16 %v902, %v901
      %v910 = vpack.c.b16 %v904, %v903
      %v911 = vpack.c.b16 %v906, %v905
      %v912 = vpack.c.b16 %v908, %v907
      %vm917 = vcmask 523264
      %v919 = vsel %vm917, %v877, 0
      %921 = vmatprep.subr.bf16.mxu0 0
      %922 = vmatpush1.bf16.msra.mxu0 %v909
      %923 = vmatprep.subr.bf16.mxu0 0
      %924 = vmatpush1.bf16.msra.mxu0 %v910
      %925 = vmatprep.subr.bf16.mxu0 0
      %926 = vmatpush1.bf16.msra.mxu0 %v911
      %927 = vmatprep.subr.bf16.mxu0 0
      %928 = vmatpush1.bf16.msra.mxu0 %v912
      %929 = vmatprep.subr.bf16.mxu0 0
      %930 = vmatpush1.bf16.msra.mxu0 0
      %931 = vmatprep.subr.bf16.mxu0 0
      %932 = vmatpush1.bf16.msra.mxu0 0
      %933 = vmatprep.subr.bf16.mxu0 0
      %934 = vmatpush1.bf16.msra.mxu0 0
      %935 = vmatprep.subr.bf16.mxu0 0
      %936 = vmatpush1.bf16.msra.mxu0 0
      %937 = vmatprep.subr.bf16.mxu0 0
      %938 = vmatpush1.bf16.msra.mxu0 0
      %939 = vmatprep.subr.bf16.mxu0 0
      %940 = vmatpush1.bf16.msra.mxu0 0
      %941 = vmatprep.subr.bf16.mxu0 0
      %942 = vmatpush1.bf16.msra.mxu0 0
      %943 = vmatprep.subr.bf16.mxu0 0
      %944 = vmatpush1.bf16.msra.mxu0 0
      %945 = vmatprep.subr.bf16.mxu0 0
      %946 = vmatpush1.bf16.msra.mxu0 0
      %947 = vmatprep.subr.bf16.mxu0 0
      %948 = vmatpush1.bf16.msra.mxu0 0
      %949 = vmatprep.subr.bf16.mxu0 0
      %950 = vmatpush1.bf16.msra.mxu0 0
      %951 = vmatprep.subr.bf16.mxu0 0
      %952 = vmatpush1.bf16.msra.mxu0 0
      %953 = vmatprep.mubr.bf16.mxu0 0
      %954 = vmatmul.mubr.bf16.gmra.mrb[0].mxu0 %v919
      %v955 = vpop.f32.mrb[0].mxu0
      %v956 = vadd.f32 %v891, %v955
      %v957 = vpop.f32.mrb[0].mxu0
      %v958 = vpop.f32.mrb[0].mxu0
      %v959 = vadd.f32 %v891, %v958
      %v960 = vpop.f32.mrb[0].mxu0
      %961 = vdwg.mxu0
      // Predicated region
      $region117: #{tnet_forward.1} parent=111 // pred_check
        %p962 = pneg %p724
      $region118: #{tnet_forward.1} parent=111 // pred_check_branch
        %964 = sbr.rel (%p962) target = $region120
      $region119: #{tnet_forward.1} parent=111 // pred_region
        %v965 = vld [vmem:[#allocation2] sm:$0x1]
        %vm966 = vcmask 130048
        %v968 = vsel %vm966, 1.0, 0
        %970 = vmatprep.subr.mxu0 0.0
        %971 = vmatpush1.msra.mxu0 %v956
        %972 = vmatprep.subr.mxu0 0.0
        %973 = vmatpush1.msra.mxu0 %v959
        %974 = vmatprep.subr.mxu0 0.0
        %975 = vmatpush1.msra.mxu0 0.0
        %976 = vmatprep.subr.mxu0 0.0
        %977 = vmatpush1.msra.mxu0 0.0
        %978 = vmatprep.subr.mxu0 0.0
        %979 = vmatpush1.msra.mxu0 0.0
        %980 = vmatprep.subr.mxu0 0.0
        %981 = vmatpush1.msra.mxu0 0.0
        %982 = vmatprep.subr.mxu0 0.0
        %983 = vmatpush1.msra.mxu0 0.0
        %984 = vmatprep.subr.mxu0 0.0
        %985 = vmatpush1.msra.mxu0 0.0
        %986 = vmatprep.subr.mxu0 0.0
        %987 = vmatpush1.msra.mxu0 0.0
        %988 = vmatprep.subr.mxu0 0.0
        %989 = vmatpush1.msra.mxu0 0.0
        %990 = vmatprep.subr.mxu0 0.0
        %991 = vmatpush1.msra.mxu0 0.0
        %992 = vmatprep.subr.mxu0 0.0
        %993 = vmatpush1.msra.mxu0 0.0
        %994 = vmatprep.subr.mxu0 0.0
        %995 = vmatpush1.msra.mxu0 0.0
        %996 = vmatprep.subr.mxu0 0.0
        %997 = vmatpush1.msra.mxu0 0.0
        %998 = vmatprep.subr.mxu0 0.0
        %999 = vmatpush1.msra.mxu0 0.0
        %1000 = vmatprep.subr.mxu0 0.0
        %1001 = vmatpush1.msra.mxu0 0.0
        %1002 = vmatprep.subr.mxu0 0.0
        %1003 = vmatpush1.msra.mxu0 0.0
        %1004 = vmatprep.subr.mxu0 0.0
        %1005 = vmatpush1.msra.mxu0 0.0
        %1006 = vmatprep.subr.mxu0 0.0
        %1007 = vmatpush1.msra.mxu0 0.0
        %1008 = vmatprep.subr.mxu0 0.0
        %1009 = vmatpush1.msra.mxu0 0.0
        %1010 = vmatprep.subr.mxu0 0.0
        %1011 = vmatpush1.msra.mxu0 0.0
        %1012 = vmatprep.subr.mxu0 0.0
        %1013 = vmatpush1.msra.mxu0 0.0
        %1014 = vmatprep.subr.mxu0 0.0
        %1015 = vmatpush1.msra.mxu0 0.0
        %1016 = vmatprep.subr.mxu0 0.0
        %1017 = vmatpush1.msra.mxu0 0.0
        %1018 = vmatprep.subr.mxu0 0.0
        %1019 = vmatpush1.msra.mxu0 0.0
        %1020 = vmatprep.subr.mxu0 0.0
        %1021 = vmatpush1.msra.mxu0 0.0
        %1022 = vmatprep.subr.mxu0 0.0
        %1023 = vmatpush1.msra.mxu0 0.0
        %1024 = vmatprep.subr.mxu0 0.0
        %1025 = vmatpush1.msra.mxu0 0.0
        %1026 = vmatprep.subr.mxu0 0.0
        %1027 = vmatpush1.msra.mxu0 0.0
        %1028 = vmatprep.subr.mxu0 0.0
        %1029 = vmatpush1.msra.mxu0 0.0
        %1030 = vmatprep.subr.mxu0 0.0
        %1031 = vmatpush1.msra.mxu0 0.0
        %1032 = vmatprep.subr.mxu0 0.0
        %1033 = vmatpush1.msra.mxu0 0.0
        %1034 = vmatprep.mubr.f32.mxu0 0.0
        %1035 = vmatmul.mubr.f32.gmra.mrb[0].mxu0 %v968
        %v1036 = vpop.f32.mrb[0].mxu0
        %v1037 = vadd.f32 0.0, %v1036
        %v1038 = vpop.f32.mrb[0].mxu0
        %1039 = vdwg.mxu0
        %v1040 = vadd.f32 %v965, %v1037
        %1041 = vst [vmem:[#allocation2] sm:$0x1] %v1040
        %v1042 = vld [vmem:[#allocation3] sm:$0x1]
        %v1043 = vmul.f32 %v956, %v956
        %v1044 = vmul.f32 %v959, %v959
        %1045 = vmatprep.subr.mxu0 0.0
        %1046 = vmatpush1.msra.mxu0 %v1043
        %1047 = vmatprep.subr.mxu0 0.0
        %1048 = vmatpush1.msra.mxu0 %v1044
        %1049 = vmatprep.subr.mxu0 0.0
        %1050 = vmatpush1.msra.mxu0 0.0
        %1051 = vmatprep.subr.mxu0 0.0
        %1052 = vmatpush1.msra.mxu0 0.0
        %1053 = vmatprep.subr.mxu0 0.0
        %1054 = vmatpush1.msra.mxu0 0.0
        %1055 = vmatprep.subr.mxu0 0.0
        %1056 = vmatpush1.msra.mxu0 0.0
        %1057 = vmatprep.subr.mxu0 0.0
        %1058 = vmatpush1.msra.mxu0 0.0
        %1059 = vmatprep.subr.mxu0 0.0
        %1060 = vmatpush1.msra.mxu0 0.0
        %1061 = vmatprep.subr.mxu0 0.0
        %1062 = vmatpush1.msra.mxu0 0.0
        %1063 = vmatprep.subr.mxu0 0.0
        %1064 = vmatpush1.msra.mxu0 0.0
        %1065 = vmatprep.subr.mxu0 0.0
        %1066 = vmatpush1.msra.mxu0 0.0
        %1067 = vmatprep.subr.mxu0 0.0
        %1068 = vmatpush1.msra.mxu0 0.0
        %1069 = vmatprep.subr.mxu0 0.0
        %1070 = vmatpush1.msra.mxu0 0.0
        %1071 = vmatprep.subr.mxu0 0.0
        %1072 = vmatpush1.msra.mxu0 0.0
        %1073 = vmatprep.subr.mxu0 0.0
        %1074 = vmatpush1.msra.mxu0 0.0
        %1075 = vmatprep.subr.mxu0 0.0
        %1076 = vmatpush1.msra.mxu0 0.0
        %1077 = vmatprep.subr.mxu0 0.0
        %1078 = vmatpush1.msra.mxu0 0.0
        %1079 = vmatprep.subr.mxu0 0.0
        %1080 = vmatpush1.msra.mxu0 0.0
        %1081 = vmatprep.subr.mxu0 0.0
        %1082 = vmatpush1.msra.mxu0 0.0
        %1083 = vmatprep.subr.mxu0 0.0
        %1084 = vmatpush1.msra.mxu0 0.0
        %1085 = vmatprep.subr.mxu0 0.0
        %1086 = vmatpush1.msra.mxu0 0.0
        %1087 = vmatprep.subr.mxu0 0.0
        %1088 = vmatpush1.msra.mxu0 0.0
        %1089 = vmatprep.subr.mxu0 0.0
        %1090 = vmatpush1.msra.mxu0 0.0
        %1091 = vmatprep.subr.mxu0 0.0
        %1092 = vmatpush1.msra.mxu0 0.0
        %1093 = vmatprep.subr.mxu0 0.0
        %1094 = vmatpush1.msra.mxu0 0.0
        %1095 = vmatprep.subr.mxu0 0.0
        %1096 = vmatpush1.msra.mxu0 0.0
        %1097 = vmatprep.subr.mxu0 0.0
        %1098 = vmatpush1.msra.mxu0 0.0
        %1099 = vmatprep.subr.mxu0 0.0
        %1100 = vmatpush1.msra.mxu0 0.0
        %1101 = vmatprep.subr.mxu0 0.0
        %1102 = vmatpush1.msra.mxu0 0.0
        %1103 = vmatprep.subr.mxu0 0.0
        %1104 = vmatpush1.msra.mxu0 0.0
        %1105 = vmatprep.subr.mxu0 0.0
        %1106 = vmatpush1.msra.mxu0 0.0
        %1107 = vmatprep.subr.mxu0 0.0
        %1108 = vmatpush1.msra.mxu0 0.0
        %1109 = vmatprep.mubr.f32.mxu0 0.0
        %1110 = vmatmul.mubr.f32.gmra.mrb[0].mxu0 %v968
        %v1111 = vpop.f32.mrb[0].mxu0
        %v1112 = vadd.f32 0.0, %v1111
        %v1113 = vpop.f32.mrb[0].mxu0
        %1114 = vdwg.mxu0
        %v1115 = vadd.f32 %v1042, %v1112
        %1116 = vst [vmem:[#allocation3] sm:$0x1] %v1115
      $region120: #{tnet_forward.1} parent=111 // pred_fallthru
        _
      %p1117 = scmp.eq.s32.totalorder %s39, 1
      // Predicated region
      $region121: #{tnet_forward.1} parent=111 // pred_check
        %p1118 = pneg %p1117
      $region122: #{tnet_forward.1} parent=111 // pred_check_branch
        %1120 = sbr.rel (%p1118) target = $region124
      $region123: #{tnet_forward.1} parent=111 // pred_region
        %v1121 = vld [vmem:[#allocation2] sm:$0x1]
        %v1122 = vmul.f32 %v1121, 0.03125
        %v1123 = vld [vmem:[#allocation3] sm:$0x1]
        %v1124 = vmul.f32 %v1123, 0.03125
        %v1125 = vmul.f32 %v1122, %v1122
        %v1126 = vsub.f32 %v1124, %v1125
        %v1127 = vmax.f32 %v1126, 0.0
        %v1128 = vadd.f32 %v1127, 1e-05
        %v1129 = vrsqrt.pop %v1128
        %v1131 = vlaneseq
        %v1132 = vshrl.u32 %v1131, 7
        %v1133 = vsub.s32 0, %v1132
        %v1134 = vrot.slane %v1122, %v1133
        %v1136 = vsub.f32 %v956, %v1134
        %v1137 = vsub.f32 %v959, %v1134
        %v1139 = vlaneseq
        %v1140 = vshrl.u32 %v1139, 7
        %v1141 = vsub.s32 0, %v1140
        %v1142 = vrot.slane %v1129, %v1141
        %v1144 = vmul.f32 %v1136, %v1142
        %v1145 = vmul.f32 %v1137, %v1142
        %v1146 = vld [vmem:[%s6] sm:$0x1]
        %v1148 = vlaneseq
        %v1149 = vshrl.u32 %v1148, 7
        %v1150 = vsub.s32 0, %v1149
        %v1151 = vrot.slane %v1146, %v1150
        %v1153 = vmul.f32 %v1144, %v1151
        %v1154 = vmul.f32 %v1145, %v1151
        %v1155 = vld [vmem:[%s7] sm:$0x1]
        %v1157 = vlaneseq
        %v1158 = vshrl.u32 %v1157, 7
        %v1159 = vsub.s32 0, %v1158
        %v1160 = vrot.slane %v1155, %v1159
        %v1162 = vadd.f32 %v1153, %v1160
        %v1163 = vadd.f32 %v1154, %v1160
        %v1164 = vmax.f32 %v1162, 0.0
        %v1165 = vmax.f32 %v1163, 0.0
        %v1166 = vpack.c.bf16 %v1165, %v1164
        %v1167 = vld [vmem:[%s8] sm:$0xff]
        %v1168 = vld [vmem:[%s8 + $0x8] sm:$0xff]
        %v1169 = vld [vmem:[%s8 + $0x10] sm:$0xff]
        %v1170 = vld [vmem:[%s8 + $0x18] sm:$0xff]
        %v1171 = vld [vmem:[%s8 + $0x20] sm:$0xff]
        %v1172 = vld [vmem:[%s8 + $0x28] sm:$0xff]
        %v1173 = vld [vmem:[%s8 + $0x30] sm:$0xff]
        %v1174 = vld [vmem:[%s8 + $0x38] sm:$0xff]
        %v1175 = vld [vmem:[%s8 + $0x40] sm:$0xff]
        %v1176 = vld [vmem:[%s8 + $0x48] sm:$0xff]
        %v1177 = vld [vmem:[%s8 + $0x50] sm:$0xff]
        %v1178 = vld [vmem:[%s8 + $0x58] sm:$0xff]
        %v1179 = vld [vmem:[%s8 + $0x60] sm:$0xff]
        %v1180 = vld [vmem:[%s8 + $0x68] sm:$0xff]
        %v1181 = vld [vmem:[%s8 + $0x70] sm:$0xff]
        %v1182 = vld [vmem:[%s8 + $0x78] sm:$0xff]
        %v1183 = vld [vmem:[%s8 + $0x80] sm:$0xff]
        %v1184 = vld [vmem:[%s8 + $0x88] sm:$0xff]
        %v1185 = vld [vmem:[%s8 + $0x90] sm:$0xff]
        %v1186 = vld [vmem:[%s8 + $0x98] sm:$0xff]
        %v1187 = vld [vmem:[%s8 + $0xa0] sm:$0xff]
        %v1188 = vld [vmem:[%s8 + $0xa8] sm:$0xff]
        %v1189 = vld [vmem:[%s8 + $0xb0] sm:$0xff]
        %v1190 = vld [vmem:[%s8 + $0xb8] sm:$0xff]
        %v1191 = vld [vmem:[%s8 + $0xc0] sm:$0xff]
        %v1192 = vld [vmem:[%s8 + $0xc8] sm:$0xff]
        %v1193 = vld [vmem:[%s8 + $0xd0] sm:$0xff]
        %v1194 = vld [vmem:[%s8 + $0xd8] sm:$0xff]
        %v1195 = vld [vmem:[%s8 + $0xe0] sm:$0xff]
        %v1196 = vld [vmem:[%s8 + $0xe8] sm:$0xff]
        %v1197 = vld [vmem:[%s8 + $0xf0] sm:$0xff]
        %v1198 = vld [vmem:[%s8 + $0xf8] sm:$0xff]
        %v1199 = vld [vmem:[%s8 + $0x100] sm:$0xff]
        %v1200 = vld [vmem:[%s8 + $0x108] sm:$0xff]
        %v1201 = vld [vmem:[%s8 + $0x110] sm:$0xff]
        %v1202 = vld [vmem:[%s8 + $0x118] sm:$0xff]
        %v1203 = vld [vmem:[%s8 + $0x120] sm:$0xff]
        %v1204 = vld [vmem:[%s8 + $0x128] sm:$0xff]
        %v1205 = vld [vmem:[%s8 + $0x130] sm:$0xff]
        %v1206 = vld [vmem:[%s8 + $0x138] sm:$0xff]
        %v1207 = vld [vmem:[%s8 + $0x140] sm:$0xff]
        %v1208 = vld [vmem:[%s8 + $0x148] sm:$0xff]
        %v1209 = vld [vmem:[%s8 + $0x150] sm:$0xff]
        %v1210 = vld [vmem:[%s8 + $0x158] sm:$0xff]
        %v1211 = vld [vmem:[%s8 + $0x160] sm:$0xff]
        %v1212 = vld [vmem:[%s8 + $0x168] sm:$0xff]
        %v1213 = vld [vmem:[%s8 + $0x170] sm:$0xff]
        %v1214 = vld [vmem:[%s8 + $0x178] sm:$0xff]
        %v1215 = vld [vmem:[%s8 + $0x180] sm:$0xff]
        %v1216 = vld [vmem:[%s8 + $0x188] sm:$0xff]
        %v1217 = vld [vmem:[%s8 + $0x190] sm:$0xff]
        %v1218 = vld [vmem:[%s8 + $0x198] sm:$0xff]
        %v1219 = vld [vmem:[%s8 + $0x1a0] sm:$0xff]
        %v1220 = vld [vmem:[%s8 + $0x1a8] sm:$0xff]
        %v1221 = vld [vmem:[%s8 + $0x1b0] sm:$0xff]
        %v1222 = vld [vmem:[%s8 + $0x1b8] sm:$0xff]
        %v1223 = vld [vmem:[%s8 + $0x1c0] sm:$0xff]
        %v1224 = vld [vmem:[%s8 + $0x1c8] sm:$0xff]
        %v1225 = vld [vmem:[%s8 + $0x1d0] sm:$0xff]
        %v1226 = vld [vmem:[%s8 + $0x1d8] sm:$0xff]
        %v1227 = vld [vmem:[%s8 + $0x1e0] sm:$0xff]
        %v1228 = vld [vmem:[%s8 + $0x1e8] sm:$0xff]
        %v1229 = vld [vmem:[%s8 + $0x1f0] sm:$0xff]
        %v1230 = vld [vmem:[%s8 + $0x1f8] sm:$0xff]
        %v1231 = vld [vmem:[%s9] sm:$0xff]
        %v1233 = vlaneseq
        %v1234 = vshrl.u32 %v1233, 7
        %v1235 = vsub.s32 0, %v1234
        %v1236 = vrot.slane %v1231, %v1235
        %v1237 = vlaneseq
        %v1238 = vshrl.u32 %v1237, 7
        %v1239 = vsub.s32 1, %v1238
        %v1240 = vrot.slane %v1231, %v1239
        %v1241 = vlaneseq
        %v1242 = vshrl.u32 %v1241, 7
        %v1243 = vsub.s32 2, %v1242
        %v1244 = vrot.slane %v1231, %v1243
        %v1245 = vlaneseq
        %v1246 = vshrl.u32 %v1245, 7
        %v1247 = vsub.s32 3, %v1246
        %v1248 = vrot.slane %v1231, %v1247
        %v1249 = vlaneseq
        %v1250 = vshrl.u32 %v1249, 7
        %v1251 = vsub.s32 4, %v1250
        %v1252 = vrot.slane %v1231, %v1251
        %v1253 = vlaneseq
        %v1254 = vshrl.u32 %v1253, 7
        %v1255 = vsub.s32 5, %v1254
        %v1256 = vrot.slane %v1231, %v1255
        %v1257 = vlaneseq
        %v1258 = vshrl.u32 %v1257, 7
        %v1259 = vsub.s32 6, %v1258
        %v1260 = vrot.slane %v1231, %v1259
        %v1261 = vlaneseq
        %v1262 = vshrl.u32 %v1261, 7
        %v1263 = vsub.s32 7, %v1262
        %v1264 = vrot.slane %v1231, %v1263
        %v1337 = vunpack.c.l.b16 %v1167
        %v1338 = vunpack.c.h.b16 %v1167
        %v1339 = vunpack.c.l.b16 %v1168
        %v1340 = vunpack.c.h.b16 %v1168
        %v1341 = vunpack.c.l.b16 %v1169
        %v1342 = vunpack.c.h.b16 %v1169
        %v1343 = vunpack.c.l.b16 %v1170
        %v1344 = vunpack.c.h.b16 %v1170
        %v1345 = vunpack.c.l.b16 %v1171
        %v1346 = vunpack.c.h.b16 %v1171
        %v1347 = vunpack.c.l.b16 %v1172
        %v1348 = vunpack.c.h.b16 %v1172
        %v1349 = vunpack.c.l.b16 %v1173
        %v1350 = vunpack.c.h.b16 %v1173
        %v1351 = vunpack.c.l.b16 %v1174
        %v1352 = vunpack.c.h.b16 %v1174
        %v1353 = vunpack.c.l.b16 %v1175
        %v1354 = vunpack.c.h.b16 %v1175
        %v1355 = vunpack.c.l.b16 %v1176
        %v1356 = vunpack.c.h.b16 %v1176
        %v1357 = vunpack.c.l.b16 %v1177
        %v1358 = vunpack.c.h.b16 %v1177
        %v1359 = vunpack.c.l.b16 %v1178
        %v1360 = vunpack.c.h.b16 %v1178
        %v1361 = vunpack.c.l.b16 %v1179
        %v1362 = vunpack.c.h.b16 %v1179
        %v1363 = vunpack.c.l.b16 %v1180
        %v1364 = vunpack.c.h.b16 %v1180
        %v1365 = vunpack.c.l.b16 %v1181
        %v1366 = vunpack.c.h.b16 %v1181
        %v1367 = vunpack.c.l.b16 %v1182
        %v1368 = vunpack.c.h.b16 %v1182
        %v1369 = vunpack.c.l.b16 %v1183
        %v1370 = vunpack.c.h.b16 %v1183
        %v1371 = vunpack.c.l.b16 %v1184
        %v1372 = vunpack.c.h.b16 %v1184
        %v1373 = vunpack.c.l.b16 %v1185
        %v1374 = vunpack.c.h.b16 %v1185
        %v1375 = vunpack.c.l.b16 %v1186
        %v1376 = vunpack.c.h.b16 %v1186
        %v1377 = vunpack.c.l.b16 %v1187
        %v1378 = vunpack.c.h.b16 %v1187
        %v1379 = vunpack.c.l.b16 %v1188
        %v1380 = vunpack.c.h.b16 %v1188
        %v1381 = vunpack.c.l.b16 %v1189
        %v1382 = vunpack.c.h.b16 %v1189
        %v1383 = vunpack.c.l.b16 %v1190
        %v1384 = vunpack.c.h.b16 %v1190
        %v1385 = vunpack.c.l.b16 %v1191
        %v1386 = vunpack.c.h.b16 %v1191
        %v1387 = vunpack.c.l.b16 %v1192
        %v1388 = vunpack.c.h.b16 %v1192
        %v1389 = vunpack.c.l.b16 %v1193
        %v1390 = vunpack.c.h.b16 %v1193
        %v1391 = vunpack.c.l.b16 %v1194
        %v1392 = vunpack.c.h.b16 %v1194
        %v1393 = vunpack.c.l.b16 %v1195
        %v1394 = vunpack.c.h.b16 %v1195
        %v1395 = vunpack.c.l.b16 %v1196
        %v1396 = vunpack.c.h.b16 %v1196
        %v1397 = vunpack.c.l.b16 %v1197
        %v1398 = vunpack.c.h.b16 %v1197
        %v1399 = vunpack.c.l.b16 %v1198
        %v1400 = vunpack.c.h.b16 %v1198
        %v1401 = vunpack.c.l.b16 %v1199
        %v1402 = vunpack.c.h.b16 %v1199
        %v1403 = vunpack.c.l.b16 %v1200
        %v1404 = vunpack.c.h.b16 %v1200
        %v1405 = vunpack.c.l.b16 %v1201
        %v1406 = vunpack.c.h.b16 %v1201
        %v1407 = vunpack.c.l.b16 %v1202
        %v1408 = vunpack.c.h.b16 %v1202
        %v1409 = vunpack.c.l.b16 %v1203
        %v1410 = vunpack.c.h.b16 %v1203
        %v1411 = vunpack.c.l.b16 %v1204
        %v1412 = vunpack.c.h.b16 %v1204
        %v1413 = vunpack.c.l.b16 %v1205
        %v1414 = vunpack.c.h.b16 %v1205
        %v1415 = vunpack.c.l.b16 %v1206
        %v1416 = vunpack.c.h.b16 %v1206
        %v1417 = vunpack.c.l.b16 %v1207
        %v1418 = vunpack.c.h.b16 %v1207
        %v1419 = vunpack.c.l.b16 %v1208
        %v1420 = vunpack.c.h.b16 %v1208
        %v1421 = vunpack.c.l.b16 %v1209
        %v1422 = vunpack.c.h.b16 %v1209
        %v1423 = vunpack.c.l.b16 %v1210
        %v1424 = vunpack.c.h.b16 %v1210
        %v1425 = vunpack.c.l.b16 %v1211
        %v1426 = vunpack.c.h.b16 %v1211
        %v1427 = vunpack.c.l.b16 %v1212
        %v1428 = vunpack.c.h.b16 %v1212
        %v1429 = vunpack.c.l.b16 %v1213
        %v1430 = vunpack.c.h.b16 %v1213
        %v1431 = vunpack.c.l.b16 %v1214
        %v1432 = vunpack.c.h.b16 %v1214
        %v1433 = vunpack.c.l.b16 %v1215
        %v1434 = vunpack.c.h.b16 %v1215
        %v1435 = vunpack.c.l.b16 %v1216
        %v1436 = vunpack.c.h.b16 %v1216
        %v1437 = vunpack.c.l.b16 %v1217
        %v1438 = vunpack.c.h.b16 %v1217
        %v1439 = vunpack.c.l.b16 %v1218
        %v1440 = vunpack.c.h.b16 %v1218
        %v1441 = vunpack.c.l.b16 %v1219
        %v1442 = vunpack.c.h.b16 %v1219
        %v1443 = vunpack.c.l.b16 %v1220
        %v1444 = vunpack.c.h.b16 %v1220
        %v1445 = vunpack.c.l.b16 %v1221
        %v1446 = vunpack.c.h.b16 %v1221
        %v1447 = vunpack.c.l.b16 %v1222
        %v1448 = vunpack.c.h.b16 %v1222
        %v1449 = vunpack.c.l.b16 %v1223
        %v1450 = vunpack.c.h.b16 %v1223
        %v1451 = vunpack.c.l.b16 %v1224
        %v1452 = vunpack.c.h.b16 %v1224
        %v1453 = vunpack.c.l.b16 %v1225
        %v1454 = vunpack.c.h.b16 %v1225
        %v1455 = vunpack.c.l.b16 %v1226
        %v1456 = vunpack.c.h.b16 %v1226
        %v1457 = vunpack.c.l.b16 %v1227
        %v1458 = vunpack.c.h.b16 %v1227
        %v1459 = vunpack.c.l.b16 %v1228
        %v1460 = vunpack.c.h.b16 %v1228
        %v1461 = vunpack.c.l.b16 %v1229
        %v1462 = vunpack.c.h.b16 %v1229
        %v1463 = vunpack.c.l.b16 %v1230
        %v1464 = vunpack.c.h.b16 %v1230
        %v1465 = vpack.c.b16 %v1345, %v1337
        %v1466 = vpack.c.b16 %v1346, %v1338
        %v1467 = vpack.c.b16 %v1347, %v1339
        %v1468 = vpack.c.b16 %v1348, %v1340
        %v1469 = vpack.c.b16 %v1349, %v1341
        %v1470 = vpack.c.b16 %v1350, %v1342
        %v1471 = vpack.c.b16 %v1351, %v1343
        %v1472 = vpack.c.b16 %v1352, %v1344
        %v1473 = vpack.c.b16 %v1361, %v1353
        %v1474 = vpack.c.b16 %v1362, %v1354
        %v1475 = vpack.c.b16 %v1363, %v1355
        %v1476 = vpack.c.b16 %v1364, %v1356
        %v1477 = vpack.c.b16 %v1365, %v1357
        %v1478 = vpack.c.b16 %v1366, %v1358
        %v1479 = vpack.c.b16 %v1367, %v1359
        %v1480 = vpack.c.b16 %v1368, %v1360
        %v1481 = vpack.c.b16 %v1377, %v1369
        %v1482 = vpack.c.b16 %v1378, %v1370
        %v1483 = vpack.c.b16 %v1379, %v1371
        %v1484 = vpack.c.b16 %v1380, %v1372
        %v1485 = vpack.c.b16 %v1381, %v1373
        %v1486 = vpack.c.b16 %v1382, %v1374
        %v1487 = vpack.c.b16 %v1383, %v1375
        %v1488 = vpack.c.b16 %v1384, %v1376
        %v1489 = vpack.c.b16 %v1393, %v1385
        %v1490 = vpack.c.b16 %v1394, %v1386
        %v1491 = vpack.c.b16 %v1395, %v1387
        %v1492 = vpack.c.b16 %v1396, %v1388
        %v1493 = vpack.c.b16 %v1397, %v1389
        %v1494 = vpack.c.b16 %v1398, %v1390
        %v1495 = vpack.c.b16 %v1399, %v1391
        %v1496 = vpack.c.b16 %v1400, %v1392
        %v1497 = vpack.c.b16 %v1409, %v1401
        %v1498 = vpack.c.b16 %v1410, %v1402
        %v1499 = vpack.c.b16 %v1411, %v1403
        %v1500 = vpack.c.b16 %v1412, %v1404
        %v1501 = vpack.c.b16 %v1413, %v1405
        %v1502 = vpack.c.b16 %v1414, %v1406
        %v1503 = vpack.c.b16 %v1415, %v1407
        %v1504 = vpack.c.b16 %v1416, %v1408
        %v1505 = vpack.c.b16 %v1425, %v1417
        %v1506 = vpack.c.b16 %v1426, %v1418
        %v1507 = vpack.c.b16 %v1427, %v1419
        %v1508 = vpack.c.b16 %v1428, %v1420
        %v1509 = vpack.c.b16 %v1429, %v1421
        %v1510 = vpack.c.b16 %v1430, %v1422
        %v1511 = vpack.c.b16 %v1431, %v1423
        %v1512 = vpack.c.b16 %v1432, %v1424
        %v1513 = vpack.c.b16 %v1441, %v1433
        %v1514 = vpack.c.b16 %v1442, %v1434
        %v1515 = vpack.c.b16 %v1443, %v1435
        %v1516 = vpack.c.b16 %v1444, %v1436
        %v1517 = vpack.c.b16 %v1445, %v1437
        %v1518 = vpack.c.b16 %v1446, %v1438
        %v1519 = vpack.c.b16 %v1447, %v1439
        %v1520 = vpack.c.b16 %v1448, %v1440
        %v1521 = vpack.c.b16 %v1457, %v1449
        %v1522 = vpack.c.b16 %v1458, %v1450
        %v1523 = vpack.c.b16 %v1459, %v1451
        %v1524 = vpack.c.b16 %v1460, %v1452
        %v1525 = vpack.c.b16 %v1461, %v1453
        %v1526 = vpack.c.b16 %v1462, %v1454
        %v1527 = vpack.c.b16 %v1463, %v1455
        %v1528 = vpack.c.b16 %v1464, %v1456
        %1593 = vmatprep.subr.bf16.mxu0 %v1466
        %1594 = vmatpush1.bf16.msra.mxu0 %v1465
        %1595 = vmatprep.subr.bf16.mxu0 %v1474
        %1596 = vmatpush1.bf16.msra.mxu0 %v1473
        %1597 = vmatprep.subr.bf16.mxu0 %v1482
        %1598 = vmatpush1.bf16.msra.mxu0 %v1481
        %1599 = vmatprep.subr.bf16.mxu0 %v1490
        %1600 = vmatpush1.bf16.msra.mxu0 %v1489
        %1601 = vmatprep.subr.bf16.mxu0 %v1498
        %1602 = vmatpush1.bf16.msra.mxu0 %v1497
        %1603 = vmatprep.subr.bf16.mxu0 %v1506
        %1604 = vmatpush1.bf16.msra.mxu0 %v1505
        %1605 = vmatprep.subr.bf16.mxu0 %v1514
        %1606 = vmatpush1.bf16.msra.mxu0 %v1513
        %1607 = vmatprep.subr.bf16.mxu0 %v1522
        %1608 = vmatpush1.bf16.msra.mxu0 %v1521
        %1609 = vmatprep.subr.bf16.mxu0 0
        %1610 = vmatpush1.bf16.msra.mxu0 0
        %1611 = vmatprep.subr.bf16.mxu0 0
        %1612 = vmatpush1.bf16.msra.mxu0 0
        %1613 = vmatprep.subr.bf16.mxu0 0
        %1614 = vmatpush1.bf16.msra.mxu0 0
        %1615 = vmatprep.subr.bf16.mxu0 0
        %1616 = vmatpush1.bf16.msra.mxu0 0
        %1617 = vmatprep.subr.bf16.mxu0 0
        %1618 = vmatpush1.bf16.msra.mxu0 0
        %1619 = vmatprep.subr.bf16.mxu0 0
        %1620 = vmatpush1.bf16.msra.mxu0 0
        %1621 = vmatprep.subr.bf16.mxu0 0
        %1622 = vmatpush1.bf16.msra.mxu0 0
        %1623 = vmatprep.subr.bf16.mxu0 0
        %1624 = vmatpush1.bf16.msra.mxu0 0
        %1625 = vmatprep.mubr.bf16.mxu0 0
        %1626 = vmatmul.mubr.bf16.gmra.mrb[0].mxu0 %v1166
        %v1627 = vpop.f32.mrb[0].mxu0
        %v1628 = vadd.f32 %v1236, %v1627
        %v1629 = vpop.f32.mrb[0].mxu0
        %v1630 = vadd.f32 %v1240, %v1629
        %v1631 = vpop.f32.mrb[0].mxu0
        %v1632 = vadd.f32 %v1236, %v1631
        %v1633 = vpop.f32.mrb[0].mxu0
        %v1634 = vadd.f32 %v1240, %v1633
        %1635 = vdwg.mxu0
        %1636 = vmatprep.subr.bf16.mxu0 %v1468
        %1637 = vmatpush1.bf16.msra.mxu0 %v1467
        %1638 = vmatprep.subr.bf16.mxu0 %v1476
        %1639 = vmatpush1.bf16.msra.mxu0 %v1475
        %1640 = vmatprep.subr.bf16.mxu0 %v1484
        %1641 = vmatpush1.bf16.msra.mxu0 %v1483
        %1642 = vmatprep.subr.bf16.mxu0 %v1492
        %1643 = vmatpush1.bf16.msra.mxu0 %v1491
        %1644 = vmatprep.subr.bf16.mxu0 %v1500
        %1645 = vmatpush1.bf16.msra.mxu0 %v1499
        %1646 = vmatprep.subr.bf16.mxu0 %v1508
        %1647 = vmatpush1.bf16.msra.mxu0 %v1507
        %1648 = vmatprep.subr.bf16.mxu0 %v1516
        %1649 = vmatpush1.bf16.msra.mxu0 %v1515
        %1650 = vmatprep.subr.bf16.mxu0 %v1524
        %1651 = vmatpush1.bf16.msra.mxu0 %v1523
        %1652 = vmatprep.subr.bf16.mxu0 0
        %1653 = vmatpush1.bf16.msra.mxu0 0
        %1654 = vmatprep.subr.bf16.mxu0 0
        %1655 = vmatpush1.bf16.msra.mxu0 0
        %1656 = vmatprep.subr.bf16.mxu0 0
        %1657 = vmatpush1.bf16.msra.mxu0 0
        %1658 = vmatprep.subr.bf16.mxu0 0
        %1659 = vmatpush1.bf16.msra.mxu0 0
        %1660 = vmatprep.subr.bf16.mxu0 0
        %1661 = vmatpush1.bf16.msra.mxu0 0
        %1662 = vmatprep.subr.bf16.mxu0 0
        %1663 = vmatpush1.bf16.msra.mxu0 0
        %1664 = vmatprep.subr.bf16.mxu0 0
        %1665 = vmatpush1.bf16.msra.mxu0 0
        %1666 = vmatprep.subr.bf16.mxu0 0
        %1667 = vmatpush1.bf16.msra.mxu0 0
        %1668 = vmatprep.mubr.bf16.mxu0 0
        %1669 = vmatmul.mubr.bf16.gmra.mrb[0].mxu0 %v1166
        %v1670 = vpop.f32.mrb[0].mxu0
        %v1671 = vadd.f32 %v1244, %v1670
        %v1672 = vpop.f32.mrb[0].mxu0
        %v1673 = vadd.f32 %v1248, %v1672
        %v1674 = vpop.f32.mrb[0].mxu0
        %v1675 = vadd.f32 %v1244, %v1674
        %v1676 = vpop.f32.mrb[0].mxu0
        %v1677 = vadd.f32 %v1248, %v1676
        %1678 = vdwg.mxu0
        %1679 = vmatprep.subr.bf16.mxu0 %v1470
        %1680 = vmatpush1.bf16.msra.mxu0 %v1469
        %1681 = vmatprep.subr.bf16.mxu0 %v1478
        %1682 = vmatpush1.bf16.msra.mxu0 %v1477
        %1683 = vmatprep.subr.bf16.mxu0 %v1486
        %1684 = vmatpush1.bf16.msra.mxu0 %v1485
        %1685 = vmatprep.subr.bf16.mxu0 %v1494
        %1686 = vmatpush1.bf16.msra.mxu0 %v1493
        %1687 = vmatprep.subr.bf16.mxu0 %v1502
        %1688 = vmatpush1.bf16.msra.mxu0 %v1501
        %1689 = vmatprep.subr.bf16.mxu0 %v1510
        %1690 = vmatpush1.bf16.msra.mxu0 %v1509
        %1691 = vmatprep.subr.bf16.mxu0 %v1518
        %1692 = vmatpush1.bf16.msra.mxu0 %v1517
        %1693 = vmatprep.subr.bf16.mxu0 %v1526
        %1694 = vmatpush1.bf16.msra.mxu0 %v1525
        %1695 = vmatprep.subr.bf16.mxu0 0
        %1696 = vmatpush1.bf16.msra.mxu0 0
        %1697 = vmatprep.subr.bf16.mxu0 0
        %1698 = vmatpush1.bf16.msra.mxu0 0
        %1699 = vmatprep.subr.bf16.mxu0 0
        %1700 = vmatpush1.bf16.msra.mxu0 0
        %1701 = vmatprep.subr.bf16.mxu0 0
        %1702 = vmatpush1.bf16.msra.mxu0 0
        %1703 = vmatprep.subr.bf16.mxu0 0
        %1704 = vmatpush1.bf16.msra.mxu0 0
        %1705 = vmatprep.subr.bf16.mxu0 0
        %1706 = vmatpush1.bf16.msra.mxu0 0
        %1707 = vmatprep.subr.bf16.mxu0 0
        %1708 = vmatpush1.bf16.msra.mxu0 0
        %1709 = vmatprep.subr.bf16.mxu0 0
        %1710 = vmatpush1.bf16.msra.mxu0 0
        %1711 = vmatprep.mubr.bf16.mxu0 0
        %1712 = vmatmul.mubr.bf16.gmra.mrb[0].mxu0 %v1166
        %v1713 = vpop.f32.mrb[0].mxu0
        %v1714 = vadd.f32 %v1252, %v1713
        %v1715 = vpop.f32.mrb[0].mxu0
        %v1716 = vadd.f32 %v1256, %v1715
        %v1717 = vpop.f32.mrb[0].mxu0
        %v1718 = vadd.f32 %v1252, %v1717
        %v1719 = vpop.f32.mrb[0].mxu0
        %v1720 = vadd.f32 %v1256, %v1719
        %1721 = vdwg.mxu0
        %1722 = vmatprep.subr.bf16.mxu0 %v1472
        %1723 = vmatpush1.bf16.msra.mxu0 %v1471
        %1724 = vmatprep.subr.bf16.mxu0 %v1480
        %1725 = vmatpush1.bf16.msra.mxu0 %v1479
        %1726 = vmatprep.subr.bf16.mxu0 %v1488
        %1727 = vmatpush1.bf16.msra.mxu0 %v1487
        %1728 = vmatprep.subr.bf16.mxu0 %v1496
        %1729 = vmatpush1.bf16.msra.mxu0 %v1495
        %1730 = vmatprep.subr.bf16.mxu0 %v1504
        %1731 = vmatpush1.bf16.msra.mxu0 %v1503
        %1732 = vmatprep.subr.bf16.mxu0 %v1512
        %1733 = vmatpush1.bf16.msra.mxu0 %v1511
        %1734 = vmatprep.subr.bf16.mxu0 %v1520
        %1735 = vmatpush1.bf16.msra.mxu0 %v1519
        %1736 = vmatprep.subr.bf16.mxu0 %v1528
        %1737 = vmatpush1.bf16.msra.mxu0 %v1527
        %1738 = vmatprep.subr.bf16.mxu0 0
        %1739 = vmatpush1.bf16.msra.mxu0 0
        %1740 = vmatprep.subr.bf16.mxu0 0
        %1741 = vmatpush1.bf16.msra.mxu0 0
        %1742 = vmatprep.subr.bf16.mxu0 0
        %1743 = vmatpush1.bf16.msra.mxu0 0
        %1744 = vmatprep.subr.bf16.mxu0 0
        %1745 = vmatpush1.bf16.msra.mxu0 0
        %1746 = vmatprep.subr.bf16.mxu0 0
        %1747 = vmatpush1.bf16.msra.mxu0 0
        %1748 = vmatprep.subr.bf16.mxu0 0
        %1749 = vmatpush1.bf16.msra.mxu0 0
        %1750 = vmatprep.subr.bf16.mxu0 0
        %1751 = vmatpush1.bf16.msra.mxu0 0
        %1752 = vmatprep.subr.bf16.mxu0 0
        %1753 = vmatpush1.bf16.msra.mxu0 0
        %1754 = vmatprep.mubr.bf16.mxu0 0
        %1755 = vmatmul.mubr.bf16.gmra.mrb[0].mxu0 %v1166
        %v1756 = vpop.f32.mrb[0].mxu0
        %v1757 = vadd.f32 %v1260, %v1756
        %v1758 = vpop.f32.mrb[0].mxu0
        %v1759 = vadd.f32 %v1264, %v1758
        %v1760 = vpop.f32.mrb[0].mxu0
        %v1761 = vadd.f32 %v1260, %v1760
        %v1762 = vpop.f32.mrb[0].mxu0
        %v1763 = vadd.f32 %v1264, %v1762
        %1764 = vdwg.mxu0
        %v1765 = vld [vmem:[#allocation4] sm:$0xff]
        %vm1766 = vcmask 130048
        %v1768 = vsel %vm1766, 1.0, 0
        %1770 = vmatprep.subr.mxu0 %v1630
        %1771 = vmatpush1.msra.mxu0 %v1628
        %1772 = vmatprep.subr.mxu0 %v1634
        %1773 = vmatpush1.msra.mxu0 %v1632
        %1774 = vmatprep.subr.mxu0 0.0
        %1775 = vmatpush1.msra.mxu0 0.0
        %1776 = vmatprep.subr.mxu0 0.0
        %1777 = vmatpush1.msra.mxu0 0.0
        %1778 = vmatprep.subr.mxu0 0.0
        %1779 = vmatpush1.msra.mxu0 0.0
        %1780 = vmatprep.subr.mxu0 0.0
        %1781 = vmatpush1.msra.mxu0 0.0
        %1782 = vmatprep.subr.mxu0 0.0
        %1783 = vmatpush1.msra.mxu0 0.0
        %1784 = vmatprep.subr.mxu0 0.0
        %1785 = vmatpush1.msra.mxu0 0.0
        %1786 = vmatprep.subr.mxu0 0.0
        %1787 = vmatpush1.msra.mxu0 0.0
        %1788 = vmatprep.subr.mxu0 0.0
        %1789 = vmatpush1.msra.mxu0 0.0
        %1790 = vmatprep.subr.mxu0 0.0
        %1791 = vmatpush1.msra.mxu0 0.0
        %1792 = vmatprep.subr.mxu0 0.0
        %1793 = vmatpush1.msra.mxu0 0.0
        %1794 = vmatprep.subr.mxu0 0.0
        %1795 = vmatpush1.msra.mxu0 0.0
        %1796 = vmatprep.subr.mxu0 0.0
        %1797 = vmatpush1.msra.mxu0 0.0
        %1798 = vmatprep.subr.mxu0 0.0
        %1799 = vmatpush1.msra.mxu0 0.0
        %1800 = vmatprep.subr.mxu0 0.0
        %1801 = vmatpush1.msra.mxu0 0.0
        %1802 = vmatprep.subr.mxu0 0.0
        %1803 = vmatpush1.msra.mxu0 0.0
        %1804 = vmatprep.subr.mxu0 0.0
        %1805 = vmatpush1.msra.mxu0 0.0
        %1806 = vmatprep.subr.mxu0 0.0
        %1807 = vmatpush1.msra.mxu0 0.0
        %1808 = vmatprep.subr.mxu0 0.0
        %1809 = vmatpush1.msra.mxu0 0.0
        %1810 = vmatprep.subr.mxu0 0.0
        %1811 = vmatpush1.msra.mxu0 0.0
        %1812 = vmatprep.subr.mxu0 0.0
        %1813 = vmatpush1.msra.mxu0 0.0
        %1814 = vmatprep.subr.mxu0 0.0
        %1815 = vmatpush1.msra.mxu0 0.0
        %1816 = vmatprep.subr.mxu0 0.0
        %1817 = vmatpush1.msra.mxu0 0.0
        %1818 = vmatprep.subr.mxu0 0.0
        %1819 = vmatpush1.msra.mxu0 0.0
        %1820 = vmatprep.subr.mxu0 0.0
        %1821 = vmatpush1.msra.mxu0 0.0
        %1822 = vmatprep.subr.mxu0 0.0
        %1823 = vmatpush1.msra.mxu0 0.0
        %1824 = vmatprep.subr.mxu0 0.0
        %1825 = vmatpush1.msra.mxu0 0.0
        %1826 = vmatprep.subr.mxu0 0.0
        %1827 = vmatpush1.msra.mxu0 0.0
        %1828 = vmatprep.subr.mxu0 0.0
        %1829 = vmatpush1.msra.mxu0 0.0
        %1830 = vmatprep.subr.mxu0 0.0
        %1831 = vmatpush1.msra.mxu0 0.0
        %1832 = vmatprep.subr.mxu0 0.0
        %1833 = vmatpush1.msra.mxu0 0.0
        %1834 = vmatprep.mubr.f32.mxu0 0.0
        %1835 = vmatmul.mubr.f32.gmra.mrb[0].mxu0 %v1768
        %v1836 = vpop.f32.mrb[0].mxu0
        %v1837 = vadd.f32 0.0, %v1836
        %v1838 = vpop.f32.mrb[0].mxu0
        %v1839 = vadd.f32 0.0, %v1838
        %1840 = vdwg.mxu0
        %1841 = vmatprep.subr.mxu0 %v1673
        %1842 = vmatpush1.msra.mxu0 %v1671
        %1843 = vmatprep.subr.mxu0 %v1677
        %1844 = vmatpush1.msra.mxu0 %v1675
        %1845 = vmatprep.subr.mxu0 0.0
        %1846 = vmatpush1.msra.mxu0 0.0
        %1847 = vmatprep.subr.mxu0 0.0
        %1848 = vmatpush1.msra.mxu0 0.0
        %1849 = vmatprep.subr.mxu0 0.0
        %1850 = vmatpush1.msra.mxu0 0.0
        %1851 = vmatprep.subr.mxu0 0.0
        %1852 = vmatpush1.msra.mxu0 0.0
        %1853 = vmatprep.subr.mxu0 0.0
        %1854 = vmatpush1.msra.mxu0 0.0
        %1855 = vmatprep.subr.mxu0 0.0
        %1856 = vmatpush1.msra.mxu0 0.0
        %1857 = vmatprep.subr.mxu0 0.0
        %1858 = vmatpush1.msra.mxu0 0.0
        %1859 = vmatprep.subr.mxu0 0.0
        %1860 = vmatpush1.msra.mxu0 0.0
        %1861 = vmatprep.subr.mxu0 0.0
        %1862 = vmatpush1.msra.mxu0 0.0
        %1863 = vmatprep.subr.mxu0 0.0
        %1864 = vmatpush1.msra.mxu0 0.0
        %1865 = vmatprep.subr.mxu0 0.0
        %1866 = vmatpush1.msra.mxu0 0.0
        %1867 = vmatprep.subr.mxu0 0.0
        %1868 = vmatpush1.msra.mxu0 0.0
        %1869 = vmatprep.subr.mxu0 0.0
        %1870 = vmatpush1.msra.mxu0 0.0
        %1871 = vmatprep.subr.mxu0 0.0
        %1872 = vmatpush1.msra.mxu0 0.0
        %1873 = vmatprep.subr.mxu0 0.0
        %1874 = vmatpush1.msra.mxu0 0.0
        %1875 = vmatprep.subr.mxu0 0.0
        %1876 = vmatpush1.msra.mxu0 0.0
        %1877 = vmatprep.subr.mxu0 0.0
        %1878 = vmatpush1.msra.mxu0 0.0
        %1879 = vmatprep.subr.mxu0 0.0
        %1880 = vmatpush1.msra.mxu0 0.0
        %1881 = vmatprep.subr.mxu0 0.0
        %1882 = vmatpush1.msra.mxu0 0.0
        %1883 = vmatprep.subr.mxu0 0.0
        %1884 = vmatpush1.msra.mxu0 0.0
        %1885 = vmatprep.subr.mxu0 0.0
        %1886 = vmatpush1.msra.mxu0 0.0
        %1887 = vmatprep.subr.mxu0 0.0
        %1888 = vmatpush1.msra.mxu0 0.0
        %1889 = vmatprep.subr.mxu0 0.0
        %1890 = vmatpush1.msra.mxu0 0.0
        %1891 = vmatprep.subr.mxu0 0.0
        %1892 = vmatpush1.msra.mxu0 0.0
        %1893 = vmatprep.subr.mxu0 0.0
        %1894 = vmatpush1.msra.mxu0 0.0
        %1895 = vmatprep.subr.mxu0 0.0
        %1896 = vmatpush1.msra.mxu0 0.0
        %1897 = vmatprep.subr.mxu0 0.0
        %1898 = vmatpush1.msra.mxu0 0.0
        %1899 = vmatprep.subr.mxu0 0.0
        %1900 = vmatpush1.msra.mxu0 0.0
        %1901 = vmatprep.subr.mxu0 0.0
        %1902 = vmatpush1.msra.mxu0 0.0
        %1903 = vmatprep.subr.mxu0 0.0
        %1904 = vmatpush1.msra.mxu0 0.0
        %1905 = vmatprep.mubr.f32.mxu0 0.0
        %1906 = vmatmul.mubr.f32.gmra.mrb[0].mxu0 %v1768
        %v1907 = vpop.f32.mrb[0].mxu0
        %v1908 = vadd.f32 0.0, %v1907
        %v1909 = vpop.f32.mrb[0].mxu0
        %v1910 = vadd.f32 0.0, %v1909
        %1911 = vdwg.mxu0
        %1912 = vmatprep.subr.mxu0 %v1716
        %1913 = vmatpush1.msra.mxu0 %v1714
        %1914 = vmatprep.subr.mxu0 %v1720
        %1915 = vmatpush1.msra.mxu0 %v1718
        %1916 = vmatprep.subr.mxu0 0.0
        %1917 = vmatpush1.msra.mxu0 0.0
        %1918 = vmatprep.subr.mxu0 0.0
        %1919 = vmatpush1.msra.mxu0 0.0
        %1920 = vmatprep.subr.mxu0 0.0
        %1921 = vmatpush1.msra.mxu0 0.0
        %1922 = vmatprep.subr.mxu0 0.0
        %1923 = vmatpush1.msra.mxu0 0.0
        %1924 = vmatprep.subr.mxu0 0.0
        %1925 = vmatpush1.msra.mxu0 0.0
        %1926 = vmatprep.subr.mxu0 0.0
        %1927 = vmatpush1.msra.mxu0 0.0
        %1928 = vmatprep.subr.mxu0 0.0
        %1929 = vmatpush1.msra.mxu0 0.0
        %1930 = vmatprep.subr.mxu0 0.0
        %1931 = vmatpush1.msra.mxu0 0.0
        %1932 = vmatprep.subr.mxu0 0.0
        %1933 = vmatpush1.msra.mxu0 0.0
        %1934 = vmatprep.subr.mxu0 0.0
        %1935 = vmatpush1.msra.mxu0 0.0
        %1936 = vmatprep.subr.mxu0 0.0
        %1937 = vmatpush1.msra.mxu0 0.0
        %1938 = vmatprep.subr.mxu0 0.0
        %1939 = vmatpush1.msra.mxu0 0.0
        %1940 = vmatprep.subr.mxu0 0.0
        %1941 = vmatpush1.msra.mxu0 0.0
        %1942 = vmatprep.subr.mxu0 0.0
        %1943 = vmatpush1.msra.mxu0 0.0
        %1944 = vmatprep.subr.mxu0 0.0
        %1945 = vmatpush1.msra.mxu0 0.0
        %1946 = vmatprep.subr.mxu0 0.0
        %1947 = vmatpush1.msra.mxu0 0.0
        %1948 = vmatprep.subr.mxu0 0.0
        %1949 = vmatpush1.msra.mxu0 0.0
        %1950 = vmatprep.subr.mxu0 0.0
        %1951 = vmatpush1.msra.mxu0 0.0
        %1952 = vmatprep.subr.mxu0 0.0
        %1953 = vmatpush1.msra.mxu0 0.0
        %1954 = vmatprep.subr.mxu0 0.0
        %1955 = vmatpush1.msra.mxu0 0.0
        %1956 = vmatprep.subr.mxu0 0.0
        %1957 = vmatpush1.msra.mxu0 0.0
        %1958 = vmatprep.subr.mxu0 0.0
        %1959 = vmatpush1.msra.mxu0 0.0
        %1960 = vmatprep.subr.mxu0 0.0
        %1961 = vmatpush1.msra.mxu0 0.0
        %1962 = vmatprep.subr.mxu0 0.0
        %1963 = vmatpush1.msra.mxu0 0.0
        %1964 = vmatprep.subr.mxu0 0.0
        %1965 = vmatpush1.msra.mxu0 0.0
        %1966 = vmatprep.subr.mxu0 0.0
        %1967 = vmatpush1.msra.mxu0 0.0
        %1968 = vmatprep.subr.mxu0 0.0
        %1969 = vmatpush1.msra.mxu0 0.0
        %1970 = vmatprep.subr.mxu0 0.0
        %1971 = vmatpush1.msra.mxu0 0.0
        %1972 = vmatprep.subr.mxu0 0.0
        %1973 = vmatpush1.msra.mxu0 0.0
        %1974 = vmatprep.subr.mxu0 0.0
        %1975 = vmatpush1.msra.mxu0 0.0
        %1976 = vmatprep.mubr.f32.mxu0 0.0
        %1977 = vmatmul.mubr.f32.gmra.mrb[0].mxu0 %v1768
        %v1978 = vpop.f32.mrb[0].mxu0
        %v1979 = vadd.f32 0.0, %v1978
        %v1980 = vpop.f32.mrb[0].mxu0
        %v1981 = vadd.f32 0.0, %v1980
        %1982 = vdwg.mxu0
        %1983 = vmatprep.subr.mxu0 %v1759
        %1984 = vmatpush1.msra.mxu0 %v1757
        %1985 = vmatprep.subr.mxu0 %v1763
        %1986 = vmatpush1.msra.mxu0 %v1761
        %1987 = vmatprep.subr.mxu0 0.0
        %1988 = vmatpush1.msra.mxu0 0.0
        %1989 = vmatprep.subr.mxu0 0.0
        %1990 = vmatpush1.msra.mxu0 0.0
        %1991 = vmatprep.subr.mxu0 0.0
        %1992 = vmatpush1.msra.mxu0 0.0
        %1993 = vmatprep.subr.mxu0 0.0
        %1994 = vmatpush1.msra.mxu0 0.0
        %1995 = vmatprep.subr.mxu0 0.0
        %1996 = vmatpush1.msra.mxu0 0.0
        %1997 = vmatprep.subr.mxu0 0.0
        %1998 = vmatpush1.msra.mxu0 0.0
        %1999 = vmatprep.subr.mxu0 0.0
        %2000 = vmatpush1.msra.mxu0 0.0
        %2001 = vmatprep.subr.mxu0 0.0
        %2002 = vmatpush1.msra.mxu0 0.0
        %2003 = vmatprep.subr.mxu0 0.0
        %2004 = vmatpush1.msra.mxu0 0.0
        %2005 = vmatprep.subr.mxu0 0.0
        %2006 = vmatpush1.msra.mxu0 0.0
        %2007 = vmatprep.subr.mxu0 0.0
        %2008 = vmatpush1.msra.mxu0 0.0
        %2009 = vmatprep.subr.mxu0 0.0
        %2010 = vmatpush1.msra.mxu0 0.0
        %2011 = vmatprep.subr.mxu0 0.0
        %2012 = vmatpush1.msra.mxu0 0.0
        %2013 = vmatprep.subr.mxu0 0.0
        %2014 = vmatpush1.msra.mxu0 0.0
        %2015 = vmatprep.subr.mxu0 0.0
        %2016 = vmatpush1.msra.mxu0 0.0
        %2017 = vmatprep.subr.mxu0 0.0
        %2018 = vmatpush1.msra.mxu0 0.0
        %2019 = vmatprep.subr.mxu0 0.0
        %2020 = vmatpush1.msra.mxu0 0.0
        %2021 = vmatprep.subr.mxu0 0.0
        %2022 = vmatpush1.msra.mxu0 0.0
        %2023 = vmatprep.subr.mxu0 0.0
        %2024 = vmatpush1.msra.mxu0 0.0
        %2025 = vmatprep.subr.mxu0 0.0
        %2026 = vmatpush1.msra.mxu0 0.0
        %2027 = vmatprep.subr.mxu0 0.0
        %2028 = vmatpush1.msra.mxu0 0.0
        %2029 = vmatprep.subr.mxu0 0.0
        %2030 = vmatpush1.msra.mxu0 0.0
        %2031 = vmatprep.subr.mxu0 0.0
        %2032 = vmatpush1.msra.mxu0 0.0
        %2033 = vmatprep.subr.mxu0 0.0
        %2034 = vmatpush1.msra.mxu0 0.0
        %2035 = vmatprep.subr.mxu0 0.0
        %2036 = vmatpush1.msra.mxu0 0.0
        %2037 = vmatprep.subr.mxu0 0.0
        %2038 = vmatpush1.msra.mxu0 0.0
        %2039 = vmatprep.subr.mxu0 0.0
        %2040 = vmatpush1.msra.mxu0 0.0
        %2041 = vmatprep.subr.mxu0 0.0
        %2042 = vmatpush1.msra.mxu0 0.0
        %2043 = vmatprep.subr.mxu0 0.0
        %2044 = vmatpush1.msra.mxu0 0.0
        %2045 = vmatprep.subr.mxu0 0.0
        %2046 = vmatpush1.msra.mxu0 0.0
        %2047 = vmatprep.mubr.f32.mxu0 0.0
        %2048 = vmatmul.mubr.f32.gmra.mrb[0].mxu0 %v1768
        %v2049 = vpop.f32.mrb[0].mxu0
        %v2050 = vadd.f32 0.0, %v2049
        %v2051 = vpop.f32.mrb[0].mxu0
        %v2052 = vadd.f32 0.0, %v2051
        %2053 = vdwg.mxu0
        %v2062 = vcombine.low %v1837, %v1839
        %v2063 = vcombine.low %v1908, %v1910
        %v2064 = vcombine.low %v1979, %v1981
        %v2065 = vcombine.low %v2050, %v2052
        %v2067 = vunpack.c.l.s4 1966171168
        %v2068 = vunpack.c.0.s8 %v2067
        %v2069 = vlaneseq
        %v2070 = vshrl.u32 %v2069, 7
        %v2071 = vsub.s32 %v2068, %v2070
        %v2072 = vrot.slane %v2062, %v2071
        %v2074 = vunpack.c.l.s4 1966171168
        %v2075 = vunpack.c.0.s8 %v2074
        %v2076 = vlaneseq
        %v2077 = vshrl.u32 %v2076, 7
        %v2078 = vsub.s32 %v2075, %v2077
        %v2079 = vrot.slane %v2063, %v2078
        %v2081 = vunpack.c.l.s4 1966171168
        %v2082 = vunpack.c.0.s8 %v2081
        %v2083 = vlaneseq
        %v2084 = vshrl.u32 %v2083, 7
        %v2085 = vsub.s32 %v2082, %v2084
        %v2086 = vrot.slane %v2064, %v2085
        %v2088 = vunpack.c.l.s4 1966171168
        %v2089 = vunpack.c.0.s8 %v2088
        %v2090 = vlaneseq
        %v2091 = vshrl.u32 %v2090, 7
        %v2092 = vsub.s32 %v2089, %v2091
        %v2093 = vrot.slane %v2065, %v2092
        %v2094 = vcombine.low %v2072, %v2079
        %v2095 = vcombine.low %v2086, %v2093
        %v2097 = vunpack.c.l.s4 1966171168
        %v2098 = vunpack.c.0.s8 %v2097
        %v2099 = vlaneseq
        %v2100 = vshrl.u32 %v2099, 7
        %v2101 = vsub.s32 %v2098, %v2100
        %v2102 = vrot.slane %v2094, %v2101
        %v2104 = vunpack.c.l.s4 1966171168
        %v2105 = vunpack.c.0.s8 %v2104
        %v2106 = vlaneseq
        %v2107 = vshrl.u32 %v2106, 7
        %v2108 = vsub.s32 %v2105, %v2107
        %v2109 = vrot.slane %v2095, %v2108
        %v2110 = vcombine.low %v2102, %v2109
        %v2112 = vadd.f32 %v1765, %v2110
        %2113 = vst [vmem:[#allocation4] sm:$0xff] %v2112
        %v2114 = vld [vmem:[#allocation5] sm:$0xff]
        %v2115 = vmul.f32 %v1628, %v1628
        %v2116 = vmul.f32 %v1630, %v1630
        %v2117 = vmul.f32 %v1671, %v1671
        %v2118 = vmul.f32 %v1673, %v1673
        %v2119 = vmul.f32 %v1714, %v1714
        %v2120 = vmul.f32 %v1716, %v1716
        %v2121 = vmul.f32 %v1757, %v1757
        %v2122 = vmul.f32 %v1759, %v1759
        %v2123 = vmul.f32 %v1632, %v1632
        %v2124 = vmul.f32 %v1634, %v1634
        %v2125 = vmul.f32 %v1675, %v1675
        %v2126 = vmul.f32 %v1677, %v1677
        %v2127 = vmul.f32 %v1718, %v1718
        %v2128 = vmul.f32 %v1720, %v1720
        %v2129 = vmul.f32 %v1761, %v1761
        %v2130 = vmul.f32 %v1763, %v1763
        %2131 = vmatprep.subr.mxu0 %v2116
        %2132 = vmatpush1.msra.mxu0 %v2115
        %2133 = vmatprep.subr.mxu0 %v2124
        %2134 = vmatpush1.msra.mxu0 %v2123
        %2135 = vmatprep.subr.mxu0 0.0
        %2136 = vmatpush1.msra.mxu0 0.0
        %2137 = vmatprep.subr.mxu0 0.0
        %2138 = vmatpush1.msra.mxu0 0.0
        %2139 = vmatprep.subr.mxu0 0.0
        %2140 = vmatpush1.msra.mxu0 0.0
        %2141 = vmatprep.subr.mxu0 0.0
        %2142 = vmatpush1.msra.mxu0 0.0
        %2143 = vmatprep.subr.mxu0 0.0
        %2144 = vmatpush1.msra.mxu0 0.0
        %2145 = vmatprep.subr.mxu0 0.0
        %2146 = vmatpush1.msra.mxu0 0.0
        %2147 = vmatprep.subr.mxu0 0.0
        %2148 = vmatpush1.msra.mxu0 0.0
        %2149 = vmatprep.subr.mxu0 0.0
        %2150 = vmatpush1.msra.mxu0 0.0
        %2151 = vmatprep.subr.mxu0 0.0
        %2152 = vmatpush1.msra.mxu0 0.0
        %2153 = vmatprep.subr.mxu0 0.0
        %2154 = vmatpush1.msra.mxu0 0.0
        %2155 = vmatprep.subr.mxu0 0.0
        %2156 = vmatpush1.msra.mxu0 0.0
        %2157 = vmatprep.subr.mxu0 0.0
        %2158 = vmatpush1.msra.mxu0 0.0
        %2159 = vmatprep.subr.mxu0 0.0
        %2160 = vmatpush1.msra.mxu0 0.0
        %2161 = vmatprep.subr.mxu0 0.0
        %2162 = vmatpush1.msra.mxu0 0.0
        %2163 = vmatprep.subr.mxu0 0.0
        %2164 = vmatpush1.msra.mxu0 0.0
        %2165 = vmatprep.subr.mxu0 0.0
        %2166 = vmatpush1.msra.mxu0 0.0
        %2167 = vmatprep.subr.mxu0 0.0
        %2168 = vmatpush1.msra.mxu0 0.0
        %2169 = vmatprep.subr.mxu0 0.0
        %2170 = vmatpush1.msra.mxu0 0.0
        %2171 = vmatprep.subr.mxu0 0.0
        %2172 = vmatpush1.msra.mxu0 0.0
        %2173 = vmatprep.subr.mxu0 0.0
        %2174 = vmatpush1.msra.mxu0 0.0
        %2175 = vmatprep.subr.mxu0 0.0
        %2176 = vmatpush1.msra.mxu0 0.0
        %2177 = vmatprep.subr.mxu0 0.0
        %2178 = vmatpush1.msra.mxu0 0.0
        %2179 = vmatprep.subr.mxu0 0.0
        %2180 = vmatpush1.msra.mxu0 0.0
        %2181 = vmatprep.subr.mxu0 0.0
        %2182 = vmatpush1.msra.mxu0 0.0
        %2183 = vmatprep.subr.mxu0 0.0
        %2184 = vmatpush1.msra.mxu0 0.0
        %2185 = vmatprep.subr.mxu0 0.0
        %2186 = vmatpush1.msra.mxu0 0.0
        %2187 = vmatprep.subr.mxu0 0.0
        %2188 = vmatpush1.msra.mxu0 0.0
        %2189 = vmatprep.subr.mxu0 0.0
        %2190 = vmatpush1.msra.mxu0 0.0
        %2191 = vmatprep.subr.mxu0 0.0
        %2192 = vmatpush1.msra.mxu0 0.0
        %2193 = vmatprep.subr.mxu0 0.0
        %2194 = vmatpush1.msra.mxu0 0.0
        %2195 = vmatprep.mubr.f32.mxu0 0.0
        %2196 = vmatmul.mubr.f32.gmra.mrb[0].mxu0 %v1768
        %v2197 = vpop.f32.mrb[0].mxu0
        %v2198 = vadd.f32 0.0, %v2197
        %v2199 = vpop.f32.mrb[0].mxu0
        %v2200 = vadd.f32 0.0, %v2199
        %2201 = vdwg.mxu0
        %2202 = vmatprep.subr.mxu0 %v2118
        %2203 = vmatpush1.msra.mxu0 %v2117
        %2204 = vmatprep.subr.mxu0 %v2126
        %2205 = vmatpush1.msra.mxu0 %v2125
        %2206 = vmatprep.subr.mxu0 0.0
        %2207 = vmatpush1.msra.mxu0 0.0
        %2208 = vmatprep.subr.mxu0 0.0
        %2209 = vmatpush1.msra.mxu0 0.0
        %2210 = vmatprep.subr.mxu0 0.0
        %2211 = vmatpush1.msra.mxu0 0.0
        %2212 = vmatprep.subr.mxu0 0.0
        %2213 = vmatpush1.msra.mxu0 0.0
        %2214 = vmatprep.subr.mxu0 0.0
        %2215 = vmatpush1.msra.mxu0 0.0
        %2216 = vmatprep.subr.mxu0 0.0
        %2217 = vmatpush1.msra.mxu0 0.0
        %2218 = vmatprep.subr.mxu0 0.0
        %2219 = vmatpush1.msra.mxu0 0.0
        %2220 = vmatprep.subr.mxu0 0.0
        %2221 = vmatpush1.msra.mxu0 0.0
        %2222 = vmatprep.subr.mxu0 0.0
        %2223 = vmatpush1.msra.mxu0 0.0
        %2224 = vmatprep.subr.mxu0 0.0
        %2225 = vmatpush1.msra.mxu0 0.0
        %2226 = vmatprep.subr.mxu0 0.0
        %2227 = vmatpush1.msra.mxu0 0.0
        %2228 = vmatprep.subr.mxu0 0.0
        %2229 = vmatpush1.msra.mxu0 0.0
        %2230 = vmatprep.subr.mxu0 0.0
        %2231 = vmatpush1.msra.mxu0 0.0
        %2232 = vmatprep.subr.mxu0 0.0
        %2233 = vmatpush1.msra.mxu0 0.0
        %2234 = vmatprep.subr.mxu0 0.0
        %2235 = vmatpush1.msra.mxu0 0.0
        %2236 = vmatprep.subr.mxu0 0.0
        %2237 = vmatpush1.msra.mxu0 0.0
        %2238 = vmatprep.subr.mxu0 0.0
        %2239 = vmatpush1.msra.mxu0 0.0
        %2240 = vmatprep.subr.mxu0 0.0
        %2241 = vmatpush1.msra.mxu0 0.0
        %2242 = vmatprep.subr.mxu0 0.0
        %2243 = vmatpush1.msra.mxu0 0.0
        %2244 = vmatprep.subr.mxu0 0.0
        %2245 = vmatpush1.msra.mxu0 0.0
        %2246 = vmatprep.subr.mxu0 0.0
        %2247 = vmatpush1.msra.mxu0 0.0
        %2248 = vmatprep.subr.mxu0 0.0
        %2249 = vmatpush1.msra.mxu0 0.0
        %2250 = vmatprep.subr.mxu0 0.0
        %2251 = vmatpush1.msra.mxu0 0.0
        %2252 = vmatprep.subr.mxu0 0.0
        %2253 = vmatpush1.msra.mxu0 0.0
        %2254 = vmatprep.subr.mxu0 0.0
        %2255 = vmatpush1.msra.mxu0 0.0
        %2256 = vmatprep.subr.mxu0 0.0
        %2257 = vmatpush1.msra.mxu0 0.0
        %2258 = vmatprep.subr.mxu0 0.0
        %2259 = vmatpush1.msra.mxu0 0.0
        %2260 = vmatprep.subr.mxu0 0.0
        %2261 = vmatpush1.msra.mxu0 0.0
        %2262 = vmatprep.subr.mxu0 0.0
        %2263 = vmatpush1.msra.mxu0 0.0
        %2264 = vmatprep.subr.mxu0 0.0
        %2265 = vmatpush1.msra.mxu0 0.0
        %2266 = vmatprep.mubr.f32.mxu0 0.0
        %2267 = vmatmul.mubr.f32.gmra.mrb[0].mxu0 %v1768
        %v2268 = vpop.f32.mrb[0].mxu0
        %v2269 = vadd.f32 0.0, %v2268
        %v2270 = vpop.f32.mrb[0].mxu0
        %v2271 = vadd.f32 0.0, %v2270
        %2272 = vdwg.mxu0
        %2273 = vmatprep.subr.mxu0 %v2120
        %2274 = vmatpush1.msra.mxu0 %v2119
        %2275 = vmatprep.subr.mxu0 %v2128
        %2276 = vmatpush1.msra.mxu0 %v2127
        %2277 = vmatprep.subr.mxu0 0.0
        %2278 = vmatpush1.msra.mxu0 0.0
        %2279 = vmatprep.subr.mxu0 0.0
        %2280 = vmatpush1.msra.mxu0 0.0
        %2281 = vmatprep.subr.mxu0 0.0
        %2282 = vmatpush1.msra.mxu0 0.0
        %2283 = vmatprep.subr.mxu0 0.0
        %2284 = vmatpush1.msra.mxu0 0.0
        %2285 = vmatprep.subr.mxu0 0.0
        %2286 = vmatpush1.msra.mxu0 0.0
        %2287 = vmatprep.subr.mxu0 0.0
        %2288 = vmatpush1.msra.mxu0 0.0
        %2289 = vmatprep.subr.mxu0 0.0
        %2290 = vmatpush1.msra.mxu0 0.0
        %2291 = vmatprep.subr.mxu0 0.0
        %2292 = vmatpush1.msra.mxu0 0.0
        %2293 = vmatprep.subr.mxu0 0.0
        %2294 = vmatpush1.msra.mxu0 0.0
        %2295 = vmatprep.subr.mxu0 0.0
        %2296 = vmatpush1.msra.mxu0 0.0
        %2297 = vmatprep.subr.mxu0 0.0
        %2298 = vmatpush1.msra.mxu0 0.0
        %2299 = vmatprep.subr.mxu0 0.0
        %2300 = vmatpush1.msra.mxu0 0.0
        %2301 = vmatprep.subr.mxu0 0.0
        %2302 = vmatpush1.msra.mxu0 0.0
        %2303 = vmatprep.subr.mxu0 0.0
        %2304 = vmatpush1.msra.mxu0 0.0
        %2305 = vmatprep.subr.mxu0 0.0
        %2306 = vmatpush1.msra.mxu0 0.0
        %2307 = vmatprep.subr.mxu0 0.0
        %2308 = vmatpush1.msra.mxu0 0.0
        %2309 = vmatprep.subr.mxu0 0.0
        %2310 = vmatpush1.msra.mxu0 0.0
        %2311 = vmatprep.subr.mxu0 0.0
        %2312 = vmatpush1.msra.mxu0 0.0
        %2313 = vmatprep.subr.mxu0 0.0
        %2314 = vmatpush1.msra.mxu0 0.0
        %2315 = vmatprep.subr.mxu0 0.0
        %2316 = vmatpush1.msra.mxu0 0.0
        %2317 = vmatprep.subr.mxu0 0.0
        %2318 = vmatpush1.msra.mxu0 0.0
        %2319 = vmatprep.subr.mxu0 0.0
        %2320 = vmatpush1.msra.mxu0 0.0
        %2321 = vmatprep.subr.mxu0 0.0
        %2322 = vmatpush1.msra.mxu0 0.0
        %2323 = vmatprep.subr.mxu0 0.0
        %2324 = vmatpush1.msra.mxu0 0.0
        %2325 = vmatprep.subr.mxu0 0.0
        %2326 = vmatpush1.msra.mxu0 0.0
        %2327 = vmatprep.subr.mxu0 0.0
        %2328 = vmatpush1.msra.mxu0 0.0
        %2329 = vmatprep.subr.mxu0 0.0
        %2330 = vmatpush1.msra.mxu0 0.0
        %2331 = vmatprep.subr.mxu0 0.0
        %2332 = vmatpush1.msra.mxu0 0.0
        %2333 = vmatprep.subr.mxu0 0.0
        %2334 = vmatpush1.msra.mxu0 0.0
        %2335 = vmatprep.subr.mxu0 0.0
        %2336 = vmatpush1.msra.mxu0 0.0
        %2337 = vmatprep.mubr.f32.mxu0 0.0
        %2338 = vmatmul.mubr.f32.gmra.mrb[0].mxu0 %v1768
        %v2339 = vpop.f32.mrb[0].mxu0
        %v2340 = vadd.f32 0.0, %v2339
        %v2341 = vpop.f32.mrb[0].mxu0
        %v2342 = vadd.f32 0.0, %v2341
        %2343 = vdwg.mxu0
        %2344 = vmatprep.subr.mxu0 %v2122
        %2345 = vmatpush1.msra.mxu0 %v2121
        %2346 = vmatprep.subr.mxu0 %v2130
        %2347 = vmatpush1.msra.mxu0 %v2129
        %2348 = vmatprep.subr.mxu0 0.0
        %2349 = vmatpush1.msra.mxu0 0.0
        %2350 = vmatprep.subr.mxu0 0.0
        %2351 = vmatpush1.msra.mxu0 0.0
        %2352 = vmatprep.subr.mxu0 0.0
        %2353 = vmatpush1.msra.mxu0 0.0
        %2354 = vmatprep.subr.mxu0 0.0
        %2355 = vmatpush1.msra.mxu0 0.0
        %2356 = vmatprep.subr.mxu0 0.0
        %2357 = vmatpush1.msra.mxu0 0.0
        %2358 = vmatprep.subr.mxu0 0.0
        %2359 = vmatpush1.msra.mxu0 0.0
        %2360 = vmatprep.subr.mxu0 0.0
        %2361 = vmatpush1.msra.mxu0 0.0
        %2362 = vmatprep.subr.mxu0 0.0
        %2363 = vmatpush1.msra.mxu0 0.0
        %2364 = vmatprep.subr.mxu0 0.0
        %2365 = vmatpush1.msra.mxu0 0.0
        %2366 = vmatprep.subr.mxu0 0.0
        %2367 = vmatpush1.msra.mxu0 0.0
        %2368 = vmatprep.subr.mxu0 0.0
        %2369 = vmatpush1.msra.mxu0 0.0
        %2370 = vmatprep.subr.mxu0 0.0
        %2371 = vmatpush1.msra.mxu0 0.0
        %2372 = vmatprep.subr.mxu0 0.0
        %2373 = vmatpush1.msra.mxu0 0.0
        %2374 = vmatprep.subr.mxu0 0.0
        %2375 = vmatpush1.msra.mxu0 0.0
        %2376 = vmatprep.subr.mxu0 0.0
        %2377 = vmatpush1.msra.mxu0 0.0
        %2378 = vmatprep.subr.mxu0 0.0
        %2379 = vmatpush1.msra.mxu0 0.0
        %2380 = vmatprep.subr.mxu0 0.0
        %2381 = vmatpush1.msra.mxu0 0.0
        %2382 = vmatprep.subr.mxu0 0.0
        %2383 = vmatpush1.msra.mxu0 0.0
        %2384 = vmatprep.subr.mxu0 0.0
        %2385 = vmatpush1.msra.mxu0 0.0
        %2386 = vmatprep.subr.mxu0 0.0
        %2387 = vmatpush1.msra.mxu0 0.0
        %2388 = vmatprep.subr.mxu0 0.0
        %2389 = vmatpush1.msra.mxu0 0.0
        %2390 = vmatprep.subr.mxu0 0.0
        %2391 = vmatpush1.msra.mxu0 0.0
        %2392 = vmatprep.subr.mxu0 0.0
        %2393 = vmatpush1.msra.mxu0 0.0
        %2394 = vmatprep.subr.mxu0 0.0
        %2395 = vmatpush1.msra.mxu0 0.0
        %2396 = vmatprep.subr.mxu0 0.0
        %2397 = vmatpush1.msra.mxu0 0.0
        %2398 = vmatprep.subr.mxu0 0.0
        %2399 = vmatpush1.msra.mxu0 0.0
        %2400 = vmatprep.subr.mxu0 0.0
        %2401 = vmatpush1.msra.mxu0 0.0
        %2402 = vmatprep.subr.mxu0 0.0
        %2403 = vmatpush1.msra.mxu0 0.0
        %2404 = vmatprep.subr.mxu0 0.0
        %2405 = vmatpush1.msra.mxu0 0.0
        %2406 = vmatprep.subr.mxu0 0.0
        %2407 = vmatpush1.msra.mxu0 0.0
        %2408 = vmatprep.mubr.f32.mxu0 0.0
        %2409 = vmatmul.mubr.f32.gmra.mrb[0].mxu0 %v1768
        %v2410 = vpop.f32.mrb[0].mxu0
        %v2411 = vadd.f32 0.0, %v2410
        %v2412 = vpop.f32.mrb[0].mxu0
        %v2413 = vadd.f32 0.0, %v2412
        %2414 = vdwg.mxu0
        %v2423 = vcombine.low %v2198, %v2200
        %v2424 = vcombine.low %v2269, %v2271
        %v2425 = vcombine.low %v2340, %v2342
        %v2426 = vcombine.low %v2411, %v2413
        %v2428 = vunpack.c.l.s4 1966171168
        %v2429 = vunpack.c.0.s8 %v2428
        %v2430 = vlaneseq
        %v2431 = vshrl.u32 %v2430, 7
        %v2432 = vsub.s32 %v2429, %v2431
        %v2433 = vrot.slane %v2423, %v2432
        %v2435 = vunpack.c.l.s4 1966171168
        %v2436 = vunpack.c.0.s8 %v2435
        %v2437 = vlaneseq
        %v2438 = vshrl.u32 %v2437, 7
        %v2439 = vsub.s32 %v2436, %v2438
        %v2440 = vrot.slane %v2424, %v2439
        %v2442 = vunpack.c.l.s4 1966171168
        %v2443 = vunpack.c.0.s8 %v2442
        %v2444 = vlaneseq
        %v2445 = vshrl.u32 %v2444, 7
        %v2446 = vsub.s32 %v2443, %v2445
        %v2447 = vrot.slane %v2425, %v2446
        %v2449 = vunpack.c.l.s4 1966171168
        %v2450 = vunpack.c.0.s8 %v2449
        %v2451 = vlaneseq
        %v2452 = vshrl.u32 %v2451, 7
        %v2453 = vsub.s32 %v2450, %v2452
        %v2454 = vrot.slane %v2426, %v2453
        %v2455 = vcombine.low %v2433, %v2440
        %v2456 = vcombine.low %v2447, %v2454
        %v2458 = vunpack.c.l.s4 1966171168
        %v2459 = vunpack.c.0.s8 %v2458
        %v2460 = vlaneseq
        %v2461 = vshrl.u32 %v2460, 7
        %v2462 = vsub.s32 %v2459, %v2461
        %v2463 = vrot.slane %v2455, %v2462
        %v2465 = vunpack.c.l.s4 1966171168
        %v2466 = vunpack.c.0.s8 %v2465
        %v2467 = vlaneseq
        %v2468 = vshrl.u32 %v2467, 7
        %v2469 = vsub.s32 %v2466, %v2468
        %v2470 = vrot.slane %v2456, %v2469
        %v2471 = vcombine.low %v2463, %v2470
        %v2473 = vadd.f32 %v2114, %v2471
        %2474 = vst [vmem:[#allocation5] sm:$0xff] %v2473
        // Predicated region
        $region125: #{tnet_forward.1} parent=123 // pred_check
          %p2475 = pneg %p728
        $region126: #{tnet_forward.1} parent=123 // pred_check_branch
          %2477 = sbr.rel (%p2475) target = $region128
        $region127: #{tnet_forward.1} parent=123 // pred_region
          %2478 = vst [vmem:[#allocation8] sm:$0xff] -inf
          %2479 = vst [vmem:[#allocation9] sm:$0xff] inf
        $region128: #{tnet_forward.1} parent=123 // pred_fallthru
          _
        %v2480 = vld [vmem:[#allocation8] sm:$0xff]
        %v2481 = vmax.f32 %v1628, %v1632
        %v2482 = vrot.slane %v2481, 4
        %v2483 = vmax.f32 %v2481, %v2482
        %v2484 = vrot.slane %v2483, 2
        %v2485 = vmax.f32 %v2483, %v2484
        %v2486 = vrot.slane %v2485, 1
        %v2487 = vmax.f32 %v2485, %v2486
        %v2488 = vmax.f32 %v1630, %v1634
        %v2489 = vrot.slane %v2488, 4
        %v2490 = vmax.f32 %v2488, %v2489
        %v2491 = vrot.slane %v2490, 2
        %v2492 = vmax.f32 %v2490, %v2491
        %v2493 = vrot.slane %v2492, 1
        %v2494 = vmax.f32 %v2492, %v2493
        %v2495 = vmax.f32 %v1671, %v1675
        %v2496 = vrot.slane %v2495, 4
        %v2497 = vmax.f32 %v2495, %v2496
        %v2498 = vrot.slane %v2497, 2
        %v2499 = vmax.f32 %v2497, %v2498
        %v2500 = vrot.slane %v2499, 1
        %v2501 = vmax.f32 %v2499, %v2500
        %v2502 = vmax.f32 %v1673, %v1677
        %v2503 = vrot.slane %v2502, 4
        %v2504 = vmax.f32 %v2502, %v2503
        %v2505 = vrot.slane %v2504, 2
        %v2506 = vmax.f32 %v2504, %v2505
        %v2507 = vrot.slane %v2506, 1
        %v2508 = vmax.f32 %v2506, %v2507
        %v2509 = vmax.f32 %v1714, %v1718
        %v2510 = vrot.slane %v2509, 4
        %v2511 = vmax.f32 %v2509, %v2510
        %v2512 = vrot.slane %v2511, 2
        %v2513 = vmax.f32 %v2511, %v2512
        %v2514 = vrot.slane %v2513, 1
        %v2515 = vmax.f32 %v2513, %v2514
        %v2516 = vmax.f32 %v1716, %v1720
        %v2517 = vrot.slane %v2516, 4
        %v2518 = vmax.f32 %v2516, %v2517
        %v2519 = vrot.slane %v2518, 2
        %v2520 = vmax.f32 %v2518, %v2519
        %v2521 = vrot.slane %v2520, 1
        %v2522 = vmax.f32 %v2520, %v2521
        %v2523 = vmax.f32 %v1757, %v1761
        %v2524 = vrot.slane %v2523, 4
        %v2525 = vmax.f32 %v2523, %v2524
        %v2526 = vrot.slane %v2525, 2
        %v2527 = vmax.f32 %v2525, %v2526
        %v2528 = vrot.slane %v2527, 1
        %v2529 = vmax.f32 %v2527, %v2528
        %v2530 = vmax.f32 %v1759, %v1763
        %v2531 = vrot.slane %v2530, 4
        %v2532 = vmax.f32 %v2530, %v2531
        %v2533 = vrot.slane %v2532, 2
        %v2534 = vmax.f32 %v2532, %v2533
        %v2535 = vrot.slane %v2534, 1
        %v2536 = vmax.f32 %v2534, %v2535
        %v2545 = vcombine.low %v2487, %v2494
        %v2546 = vcombine.low %v2501, %v2508
        %v2547 = vcombine.low %v2515, %v2522
        %v2548 = vcombine.low %v2529, %v2536
        %v2550 = vunpack.c.l.s4 1966171168
        %v2551 = vunpack.c.0.s8 %v2550
        %v2552 = vlaneseq
        %v2553 = vshrl.u32 %v2552, 7
        %v2554 = vsub.s32 %v2551, %v2553
        %v2555 = vrot.slane %v2545, %v2554
        %v2557 = vunpack.c.l.s4 1966171168
        %v2558 = vunpack.c.0.s8 %v2557
        %v2559 = vlaneseq
        %v2560 = vshrl.u32 %v2559, 7
        %v2561 = vsub.s32 %v2558, %v2560
        %v2562 = vrot.slane %v2546, %v2561
        %v2564 = vunpack.c.l.s4 1966171168
        %v2565 = vunpack.c.0.s8 %v2564
        %v2566 = vlaneseq
        %v2567 = vshrl.u32 %v2566, 7
        %v2568 = vsub.s32 %v2565, %v2567
        %v2569 = vrot.slane %v2547, %v2568
        %v2571 = vunpack.c.l.s4 1966171168
        %v2572 = vunpack.c.0.s8 %v2571
        %v2573 = vlaneseq
        %v2574 = vshrl.u32 %v2573, 7
        %v2575 = vsub.s32 %v2572, %v2574
        %v2576 = vrot.slane %v2548, %v2575
        %v2577 = vcombine.low %v2555, %v2562
        %v2578 = vcombine.low %v2569, %v2576
        %v2580 = vunpack.c.l.s4 1966171168
        %v2581 = vunpack.c.0.s8 %v2580
        %v2582 = vlaneseq
        %v2583 = vshrl.u32 %v2582, 7
        %v2584 = vsub.s32 %v2581, %v2583
        %v2585 = vrot.slane %v2577, %v2584
        %v2587 = vunpack.c.l.s4 1966171168
        %v2588 = vunpack.c.0.s8 %v2587
        %v2589 = vlaneseq
        %v2590 = vshrl.u32 %v2589, 7
        %v2591 = vsub.s32 %v2588, %v2590
        %v2592 = vrot.slane %v2578, %v2591
        %v2593 = vcombine.low %v2585, %v2592
        %v2595 = vmax.f32 %v2480, %v2593
        %2596 = vst [vmem:[#allocation8] sm:$0xff] %v2595
        %v2597 = vld [vmem:[#allocation9] sm:$0xff]
        %v2598 = vmin.f32 %v1628, %v1632
        %v2599 = vrot.slane %v2598, 4
        %v2600 = vmin.f32 %v2598, %v2599
        %v2601 = vrot.slane %v2600, 2
        %v2602 = vmin.f32 %v2600, %v2601
        %v2603 = vrot.slane %v2602, 1
        %v2604 = vmin.f32 %v2602, %v2603
        %v2605 = vmin.f32 %v1630, %v1634
        %v2606 = vrot.slane %v2605, 4
        %v2607 = vmin.f32 %v2605, %v2606
        %v2608 = vrot.slane %v2607, 2
        %v2609 = vmin.f32 %v2607, %v2608
        %v2610 = vrot.slane %v2609, 1
        %v2611 = vmin.f32 %v2609, %v2610
        %v2612 = vmin.f32 %v1671, %v1675
        %v2613 = vrot.slane %v2612, 4
        %v2614 = vmin.f32 %v2612, %v2613
        %v2615 = vrot.slane %v2614, 2
        %v2616 = vmin.f32 %v2614, %v2615
        %v2617 = vrot.slane %v2616, 1
        %v2618 = vmin.f32 %v2616, %v2617
        %v2619 = vmin.f32 %v1673, %v1677
        %v2620 = vrot.slane %v2619, 4
        %v2621 = vmin.f32 %v2619, %v2620
        %v2622 = vrot.slane %v2621, 2
        %v2623 = vmin.f32 %v2621, %v2622
        %v2624 = vrot.slane %v2623, 1
        %v2625 = vmin.f32 %v2623, %v2624
        %v2626 = vmin.f32 %v1714, %v1718
        %v2627 = vrot.slane %v2626, 4
        %v2628 = vmin.f32 %v2626, %v2627
        %v2629 = vrot.slane %v2628, 2
        %v2630 = vmin.f32 %v2628, %v2629
        %v2631 = vrot.slane %v2630, 1
        %v2632 = vmin.f32 %v2630, %v2631
        %v2633 = vmin.f32 %v1716, %v1720
        %v2634 = vrot.slane %v2633, 4
        %v2635 = vmin.f32 %v2633, %v2634
        %v2636 = vrot.slane %v2635, 2
        %v2637 = vmin.f32 %v2635, %v2636
        %v2638 = vrot.slane %v2637, 1
        %v2639 = vmin.f32 %v2637, %v2638
        %v2640 = vmin.f32 %v1757, %v1761
        %v2641 = vrot.slane %v2640, 4
        %v2642 = vmin.f32 %v2640, %v2641
        %v2643 = vrot.slane %v2642, 2
        %v2644 = vmin.f32 %v2642, %v2643
        %v2645 = vrot.slane %v2644, 1
        %v2646 = vmin.f32 %v2644, %v2645
        %v2647 = vmin.f32 %v1759, %v1763
        %v2648 = vrot.slane %v2647, 4
        %v2649 = vmin.f32 %v2647, %v2648
        %v2650 = vrot.slane %v2649, 2
        %v2651 = vmin.f32 %v2649, %v2650
        %v2652 = vrot.slane %v2651, 1
        %v2653 = vmin.f32 %v2651, %v2652
        %v2662 = vcombine.low %v2604, %v2611
        %v2663 = vcombine.low %v2618, %v2625
        %v2664 = vcombine.low %v2632, %v2639
        %v2665 = vcombine.low %v2646, %v2653
        %v2667 = vunpack.c.l.s4 1966171168
        %v2668 = vunpack.c.0.s8 %v2667
        %v2669 = vlaneseq
        %v2670 = vshrl.u32 %v2669, 7
        %v2671 = vsub.s32 %v2668, %v2670
        %v2672 = vrot.slane %v2662, %v2671
        %v2674 = vunpack.c.l.s4 1966171168
        %v2675 = vunpack.c.0.s8 %v2674
        %v2676 = vlaneseq
        %v2677 = vshrl.u32 %v2676, 7
        %v2678 = vsub.s32 %v2675, %v2677
        %v2679 = vrot.slane %v2663, %v2678
        %v2681 = vunpack.c.l.s4 1966171168
        %v2682 = vunpack.c.0.s8 %v2681
        %v2683 = vlaneseq
        %v2684 = vshrl.u32 %v2683, 7
        %v2685 = vsub.s32 %v2682, %v2684
        %v2686 = vrot.slane %v2664, %v2685
        %v2688 = vunpack.c.l.s4 1966171168
        %v2689 = vunpack.c.0.s8 %v2688
        %v2690 = vlaneseq
        %v2691 = vshrl.u32 %v2690, 7
        %v2692 = vsub.s32 %v2689, %v2691
        %v2693 = vrot.slane %v2665, %v2692
        %v2694 = vcombine.low %v2672, %v2679
        %v2695 = vcombine.low %v2686, %v2693
        %v2697 = vunpack.c.l.s4 1966171168
        %v2698 = vunpack.c.0.s8 %v2697
        %v2699 = vlaneseq
        %v2700 = vshrl.u32 %v2699, 7
        %v2701 = vsub.s32 %v2698, %v2700
        %v2702 = vrot.slane %v2694, %v2701
        %v2704 = vunpack.c.l.s4 1966171168
        %v2705 = vunpack.c.0.s8 %v2704
        %v2706 = vlaneseq
        %v2707 = vshrl.u32 %v2706, 7
        %v2708 = vsub.s32 %v2705, %v2707
        %v2709 = vrot.slane %v2695, %v2708
        %v2710 = vcombine.low %v2702, %v2709
        %v2712 = vmin.f32 %v2597, %v2710
        %2713 = vst [vmem:[#allocation9] sm:$0xff] %v2712
        // Predicated region
        $region129: #{tnet_forward.1} parent=123 // pred_check
          %p2714 = pneg %p728
        $region130: #{tnet_forward.1} parent=123 // pred_check_branch
          %2716 = sbr.rel (%p2714) target = $region132
        $region131: #{tnet_forward.1} parent=123 // pred_region
          %v2717 = vld [vmem:[#allocation8] sm:$0xff]
          %s2718 = sshra.s32 %s40, 1
          %s2719 = sand.u32 %s40, 1
          %s2720 = sshra.s32 %s40, 1
          %s2721 = sand.u32 %s40, 1
          %s2722 = smul.u32 %s2718, 8
          %s2723 = smul.u32 %s2722, 2
          %s2724 = sadd.s32 %s2723, %s2721
          %s2725 = scalar_lea.vmem [#allocation6], %s2724
          %2726 = vst [vmem:[%s2725] ss:$2 sm:$0xff] %v2717
          %v2727 = vld [vmem:[#allocation9] sm:$0xff]
          %s2728 = scalar_lea.vmem [#allocation7], %s2724
          %2729 = vst [vmem:[%s2728] ss:$2 sm:$0xff] %v2727
        $region132: #{tnet_forward.1} parent=123 // pred_fallthru
          _
        %p2730 = scmp.eq.s32.totalorder %s40, 1
        %p2731 = pnand %p2730, %p728
        %p2732 = pneg %p2731
        // Predicated region
        $region133: #{tnet_forward.1} parent=123 // pred_check
          _
        $region134: #{tnet_forward.1} parent=123 // pred_check_branch
          %2734 = sbr.rel (%p2731) target = $region136
        $region135: #{tnet_forward.1} parent=123 // pred_region
          %v2735 = vld [vmem:[#allocation4] sm:$0xff]
          %v2736 = vmul.f32 %v2735, 0.03125
          %v2737 = vld [vmem:[#allocation5] sm:$0xff]
          %v2738 = vmul.f32 %v2737, 0.03125
          %v2739 = vmul.f32 %v2736, %v2736
          %v2740 = vsub.f32 %v2738, %v2739
          %v2741 = vmax.f32 %v2740, 0.0
          %v2742 = vadd.f32 %v2741, 1e-05
          %v2743 = vrsqrt.pop %v2742
          %v2744 = vld [vmem:[%s10] sm:$0xff]
          %v2745 = vmul.f32 %v2744, %v2743
          %v2746 = vld [vmem:[%s11] sm:$0xff]
          %v2747 = vmul.f32 %v2736, %v2745
          %v2748 = vsub.f32 %v2746, %v2747
          %vm2749 = vcmp.ge.f32.partialorder %v2745, 0.0
          %v2750 = vld [vmem:[#allocation6] sm:$0xff]
          %v2751 = vld [vmem:[#allocation6 + $0x8] sm:$0xff]
          %v2752 = vld [vmem:[#allocation7] sm:$0xff]
          %v2753 = vld [vmem:[#allocation7 + $0x8] sm:$0xff]
          %v2754 = vsel %vm2749, 1, 0
          %v2755 = vlaneseq
          %v2756 = vshrl.u32 %v2755, 7
          %v2757 = vsub.s32 0, %v2756
          %v2758 = vrot.slane %v2754, %v2757
          %v2759 = vlaneseq
          %v2760 = vshrl.u32 %v2759, 7
          %v2761 = vsub.s32 1, %v2760
          %v2762 = vrot.slane %v2754, %v2761
          %v2763 = vlaneseq
          %v2764 = vshrl.u32 %v2763, 7
          %v2765 = vsub.s32 2, %v2764
          %v2766 = vrot.slane %v2754, %v2765
          %v2767 = vlaneseq
          %v2768 = vshrl.u32 %v2767, 7
          %v2769 = vsub.s32 3, %v2768
          %v2770 = vrot.slane %v2754, %v2769
          %v2771 = vlaneseq
          %v2772 = vshrl.u32 %v2771, 7
          %v2773 = vsub.s32 4, %v2772
          %v2774 = vrot.slane %v2754, %v2773
          %v2775 = vlaneseq
          %v2776 = vshrl.u32 %v2775, 7
          %v2777 = vsub.s32 5, %v2776
          %v2778 = vrot.slane %v2754, %v2777
          %v2779 = vlaneseq
          %v2780 = vshrl.u32 %v2779, 7
          %v2781 = vsub.s32 6, %v2780
          %v2782 = vrot.slane %v2754, %v2781
          %v2783 = vlaneseq
          %v2784 = vshrl.u32 %v2783, 7
          %v2785 = vsub.s32 7, %v2784
          %v2786 = vrot.slane %v2754, %v2785
          %vm2787 = vcmp.eq.s32.totalorder %v2758, 1
          %vm2788 = vcmp.eq.s32.totalorder %v2762, 1
          %vm2789 = vcmp.eq.s32.totalorder %v2766, 1
          %vm2790 = vcmp.eq.s32.totalorder %v2770, 1
          %vm2791 = vcmp.eq.s32.totalorder %v2774, 1
          %vm2792 = vcmp.eq.s32.totalorder %v2778, 1
          %vm2793 = vcmp.eq.s32.totalorder %v2782, 1
          %vm2794 = vcmp.eq.s32.totalorder %v2786, 1
          %v2797 = vcombine.high %v2750, %v2750
          %v2799 = vunpack.c.l.s4 1983009808
          %v2800 = vunpack.c.0.s8 %v2799
          %v2801 = vlaneseq
          %v2802 = vshrl.u32 %v2801, 7
          %v2803 = vsub.s32 %v2800, %v2802
          %v2804 = vrot.slane %v2750, %v2803
          %v2806 = vunpack.c.l.s4 1983009808
          %v2807 = vunpack.c.0.s8 %v2806
          %v2808 = vlaneseq
          %v2809 = vshrl.u32 %v2808, 7
          %v2810 = vsub.s32 %v2807, %v2809
          %v2811 = vrot.slane %v2797, %v2810
          %v2812 = vcombine.high %v2804, %v2804
          %v2813 = vcombine.high %v2811, %v2811
          %v2814 = vcombine.high %v2751, %v2751
          %v2816 = vunpack.c.l.s4 1983009808
          %v2817 = vunpack.c.0.s8 %v2816
          %v2818 = vlaneseq
          %v2819 = vshrl.u32 %v2818, 7
          %v2820 = vsub.s32 %v2817, %v2819
          %v2821 = vrot.slane %v2751, %v2820
          %v2823 = vunpack.c.l.s4 1983009808
          %v2824 = vunpack.c.0.s8 %v2823
          %v2825 = vlaneseq
          %v2826 = vshrl.u32 %v2825, 7
          %v2827 = vsub.s32 %v2824, %v2826
          %v2828 = vrot.slane %v2814, %v2827
          %v2829 = vcombine.high %v2821, %v2821
          %v2830 = vcombine.high %v2828, %v2828
          %v2841 = vcombine.high %v2752, %v2752
          %v2843 = vunpack.c.l.s4 1983009808
          %v2844 = vunpack.c.0.s8 %v2843
          %v2845 = vlaneseq
          %v2846 = vshrl.u32 %v2845, 7
          %v2847 = vsub.s32 %v2844, %v2846
          %v2848 = vrot.slane %v2752, %v2847
          %v2850 = vunpack.c.l.s4 1983009808
          %v2851 = vunpack.c.0.s8 %v2850
          %v2852 = vlaneseq
          %v2853 = vshrl.u32 %v2852, 7
          %v2854 = vsub.s32 %v2851, %v2853
          %v2855 = vrot.slane %v2841, %v2854
          %v2856 = vcombine.high %v2848, %v2848
          %v2857 = vcombine.high %v2855, %v2855
          %v2858 = vcombine.high %v2753, %v2753
          %v2860 = vunpack.c.l.s4 1983009808
          %v2861 = vunpack.c.0.s8 %v2860
          %v2862 = vlaneseq
          %v2863 = vshrl.u32 %v2862, 7
          %v2864 = vsub.s32 %v2861, %v2863
          %v2865 = vrot.slane %v2753, %v2864
          %v2867 = vunpack.c.l.s4 1983009808
          %v2868 = vunpack.c.0.s8 %v2867
          %v2869 = vlaneseq
          %v2870 = vshrl.u32 %v2869, 7
          %v2871 = vsub.s32 %v2868, %v2870
          %v2872 = vrot.slane %v2858, %v2871
          %v2873 = vcombine.high %v2865, %v2865
          %v2874 = vcombine.high %v2872, %v2872
          %v2883 = vsel %vm2787, %v2804, %v2848
          %v2884 = vsel %vm2788, %v2812, %v2856
          %v2885 = vsel %vm2789, %v2811, %v2855
          %v2886 = vsel %vm2790, %v2813, %v2857
          %v2887 = vsel %vm2791, %v2821, %v2865
          %v2888 = vsel %vm2792, %v2829, %v2873
          %v2889 = vsel %vm2793, %v2828, %v2872
          %v2890 = vsel %vm2794, %v2830, %v2874
          %v2892 = vlaneseq
          %v2893 = vshrl.u32 %v2892, 7
          %v2894 = vsub.s32 0, %v2893
          %v2895 = vrot.slane %v2745, %v2894
          %v2896 = vlaneseq
          %v2897 = vshrl.u32 %v2896, 7
          %v2898 = vsub.s32 1, %v2897
          %v2899 = vrot.slane %v2745, %v2898
          %v2900 = vlaneseq
          %v2901 = vshrl.u32 %v2900, 7
          %v2902 = vsub.s32 2, %v2901
          %v2903 = vrot.slane %v2745, %v2902
          %v2904 = vlaneseq
          %v2905 = vshrl.u32 %v2904, 7
          %v2906 = vsub.s32 3, %v2905
          %v2907 = vrot.slane %v2745, %v2906
          %v2908 = vlaneseq
          %v2909 = vshrl.u32 %v2908, 7
          %v2910 = vsub.s32 4, %v2909
          %v2911 = vrot.slane %v2745, %v2910
          %v2912 = vlaneseq
          %v2913 = vshrl.u32 %v2912, 7
          %v2914 = vsub.s32 5, %v2913
          %v2915 = vrot.slane %v2745, %v2914
          %v2916 = vlaneseq
          %v2917 = vshrl.u32 %v2916, 7
          %v2918 = vsub.s32 6, %v2917
          %v2919 = vrot.slane %v2745, %v2918
          %v2920 = vlaneseq
          %v2921 = vshrl.u32 %v2920, 7
          %v2922 = vsub.s32 7, %v2921
          %v2923 = vrot.slane %v2745, %v2922
          %v2932 = vmul.f32 %v2883, %v2895
          %v2933 = vmul.f32 %v2884, %v2899
          %v2934 = vmul.f32 %v2885, %v2903
          %v2935 = vmul.f32 %v2886, %v2907
          %v2936 = vmul.f32 %v2887, %v2911
          %v2937 = vmul.f32 %v2888, %v2915
          %v2938 = vmul.f32 %v2889, %v2919
          %v2939 = vmul.f32 %v2890, %v2923
          %v2941 = vlaneseq
          %v2942 = vshrl.u32 %v2941, 7
          %v2943 = vsub.s32 0, %v2942
          %v2944 = vrot.slane %v2748, %v2943
          %v2945 = vlaneseq
          %v2946 = vshrl.u32 %v2945, 7
          %v2947 = vsub.s32 1, %v2946
          %v2948 = vrot.slane %v2748, %v2947
          %v2949 = vlaneseq
          %v2950 = vshrl.u32 %v2949, 7
          %v2951 = vsub.s32 2, %v2950
          %v2952 = vrot.slane %v2748, %v2951
          %v2953 = vlaneseq
          %v2954 = vshrl.u32 %v2953, 7
          %v2955 = vsub.s32 3, %v2954
          %v2956 = vrot.slane %v2748, %v2955
          %v2957 = vlaneseq
          %v2958 = vshrl.u32 %v2957, 7
          %v2959 = vsub.s32 4, %v2958
          %v2960 = vrot.slane %v2748, %v2959
          %v2961 = vlaneseq
          %v2962 = vshrl.u32 %v2961, 7
          %v2963 = vsub.s32 5, %v2962
          %v2964 = vrot.slane %v2748, %v2963
          %v2965 = vlaneseq
          %v2966 = vshrl.u32 %v2965, 7
          %v2967 = vsub.s32 6, %v2966
          %v2968 = vrot.slane %v2748, %v2967
          %v2969 = vlaneseq
          %v2970 = vshrl.u32 %v2969, 7
          %v2971 = vsub.s32 7, %v2970
          %v2972 = vrot.slane %v2748, %v2971
          %v2981 = vadd.f32 %v2932, %v2944
          %v2982 = vadd.f32 %v2933, %v2948
          %v2983 = vadd.f32 %v2934, %v2952
          %v2984 = vadd.f32 %v2935, %v2956
          %v2985 = vadd.f32 %v2936, %v2960
          %v2986 = vadd.f32 %v2937, %v2964
          %v2987 = vadd.f32 %v2938, %v2968
          %v2988 = vadd.f32 %v2939, %v2972
          %v2989 = vmax.f32 %v2981, 0.0
          %v2990 = vmax.f32 %v2982, 0.0
          %v2991 = vmax.f32 %v2983, 0.0
          %v2992 = vmax.f32 %v2984, 0.0
          %v2993 = vmax.f32 %v2985, 0.0
          %v2994 = vmax.f32 %v2986, 0.0
          %v2995 = vmax.f32 %v2987, 0.0
          %v2996 = vmax.f32 %v2988, 0.0
          %v2997 = vpack.c.bf16 %v2989, %v2989
          %v2998 = vpack.c.bf16 %v2990, %v2990
          %v2999 = vpack.c.bf16 %v2991, %v2991
          %v3000 = vpack.c.bf16 %v2992, %v2992
          %v3001 = vpack.c.bf16 %v2993, %v2993
          %v3002 = vpack.c.bf16 %v2994, %v2994
          %v3003 = vpack.c.bf16 %v2995, %v2995
          %v3004 = vpack.c.bf16 %v2996, %v2996
          %v3005 = vld [vmem:[%s12] sm:$0xff]
          %v3006 = vld [vmem:[%s12 + $0x8] sm:$0xff]
          %v3007 = vld [vmem:[%s12 + $0x10] sm:$0xff]
          %v3008 = vld [vmem:[%s12 + $0x18] sm:$0xff]
          %v3009 = vld [vmem:[%s12 + $0x20] sm:$0xff]
          %v3010 = vld [vmem:[%s12 + $0x28] sm:$0xff]
          %v3011 = vld [vmem:[%s12 + $0x30] sm:$0xff]
          %v3012 = vld [vmem:[%s12 + $0x38] sm:$0xff]
          %v3013 = vld [vmem:[%s12 + $0x40] sm:$0xff]
          %v3014 = vld [vmem:[%s12 + $0x48] sm:$0xff]
          %v3015 = vld [vmem:[%s12 + $0x50] sm:$0xff]
          %v3016 = vld [vmem:[%s12 + $0x58] sm:$0xff]
          %v3017 = vld [vmem:[%s12 + $0x60] sm:$0xff]
          %v3018 = vld [vmem:[%s12 + $0x68] sm:$0xff]
          %v3019 = vld [vmem:[%s12 + $0x70] sm:$0xff]
          %v3020 = vld [vmem:[%s12 + $0x78] sm:$0xff]
          %v3021 = vld [vmem:[%s12 + $0x80] sm:$0xff]
          %v3022 = vld [vmem:[%s12 + $0x88] sm:$0xff]
          %v3023 = vld [vmem:[%s12 + $0x90] sm:$0xff]
          %v3024 = vld [vmem:[%s12 + $0x98] sm:$0xff]
          %v3025 = vld [vmem:[%s12 + $0xa0] sm:$0xff]
          %v3026 = vld [vmem:[%s12 + $0xa8] sm:$0xff]
          %v3027 = vld [vmem:[%s12 + $0xb0] sm:$0xff]
          %v3028 = vld [vmem:[%s12 + $0xb8] sm:$0xff]
          %v3029 = vld [vmem:[%s12 + $0xc0] sm:$0xff]
          %v3030 = vld [vmem:[%s12 + $0xc8] sm:$0xff]
          %v3031 = vld [vmem:[%s12 + $0xd0] sm:$0xff]
          %v3032 = vld [vmem:[%s12 + $0xd8] sm:$0xff]
          %v3033 = vld [vmem:[%s12 + $0xe0] sm:$0xff]
          %v3034 = vld [vmem:[%s12 + $0xe8] sm:$0xff]
          %v3035 = vld [vmem:[%s12 + $0xf0] sm:$0xff]
          %v3036 = vld [vmem:[%s12 + $0xf8] sm:$0xff]
          %v3037 = vld [vmem:[%s12 + $0x100] sm:$0xff]
          %v3038 = vld [vmem:[%s12 + $0x108] sm:$0xff]
          %v3039 = vld [vmem:[%s12 + $0x110] sm:$0xff]
          %v3040 = vld [vmem:[%s12 + $0x118] sm:$0xff]
          %v3041 = vld [vmem:[%s12 + $0x120] sm:$0xff]
          %v3042 = vld [vmem:[%s12 + $0x128] sm:$0xff]
          %v3043 = vld [vmem:[%s12 + $0x130] sm:$0xff]
          %v3044 = vld [vmem:[%s12 + $0x138] sm:$0xff]
          %v3045 = vld [vmem:[%s12 + $0x140] sm:$0xff]
          %v3046 = vld [vmem:[%s12 + $0x148] sm:$0xff]
          %v3047 = vld [vmem:[%s12 + $0x150] sm:$0xff]
          %v3048 = vld [vmem:[%s12 + $0x158] sm:$0xff]
          %v3049 = vld [vmem:[%s12 + $0x160] sm:$0xff]
          %v3050 = vld [vmem:[%s12 + $0x168] sm:$0xff]
          %v3051 = vld [vmem:[%s12 + $0x170] sm:$0xff]
          %v3052 = vld [vmem:[%s12 + $0x178] sm:$0xff]
          %v3053 = vld [vmem:[%s12 + $0x180] sm:$0xff]
          %v3054 = vld [vmem:[%s12 + $0x188] sm:$0xff]
          %v3055 = vld [vmem:[%s12 + $0x190] sm:$0xff]
          %v3056 = vld [vmem:[%s12 + $0x198] sm:$0xff]
          %v3057 = vld [vmem:[%s12 + $0x1a0] sm:$0xff]
          %v3058 = vld [vmem:[%s12 + $0x1a8] sm:$0xff]
          %v3059 = vld [vmem:[%s12 + $0x1b0] sm:$0xff]
          %v3060 = vld [vmem:[%s12 + $0x1b8] sm:$0xff]
          %v3061 = vld [vmem:[%s12 + $0x1c0] sm:$0xff]
          %v3062 = vld [vmem:[%s12 + $0x1c8] sm:$0xff]
          %v3063 = vld [vmem:[%s12 + $0x1d0] sm:$0xff]
          %v3064 = vld [vmem:[%s12 + $0x1d8] sm:$0xff]
          %v3065 = vld [vmem:[%s12 + $0x1e0] sm:$0xff]
          %v3066 = vld [vmem:[%s12 + $0x1e8] sm:$0xff]
          %v3067 = vld [vmem:[%s12 + $0x1f0] sm:$0xff]
          %v3068 = vld [vmem:[%s12 + $0x1f8] sm:$0xff]
          %v3069 = vld [vmem:[%s12 + $0x200] sm:$0xff]
          %v3070 = vld [vmem:[%s12 + $0x208] sm:$0xff]
          %v3071 = vld [vmem:[%s12 + $0x210] sm:$0xff]
          %v3072 = vld [vmem:[%s12 + $0x218] sm:$0xff]
          %v3073 = vld [vmem:[%s12 + $0x220] sm:$0xff]
          %v3074 = vld [vmem:[%s12 + $0x228] sm:$0xff]
          %v3075 = vld [vmem:[%s12 + $0x230] sm:$0xff]
          %v3076 = vld [vmem:[%s12 + $0x238] sm:$0xff]
          %v3077 = vld [vmem:[%s12 + $0x240] sm:$0xff]
          %v3078 = vld [vmem:[%s12 + $0x248] sm:$0xff]
          %v3079 = vld [vmem:[%s12 + $0x250] sm:$0xff]
          %v3080 = vld [vmem:[%s12 + $0x258] sm:$0xff]
          %v3081 = vld [vmem:[%s12 + $0x260] sm:$0xff]
          %v3082 = vld [vmem:[%s12 + $0x268] sm:$0xff]
          %v3083 = vld [vmem:[%s12 + $0x270] sm:$0xff]
          %v3084 = vld [vmem:[%s12 + $0x278] sm:$0xff]
          %v3085 = vld [vmem:[%s12 + $0x280] sm:$0xff]
          %v3086 = vld [vmem:[%s12 + $0x288] sm:$0xff]
          %v3087 = vld [vmem:[%s12 + $0x290] sm:$0xff]
          %v3088 = vld [vmem:[%s12 + $0x298] sm:$0xff]
          %v3089 = vld [vmem:[%s12 + $0x2a0] sm:$0xff]
          %v3090 = vld [vmem:[%s12 + $0x2a8] sm:$0xff]
          %v3091 = vld [vmem:[%s12 + $0x2b0] sm:$0xff]
          %v3092 = vld [vmem:[%s12 + $0x2b8] sm:$0xff]
          %v3093 = vld [vmem:[%s12 + $0x2c0] sm:$0xff]
          %v3094 = vld [vmem:[%s12 + $0x2c8] sm:$0xff]
          %v3095 = vld [vmem:[%s12 + $0x2d0] sm:$0xff]
          %v3096 = vld [vmem:[%s12 + $0x2d8] sm:$0xff]
          %v3097 = vld [vmem:[%s12 + $0x2e0] sm:$0xff]
          %v3098 = vld [vmem:[%s12 + $0x2e8] sm:$0xff]
          %v3099 = vld [vmem:[%s12 + $0x2f0] sm:$0xff]
          %v3100 = vld [vmem:[%s12 + $0x2f8] sm:$0xff]
          %v3101 = vld [vmem:[%s12 + $0x300] sm:$0xff]
          %v3102 = vld [vmem:[%s12 + $0x308] sm:$0xff]
          %v3103 = vld [vmem:[%s12 + $0x310] sm:$0xff]
          %v3104 = vld [vmem:[%s12 + $0x318] sm:$0xff]
          %v3105 = vld [vmem:[%s12 + $0x320] sm:$0xff]
          %v3106 = vld [vmem:[%s12 + $0x328] sm:$0xff]
          %v3107 = vld [vmem:[%s12 + $0x330] sm:$0xff]
          %v3108 = vld [vmem:[%s12 + $0x338] sm:$0xff]
          %v3109 = vld [vmem:[%s12 + $0x340] sm:$0xff]
          %v3110 = vld [vmem:[%s12 + $0x348] sm:$0xff]
          %v3111 = vld [vmem:[%s12 + $0x350] sm:$0xff]
          %v3112 = vld [vmem:[%s12 + $0x358] sm:$0xff]
          %v3113 = vld [vmem:[%s12 + $0x360] sm:$0xff]
          %v3114 = vld [vmem:[%s12 + $0x368] sm:$0xff]
          %v3115 = vld [vmem:[%s12 + $0x370] sm:$0xff]
          %v3116 = vld [vmem:[%s12 + $0x378] sm:$0xff]
          %v3117 = vld [vmem:[%s12 + $0x380] sm:$0xff]
          %v3118 = vld [vmem:[%s12 + $0x388] sm:$0xff]
          %v3119 = vld [vmem:[%s12 + $0x390] sm:$0xff]
          %v3120 = vld [vmem:[%s12 + $0x398] sm:$0xff]
          %v3121 = vld [vmem:[%s12 + $0x3a0] sm:$0xff]
          %v3122 = vld [vmem:[%s12 + $0x3a8] sm:$0xff]
          %v3123 = vld [vmem:[%s12 + $0x3b0] sm:$0xff]
          %v3124 = vld [vmem:[%s12 + $0x3b8] sm:$0xff]
          %v3125 = vld [vmem:[%s12 + $0x3c0] sm:$0xff]
          %v3126 = vld [vmem:[%s12 + $0x3c8] sm:$0xff]
          %v3127 = vld [vmem:[%s12 + $0x3d0] sm:$0xff]
          %v3128 = vld [vmem:[%s12 + $0x3d8] sm:$0xff]
          %v3129 = vld [vmem:[%s12 + $0x3e0] sm:$0xff]
          %v3130 = vld [vmem:[%s12 + $0x3e8] sm:$0xff]
          %v3131 = vld [vmem:[%s12 + $0x3f0] sm:$0xff]
          %v3132 = vld [vmem:[%s12 + $0x3f8] sm:$0xff]
          %v3133 = vld [vmem:[%s12 + $0x400] sm:$0xff]
          %v3134 = vld [vmem:[%s12 + $0x408] sm:$0xff]
          %v3135 = vld [vmem:[%s12 + $0x410] sm:$0xff]
          %v3136 = vld [vmem:[%s12 + $0x418] sm:$0xff]
          %v3137 = vld [vmem:[%s12 + $0x420] sm:$0xff]
          %v3138 = vld [vmem:[%s12 + $0x428] sm:$0xff]
          %v3139 = vld [vmem:[%s12 + $0x430] sm:$0xff]
          %v3140 = vld [vmem:[%s12 + $0x438] sm:$0xff]
          %v3141 = vld [vmem:[%s12 + $0x440] sm:$0xff]
          %v3142 = vld [vmem:[%s12 + $0x448] sm:$0xff]
          %v3143 = vld [vmem:[%s12 + $0x450] sm:$0xff]
          %v3144 = vld [vmem:[%s12 + $0x458] sm:$0xff]
          %v3145 = vld [vmem:[%s12 + $0x460] sm:$0xff]
          %v3146 = vld [vmem:[%s12 + $0x468] sm:$0xff]
          %v3147 = vld [vmem:[%s12 + $0x470] sm:$0xff]
          %v3148 = vld [vmem:[%s12 + $0x478] sm:$0xff]
          %v3149 = vld [vmem:[%s12 + $0x480] sm:$0xff]
          %v3150 = vld [vmem:[%s12 + $0x488] sm:$0xff]
          %v3151 = vld [vmem:[%s12 + $0x490] sm:$0xff]
          %v3152 = vld [vmem:[%s12 + $0x498] sm:$0xff]
          %v3153 = vld [vmem:[%s12 + $0x4a0] sm:$0xff]
          %v3154 = vld [vmem:[%s12 + $0x4a8] sm:$0xff]
          %v3155 = vld [vmem:[%s12 + $0x4b0] sm:$0xff]
          %v3156 = vld [vmem:[%s12 + $0x4b8] sm:$0xff]
          %v3157 = vld [vmem:[%s12 + $0x4c0] sm:$0xff]
          %v3158 = vld [vmem:[%s12 + $0x4c8] sm:$0xff]
          %v3159 = vld [vmem:[%s12 + $0x4d0] sm:$0xff]
          %v3160 = vld [vmem:[%s12 + $0x4d8] sm:$0xff]
          %v3161 = vld [vmem:[%s12 + $0x4e0] sm:$0xff]
          %v3162 = vld [vmem:[%s12 + $0x4e8] sm:$0xff]
          %v3163 = vld [vmem:[%s12 + $0x4f0] sm:$0xff]
          %v3164 = vld [vmem:[%s12 + $0x4f8] sm:$0xff]
          %v3165 = vld [vmem:[%s12 + $0x500] sm:$0xff]
          %v3166 = vld [vmem:[%s12 + $0x508] sm:$0xff]
          %v3167 = vld [vmem:[%s12 + $0x510] sm:$0xff]
          %v3168 = vld [vmem:[%s12 + $0x518] sm:$0xff]
          %v3169 = vld [vmem:[%s12 + $0x520] sm:$0xff]
          %v3170 = vld [vmem:[%s12 + $0x528] sm:$0xff]
          %v3171 = vld [vmem:[%s12 + $0x530] sm:$0xff]
          %v3172 = vld [vmem:[%s12 + $0x538] sm:$0xff]
          %v3173 = vld [vmem:[%s12 + $0x540] sm:$0xff]
          %v3174 = vld [vmem:[%s12 + $0x548] sm:$0xff]
          %v3175 = vld [vmem:[%s12 + $0x550] sm:$0xff]
          %v3176 = vld [vmem:[%s12 + $0x558] sm:$0xff]
          %v3177 = vld [vmem:[%s12 + $0x560] sm:$0xff]
          %v3178 = vld [vmem:[%s12 + $0x568] sm:$0xff]
          %v3179 = vld [vmem:[%s12 + $0x570] sm:$0xff]
          %v3180 = vld [vmem:[%s12 + $0x578] sm:$0xff]
          %v3181 = vld [vmem:[%s12 + $0x580] sm:$0xff]
          %v3182 = vld [vmem:[%s12 + $0x588] sm:$0xff]
          %v3183 = vld [vmem:[%s12 + $0x590] sm:$0xff]
          %v3184 = vld [vmem:[%s12 + $0x598] sm:$0xff]
          %v3185 = vld [vmem:[%s12 + $0x5a0] sm:$0xff]
          %v3186 = vld [vmem:[%s12 + $0x5a8] sm:$0xff]
          %v3187 = vld [vmem:[%s12 + $0x5b0] sm:$0xff]
          %v3188 = vld [vmem:[%s12 + $0x5b8] sm:$0xff]
          %v3189 = vld [vmem:[%s12 + $0x5c0] sm:$0xff]
          %v3190 = vld [vmem:[%s12 + $0x5c8] sm:$0xff]
          %v3191 = vld [vmem:[%s12 + $0x5d0] sm:$0xff]
          %v3192 = vld [vmem:[%s12 + $0x5d8] sm:$0xff]
          %v3193 = vld [vmem:[%s12 + $0x5e0] sm:$0xff]
          %v3194 = vld [vmem:[%s12 + $0x5e8] sm:$0xff]
          %v3195 = vld [vmem:[%s12 + $0x5f0] sm:$0xff]
          %v3196 = vld [vmem:[%s12 + $0x5f8] sm:$0xff]
          %v3197 = vld [vmem:[%s12 + $0x600] sm:$0xff]
          %v3198 = vld [vmem:[%s12 + $0x608] sm:$0xff]
          %v3199 = vld [vmem:[%s12 + $0x610] sm:$0xff]
          %v3200 = vld [vmem:[%s12 + $0x618] sm:$0xff]
          %v3201 = vld [vmem:[%s12 + $0x620] sm:$0xff]
          %v3202 = vld [vmem:[%s12 + $0x628] sm:$0xff]
          %v3203 = vld [vmem:[%s12 + $0x630] sm:$0xff]
          %v3204 = vld [vmem:[%s12 + $0x638] sm:$0xff]
          %v3205 = vld [vmem:[%s12 + $0x640] sm:$0xff]
          %v3206 = vld [vmem:[%s12 + $0x648] sm:$0xff]
          %v3207 = vld [vmem:[%s12 + $0x650] sm:$0xff]
          %v3208 = vld [vmem:[%s12 + $0x658] sm:$0xff]
          %v3209 = vld [vmem:[%s12 + $0x660] sm:$0xff]
          %v3210 = vld [vmem:[%s12 + $0x668] sm:$0xff]
          %v3211 = vld [vmem:[%s12 + $0x670] sm:$0xff]
          %v3212 = vld [vmem:[%s12 + $0x678] sm:$0xff]
          %v3213 = vld [vmem:[%s12 + $0x680] sm:$0xff]
          %v3214 = vld [vmem:[%s12 + $0x688] sm:$0xff]
          %v3215 = vld [vmem:[%s12 + $0x690] sm:$0xff]
          %v3216 = vld [vmem:[%s12 + $0x698] sm:$0xff]
          %v3217 = vld [vmem:[%s12 + $0x6a0] sm:$0xff]
          %v3218 = vld [vmem:[%s12 + $0x6a8] sm:$0xff]
          %v3219 = vld [vmem:[%s12 + $0x6b0] sm:$0xff]
          %v3220 = vld [vmem:[%s12 + $0x6b8] sm:$0xff]
          %v3221 = vld [vmem:[%s12 + $0x6c0] sm:$0xff]
          %v3222 = vld [vmem:[%s12 + $0x6c8] sm:$0xff]
          %v3223 = vld [vmem:[%s12 + $0x6d0] sm:$0xff]
          %v3224 = vld [vmem:[%s12 + $0x6d8] sm:$0xff]
          %v3225 = vld [vmem:[%s12 + $0x6e0] sm:$0xff]
          %v3226 = vld [vmem:[%s12 + $0x6e8] sm:$0xff]
          %v3227 = vld [vmem:[%s12 + $0x6f0] sm:$0xff]
          %v3228 = vld [vmem:[%s12 + $0x6f8] sm:$0xff]
          %v3229 = vld [vmem:[%s12 + $0x700] sm:$0xff]
          %v3230 = vld [vmem:[%s12 + $0x708] sm:$0xff]
          %v3231 = vld [vmem:[%s12 + $0x710] sm:$0xff]
          %v3232 = vld [vmem:[%s12 + $0x718] sm:$0xff]
          %v3233 = vld [vmem:[%s12 + $0x720] sm:$0xff]
          %v3234 = vld [vmem:[%s12 + $0x728] sm:$0xff]
          %v3235 = vld [vmem:[%s12 + $0x730] sm:$0xff]
          %v3236 = vld [vmem:[%s12 + $0x738] sm:$0xff]
          %v3237 = vld [vmem:[%s12 + $0x740] sm:$0xff]
          %v3238 = vld [vmem:[%s12 + $0x748] sm:$0xff]
          %v3239 = vld [vmem:[%s12 + $0x750] sm:$0xff]
          %v3240 = vld [vmem:[%s12 + $0x758] sm:$0xff]
          %v3241 = vld [vmem:[%s12 + $0x760] sm:$0xff]
          %v3242 = vld [vmem:[%s12 + $0x768] sm:$0xff]
          %v3243 = vld [vmem:[%s12 + $0x770] sm:$0xff]
          %v3244 = vld [vmem:[%s12 + $0x778] sm:$0xff]
          %v3245 = vld [vmem:[%s12 + $0x780] sm:$0xff]
          %v3246 = vld [vmem:[%s12 + $0x788] sm:$0xff]
          %v3247 = vld [vmem:[%s12 + $0x790] sm:$0xff]
          %v3248 = vld [vmem:[%s12 + $0x798] sm:$0xff]
          %v3249 = vld [vmem:[%s12 + $0x7a0] sm:$0xff]
          %v3250 = vld [vmem:[%s12 + $0x7a8] sm:$0xff]
          %v3251 = vld [vmem:[%s12 + $0x7b0] sm:$0xff]
          %v3252 = vld [vmem:[%s12 + $0x7b8] sm:$0xff]
          %v3253 = vld [vmem:[%s12 + $0x7c0] sm:$0xff]
          %v3254 = vld [vmem:[%s12 + $0x7c8] sm:$0xff]
          %v3255 = vld [vmem:[%s12 + $0x7d0] sm:$0xff]
          %v3256 = vld [vmem:[%s12 + $0x7d8] sm:$0xff]
          %v3257 = vld [vmem:[%s12 + $0x7e0] sm:$0xff]
          %v3258 = vld [vmem:[%s12 + $0x7e8] sm:$0xff]
          %v3259 = vld [vmem:[%s12 + $0x7f0] sm:$0xff]
          %v3260 = vld [vmem:[%s12 + $0x7f8] sm:$0xff]
          %v3261 = vld [vmem:[%s13] sm:$0xf]
          %v3263 = vlaneseq
          %v3264 = vshrl.u32 %v3263, 7
          %v3265 = vsub.s32 0, %v3264
          %v3266 = vrot.slane %v3261, %v3265
          %v3267 = vlaneseq
          %v3268 = vshrl.u32 %v3267, 7
          %v3269 = vsub.s32 1, %v3268
          %v3270 = vrot.slane %v3261, %v3269
          %v3271 = vlaneseq
          %v3272 = vshrl.u32 %v3271, 7
          %v3273 = vsub.s32 2, %v3272
          %v3274 = vrot.slane %v3261, %v3273
          %v3275 = vlaneseq
          %v3276 = vshrl.u32 %v3275, 7
          %v3277 = vsub.s32 3, %v3276
          %v3278 = vrot.slane %v3261, %v3277
          %v3539 = vunpack.c.l.b16 %v3005
          %v3540 = vunpack.c.h.b16 %v3005
          %v3541 = vunpack.c.l.b16 %v3006
          %v3542 = vunpack.c.h.b16 %v3006
          %v3543 = vunpack.c.l.b16 %v3007
          %v3544 = vunpack.c.h.b16 %v3007
          %v3545 = vunpack.c.l.b16 %v3008
          %v3546 = vunpack.c.h.b16 %v3008
          %v3547 = vunpack.c.l.b16 %v3009
          %v3548 = vunpack.c.h.b16 %v3009
          %v3549 = vunpack.c.l.b16 %v3010
          %v3550 = vunpack.c.h.b16 %v3010
          %v3551 = vunpack.c.l.b16 %v3011
          %v3552 = vunpack.c.h.b16 %v3011
          %v3553 = vunpack.c.l.b16 %v3012
          %v3554 = vunpack.c.h.b16 %v3012
          %v3555 = vunpack.c.l.b16 %v3013
          %v3556 = vunpack.c.h.b16 %v3013
          %v3557 = vunpack.c.l.b16 %v3014
          %v3558 = vunpack.c.h.b16 %v3014
          %v3559 = vunpack.c.l.b16 %v3015
          %v3560 = vunpack.c.h.b16 %v3015
          %v3561 = vunpack.c.l.b16 %v3016
          %v3562 = vunpack.c.h.b16 %v3016
          %v3563 = vunpack.c.l.b16 %v3017
          %v3564 = vunpack.c.h.b16 %v3017
          %v3565 = vunpack.c.l.b16 %v3018
          %v3566 = vunpack.c.h.b16 %v3018
          %v3567 = vunpack.c.l.b16 %v3019
          %v3568 = vunpack.c.h.b16 %v3019
          %v3569 = vunpack.c.l.b16 %v3020
          %v3570 = vunpack.c.h.b16 %v3020
          %v3571 = vunpack.c.l.b16 %v3021
          %v3572 = vunpack.c.h.b16 %v3021
          %v3573 = vunpack.c.l.b16 %v3022
          %v3574 = vunpack.c.h.b16 %v3022
          %v3575 = vunpack.c.l.b16 %v3023
          %v3576 = vunpack.c.h.b16 %v3023
          %v3577 = vunpack.c.l.b16 %v3024
          %v3578 = vunpack.c.h.b16 %v3024
          %v3579 = vunpack.c.l.b16 %v3025
          %v3580 = vunpack.c.h.b16 %v3025
          %v3581 = vunpack.c.l.b16 %v3026
          %v3582 = vunpack.c.h.b16 %v3026
          %v3583 = vunpack.c.l.b16 %v3027
          %v3584 = vunpack.c.h.b16 %v3027
          %v3585 = vunpack.c.l.b16 %v3028
          %v3586 = vunpack.c.h.b16 %v3028
          %v3587 = vunpack.c.l.b16 %v3029
          %v3588 = vunpack.c.h.b16 %v3029
          %v3589 = vunpack.c.l.b16 %v3030
          %v3590 = vunpack.c.h.b16 %v3030
          %v3591 = vunpack.c.l.b16 %v3031
          %v3592 = vunpack.c.h.b16 %v3031
          %v3593 = vunpack.c.l.b16 %v3032
          %v3594 = vunpack.c.h.b16 %v3032
          %v3595 = vunpack.c.l.b16 %v3033
          %v3596 = vunpack.c.h.b16 %v3033
          %v3597 = vunpack.c.l.b16 %v3034
          %v3598 = vunpack.c.h.b16 %v3034
          %v3599 = vunpack.c.l.b16 %v3035
          %v3600 = vunpack.c.h.b16 %v3035
          %v3601 = vunpack.c.l.b16 %v3036
          %v3602 = vunpack.c.h.b16 %v3036
          %v3603 = vunpack.c.l.b16 %v3037
          %v3604 = vunpack.c.h.b16 %v3037
          %v3605 = vunpack.c.l.b16 %v3038
          %v3606 = vunpack.c.h.b16 %v3038
          %v3607 = vunpack.c.l.b16 %v3039
          %v3608 = vunpack.c.h.b16 %v3039
          %v3609 = vunpack.c.l.b16 %v3040
          %v3610 = vunpack.c.h.b16 %v3040
          %v3611 = vunpack.c.l.b16 %v3041
          %v3612 = vunpack.c.h.b16 %v3041
          %v3613 = vunpack.c.l.b16 %v3042
          %v3614 = vunpack.c.h.b16 %v3042
          %v3615 = vunpack.c.l.b16 %v3043
          %v3616 = vunpack.c.h.b16 %v3043
          %v3617 = vunpack.c.l.b16 %v3044
          %v3618 = vunpack.c.h.b16 %v3044
          %v3619 = vunpack.c.l.b16 %v3045
          %v3620 = vunpack.c.h.b16 %v3045
          %v3621 = vunpack.c.l.b16 %v3046
          %v3622 = vunpack.c.h.b16 %v3046
          %v3623 = vunpack.c.l.b16 %v3047
          %v3624 = vunpack.c.h.b16 %v3047
          %v3625 = vunpack.c.l.b16 %v3048
          %v3626 = vunpack.c.h.b16 %v3048
          %v3627 = vunpack.c.l.b16 %v3049
          %v3628 = vunpack.c.h.b16 %v3049
          %v3629 = vunpack.c.l.b16 %v3050
          %v3630 = vunpack.c.h.b16 %v3050
          %v3631 = vunpack.c.l.b16 %v3051
          %v3632 = vunpack.c.h.b16 %v3051
          %v3633 = vunpack.c.l.b16 %v3052
          %v3634 = vunpack.c.h.b16 %v3052
          %v3635 = vunpack.c.l.b16 %v3053
          %v3636 = vunpack.c.h.b16 %v3053
          %v3637 = vunpack.c.l.b16 %v3054
          %v3638 = vunpack.c.h.b16 %v3054
          %v3639 = vunpack.c.l.b16 %v3055
          %v3640 = vunpack.c.h.b16 %v3055
          %v3641 = vunpack.c.l.b16 %v3056
          %v3642 = vunpack.c.h.b16 %v3056
          %v3643 = vunpack.c.l.b16 %v3057
          %v3644 = vunpack.c.h.b16 %v3057
          %v3645 = vunpack.c.l.b16 %v3058
          %v3646 = vunpack.c.h.b16 %v3058
          %v3647 = vunpack.c.l.b16 %v3059
          %v3648 = vunpack.c.h.b16 %v3059
          %v3649 = vunpack.c.l.b16 %v3060
          %v3650 = vunpack.c.h.b16 %v3060
          %v3651 = vunpack.c.l.b16 %v3061
          %v3652 = vunpack.c.h.b16 %v3061
          %v3653 = vunpack.c.l.b16 %v3062
          %v3654 = vunpack.c.h.b16 %v3062
          %v3655 = vunpack.c.l.b16 %v3063
          %v3656 = vunpack.c.h.b16 %v3063
          %v3657 = vunpack.c.l.b16 %v3064
          %v3658 = vunpack.c.h.b16 %v3064
          %v3659 = vunpack.c.l.b16 %v3065
          %v3660 = vunpack.c.h.b16 %v3065
          %v3661 = vunpack.c.l.b16 %v3066
          %v3662 = vunpack.c.h.b16 %v3066
          %v3663 = vunpack.c.l.b16 %v3067
          %v3664 = vunpack.c.h.b16 %v3067
          %v3665 = vunpack.c.l.b16 %v3068
          %v3666 = vunpack.c.h.b16 %v3068
          %v3667 = vunpack.c.l.b16 %v3069
          %v3668 = vunpack.c.h.b16 %v3069
          %v3669 = vunpack.c.l.b16 %v3070
          %v3670 = vunpack.c.h.b16 %v3070
          %v3671 = vunpack.c.l.b16 %v3071
          %v3672 = vunpack.c.h.b16 %v3071
          %v3673 = vunpack.c.l.b16 %v3072
          %v3674 = vunpack.c.h.b16 %v3072
          %v3675 = vunpack.c.l.b16 %v3073
          %v3676 = vunpack.c.h.b16 %v3073
          %v3677 = vunpack.c.l.b16 %v3074
          %v3678 = vunpack.c.h.b16 %v3074
          %v3679 = vunpack.c.l.b16 %v3075
          %v3680 = vunpack.c.h.b16 %v3075
          %v3681 = vunpack.c.l.b16 %v3076
          %v3682 = vunpack.c.h.b16 %v3076
          %v3683 = vunpack.c.l.b16 %v3077
          %v3684 = vunpack.c.h.b16 %v3077
          %v3685 = vunpack.c.l.b16 %v3078
          %v3686 = vunpack.c.h.b16 %v3078
          %v3687 = vunpack.c.l.b16 %v3079
          %v3688 = vunpack.c.h.b16 %v3079
          %v3689 = vunpack.c.l.b16 %v3080
          %v3690 = vunpack.c.h.b16 %v3080
          %v3691 = vunpack.c.l.b16 %v3081
          %v3692 = vunpack.c.h.b16 %v3081
          %v3693 = vunpack.c.l.b16 %v3082
          %v3694 = vunpack.c.h.b16 %v3082
          %v3695 = vunpack.c.l.b16 %v3083
          %v3696 = vunpack.c.h.b16 %v3083
          %v3697 = vunpack.c.l.b16 %v3084
          %v3698 = vunpack.c.h.b16 %v3084
          %v3699 = vunpack.c.l.b16 %v3085
          %v3700 = vunpack.c.h.b16 %v3085
          %v3701 = vunpack.c.l.b16 %v3086
          %v3702 = vunpack.c.h.b16 %v3086
          %v3703 = vunpack.c.l.b16 %v3087
          %v3704 = vunpack.c.h.b16 %v3087
          %v3705 = vunpack.c.l.b16 %v3088
          %v3706 = vunpack.c.h.b16 %v3088
          %v3707 = vunpack.c.l.b16 %v3089
          %v3708 = vunpack.c.h.b16 %v3089
          %v3709 = vunpack.c.l.b16 %v3090
          %v3710 = vunpack.c.h.b16 %v3090
          %v3711 = vunpack.c.l.b16 %v3091
          %v3712 = vunpack.c.h.b16 %v3091
          %v3713 = vunpack.c.l.b16 %v3092
          %v3714 = vunpack.c.h.b16 %v3092
          %v3715 = vunpack.c.l.b16 %v3093
          %v3716 = vunpack.c.h.b16 %v3093
          %v3717 = vunpack.c.l.b16 %v3094
          %v3718 = vunpack.c.h.b16 %v3094
          %v3719 = vunpack.c.l.b16 %v3095
          %v3720 = vunpack.c.h.b16 %v3095
          %v3721 = vunpack.c.l.b16 %v3096
          %v3722 = vunpack.c.h.b16 %v3096
          %v3723 = vunpack.c.l.b16 %v3097
          %v3724 = vunpack.c.h.b16 %v3097
          %v3725 = vunpack.c.l.b16 %v3098
          %v3726 = vunpack.c.h.b16 %v3098
          %v3727 = vunpack.c.l.b16 %v3099
          %v3728 = vunpack.c.h.b16 %v3099
          %v3729 = vunpack.c.l.b16 %v3100
          %v3730 = vunpack.c.h.b16 %v3100
          %v3731 = vunpack.c.l.b16 %v3101
          %v3732 = vunpack.c.h.b16 %v3101
          %v3733 = vunpack.c.l.b16 %v3102
          %v3734 = vunpack.c.h.b16 %v3102
          %v3735 = vunpack.c.l.b16 %v3103
          %v3736 = vunpack.c.h.b16 %v3103
          %v3737 = vunpack.c.l.b16 %v3104
          %v3738 = vunpack.c.h.b16 %v3104
          %v3739 = vunpack.c.l.b16 %v3105
          %v3740 = vunpack.c.h.b16 %v3105
          %v3741 = vunpack.c.l.b16 %v3106
          %v3742 = vunpack.c.h.b16 %v3106
          %v3743 = vunpack.c.l.b16 %v3107
          %v3744 = vunpack.c.h.b16 %v3107
          %v3745 = vunpack.c.l.b16 %v3108
          %v3746 = vunpack.c.h.b16 %v3108
          %v3747 = vunpack.c.l.b16 %v3109
          %v3748 = vunpack.c.h.b16 %v3109
          %v3749 = vunpack.c.l.b16 %v3110
          %v3750 = vunpack.c.h.b16 %v3110
          %v3751 = vunpack.c.l.b16 %v3111
          %v3752 = vunpack.c.h.b16 %v3111
          %v3753 = vunpack.c.l.b16 %v3112
          %v3754 = vunpack.c.h.b16 %v3112
          %v3755 = vunpack.c.l.b16 %v3113
          %v3756 = vunpack.c.h.b16 %v3113
          %v3757 = vunpack.c.l.b16 %v3114
          %v3758 = vunpack.c.h.b16 %v3114
          %v3759 = vunpack.c.l.b16 %v3115
          %v3760 = vunpack.c.h.b16 %v3115
          %v3761 = vunpack.c.l.b16 %v3116
          %v3762 = vunpack.c.h.b16 %v3116
          %v3763 = vunpack.c.l.b16 %v3117
          %v3764 = vunpack.c.h.b16 %v3117
          %v3765 = vunpack.c.l.b16 %v3118
          %v3766 = vunpack.c.h.b16 %v3118
          %v3767 = vunpack.c.l.b16 %v3119
          %v3768 = vunpack.c.h.b16 %v3119
          %v3769 = vunpack.c.l.b16 %v3120
          %v3770 = vunpack.c.h.b16 %v3120
          %v3771 = vunpack.c.l.b16 %v3121
          %v3772 = vunpack.c.h.b16 %v3121
          %v3773 = vunpack.c.l.b16 %v3122
          %v3774 = vunpack.c.h.b16 %v3122
          %v3775 = vunpack.c.l.b16 %v3123
          %v3776 = vunpack.c.h.b16 %v3123
          %v3777 = vunpack.c.l.b16 %v3124
          %v3778 = vunpack.c.h.b16 %v3124
          %v3779 = vunpack.c.l.b16 %v3125
          %v3780 = vunpack.c.h.b16 %v3125
          %v3781 = vunpack.c.l.b16 %v3126
          %v3782 = vunpack.c.h.b16 %v3126
          %v3783 = vunpack.c.l.b16 %v3127
          %v3784 = vunpack.c.h.b16 %v3127
          %v3785 = vunpack.c.l.b16 %v3128
          %v3786 = vunpack.c.h.b16 %v3128
          %v3787 = vunpack.c.l.b16 %v3129
          %v3788 = vunpack.c.h.b16 %v3129
          %v3789 = vunpack.c.l.b16 %v3130
          %v3790 = vunpack.c.h.b16 %v3130
          %v3791 = vunpack.c.l.b16 %v3131
          %v3792 = vunpack.c.h.b16 %v3131
          %v3793 = vunpack.c.l.b16 %v3132
          %v3794 = vunpack.c.h.b16 %v3132
          %v3795 = vunpack.c.l.b16 %v3133
          %v3796 = vunpack.c.h.b16 %v3133
          %v3797 = vunpack.c.l.b16 %v3134
          %v3798 = vunpack.c.h.b16 %v3134
          %v3799 = vunpack.c.l.b16 %v3135
          %v3800 = vunpack.c.h.b16 %v3135
          %v3801 = vunpack.c.l.b16 %v3136
          %v3802 = vunpack.c.h.b16 %v3136
          %v3803 = vunpack.c.l.b16 %v3137
          %v3804 = vunpack.c.h.b16 %v3137
          %v3805 = vunpack.c.l.b16 %v3138
          %v3806 = vunpack.c.h.b16 %v3138
          %v3807 = vunpack.c.l.b16 %v3139
          %v3808 = vunpack.c.h.b16 %v3139
          %v3809 = vunpack.c.l.b16 %v3140
          %v3810 = vunpack.c.h.b16 %v3140
          %v3811 = vunpack.c.l.b16 %v3141
          %v3812 = vunpack.c.h.b16 %v3141
          %v3813 = vunpack.c.l.b16 %v3142
          %v3814 = vunpack.c.h.b16 %v3142
          %v3815 = vunpack.c.l.b16 %v3143
          %v3816 = vunpack.c.h.b16 %v3143
          %v3817 = vunpack.c.l.b16 %v3144
          %v3818 = vunpack.c.h.b16 %v3144
          %v3819 = vunpack.c.l.b16 %v3145
          %v3820 = vunpack.c.h.b16 %v3145
          %v3821 = vunpack.c.l.b16 %v3146
          %v3822 = vunpack.c.h.b16 %v3146
          %v3823 = vunpack.c.l.b16 %v3147
          %v3824 = vunpack.c.h.b16 %v3147
          %v3825 = vunpack.c.l.b16 %v3148
          %v3826 = vunpack.c.h.b16 %v3148
          %v3827 = vunpack.c.l.b16 %v3149
          %v3828 = vunpack.c.h.b16 %v3149
          %v3829 = vunpack.c.l.b16 %v3150
          %v3830 = vunpack.c.h.b16 %v3150
          %v3831 = vunpack.c.l.b16 %v3151
          %v3832 = vunpack.c.h.b16 %v3151
          %v3833 = vunpack.c.l.b16 %v3152
          %v3834 = vunpack.c.h.b16 %v3152
          %v3835 = vunpack.c.l.b16 %v3153
          %v3836 = vunpack.c.h.b16 %v3153
          %v3837 = vunpack.c.l.b16 %v3154
          %v3838 = vunpack.c.h.b16 %v3154
          %v3839 = vunpack.c.l.b16 %v3155
          %v3840 = vunpack.c.h.b16 %v3155
          %v3841 = vunpack.c.l.b16 %v3156
          %v3842 = vunpack.c.h.b16 %v3156
          %v3843 = vunpack.c.l.b16 %v3157
          %v3844 = vunpack.c.h.b16 %v3157
          %v3845 = vunpack.c.l.b16 %v3158
          %v3846 = vunpack.c.h.b16 %v3158
          %v3847 = vunpack.c.l.b16 %v3159
          %v3848 = vunpack.c.h.b16 %v3159
          %v3849 = vunpack.c.l.b16 %v3160
          %v3850 = vunpack.c.h.b16 %v3160
          %v3851 = vunpack.c.l.b16 %v3161
          %v3852 = vunpack.c.h.b16 %v3161
          %v3853 = vunpack.c.l.b16 %v3162
          %v3854 = vunpack.c.h.b16 %v3162
          %v3855 = vunpack.c.l.b16 %v3163
          %v3856 = vunpack.c.h.b16 %v3163
          %v3857 = vunpack.c.l.b16 %v3164
          %v3858 = vunpack.c.h.b16 %v3164
          %v3859 = vunpack.c.l.b16 %v3165
          %v3860 = vunpack.c.h.b16 %v3165
          %v3861 = vunpack.c.l.b16 %v3166
          %v3862 = vunpack.c.h.b16 %v3166
          %v3863 = vunpack.c.l.b16 %v3167
          %v3864 = vunpack.c.h.b16 %v3167
          %v3865 = vunpack.c.l.b16 %v3168
          %v3866 = vunpack.c.h.b16 %v3168
          %v3867 = vunpack.c.l.b16 %v3169
          %v3868 = vunpack.c.h.b16 %v3169
          %v3869 = vunpack.c.l.b16 %v3170
          %v3870 = vunpack.c.h.b16 %v3170
          %v3871 = vunpack.c.l.b16 %v3171
          %v3872 = vunpack.c.h.b16 %v3171
          %v3873 = vunpack.c.l.b16 %v3172
          %v3874 = vunpack.c.h.b16 %v3172
          %v3875 = vunpack.c.l.b16 %v3173
          %v3876 = vunpack.c.h.b16 %v3173
          %v3877 = vunpack.c.l.b16 %v3174
          %v3878 = vunpack.c.h.b16 %v3174
          %v3879 = vunpack.c.l.b16 %v3175
          %v3880 = vunpack.c.h.b16 %v3175
          %v3881 = vunpack.c.l.b16 %v3176
          %v3882 = vunpack.c.h.b16 %v3176
          %v3883 = vunpack.c.l.b16 %v3177
          %v3884 = vunpack.c.h.b16 %v3177
          %v3885 = vunpack.c.l.b16 %v3178
          %v3886 = vunpack.c.h.b16 %v3178
          %v3887 = vunpack.c.l.b16 %v3179
          %v3888 = vunpack.c.h.b16 %v3179
          %v3889 = vunpack.c.l.b16 %v3180
          %v3890 = vunpack.c.h.b16 %v3180
          %v3891 = vunpack.c.l.b16 %v3181
          %v3892 = vunpack.c.h.b16 %v3181
          %v3893 = vunpack.c.l.b16 %v3182
          %v3894 = vunpack.c.h.b16 %v3182
          %v3895 = vunpack.c.l.b16 %v3183
          %v3896 = vunpack.c.h.b16 %v3183
          %v3897 = vunpack.c.l.b16 %v3184
          %v3898 = vunpack.c.h.b16 %v3184
          %v3899 = vunpack.c.l.b16 %v3185
          %v3900 = vunpack.c.h.b16 %v3185
          %v3901 = vunpack.c.l.b16 %v3186
          %v3902 = vunpack.c.h.b16 %v3186
          %v3903 = vunpack.c.l.b16 %v3187
          %v3904 = vunpack.c.h.b16 %v3187
          %v3905 = vunpack.c.l.b16 %v3188
          %v3906 = vunpack.c.h.b16 %v3188
          %v3907 = vunpack.c.l.b16 %v3189
          %v3908 = vunpack.c.h.b16 %v3189
          %v3909 = vunpack.c.l.b16 %v3190
          %v3910 = vunpack.c.h.b16 %v3190
          %v3911 = vunpack.c.l.b16 %v3191
          %v3912 = vunpack.c.h.b16 %v3191
          %v3913 = vunpack.c.l.b16 %v3192
          %v3914 = vunpack.c.h.b16 %v3192
          %v3915 = vunpack.c.l.b16 %v3193
          %v3916 = vunpack.c.h.b16 %v3193
          %v3917 = vunpack.c.l.b16 %v3194
          %v3918 = vunpack.c.h.b16 %v3194
          %v3919 = vunpack.c.l.b16 %v3195
          %v3920 = vunpack.c.h.b16 %v3195
          %v3921 = vunpack.c.l.b16 %v3196
          %v3922 = vunpack.c.h.b16 %v3196
          %v3923 = vunpack.c.l.b16 %v3197
          %v3924 = vunpack.c.h.b16 %v3197
          %v3925 = vunpack.c.l.b16 %v3198
          %v3926 = vunpack.c.h.b16 %v3198
          %v3927 = vunpack.c.l.b16 %v3199
          %v3928 = vunpack.c.h.b16 %v3199
          %v3929 = vunpack.c.l.b16 %v3200
          %v3930 = vunpack.c.h.b16 %v3200
          %v3931 = vunpack.c.l.b16 %v3201
          %v3932 = vunpack.c.h.b16 %v3201
          %v3933 = vunpack.c.l.b16 %v3202
          %v3934 = vunpack.c.h.b16 %v3202
          %v3935 = vunpack.c.l.b16 %v3203
          %v3936 = vunpack.c.h.b16 %v3203
          %v3937 = vunpack.c.l.b16 %v3204
          %v3938 = vunpack.c.h.b16 %v3204
          %v3939 = vunpack.c.l.b16 %v3205
          %v3940 = vunpack.c.h.b16 %v3205
          %v3941 = vunpack.c.l.b16 %v3206
          %v3942 = vunpack.c.h.b16 %v3206
          %v3943 = vunpack.c.l.b16 %v3207
          %v3944 = vunpack.c.h.b16 %v3207
          %v3945 = vunpack.c.l.b16 %v3208
          %v3946 = vunpack.c.h.b16 %v3208
          %v3947 = vunpack.c.l.b16 %v3209
          %v3948 = vunpack.c.h.b16 %v3209
          %v3949 = vunpack.c.l.b16 %v3210
          %v3950 = vunpack.c.h.b16 %v3210
          %v3951 = vunpack.c.l.b16 %v3211
          %v3952 = vunpack.c.h.b16 %v3211
          %v3953 = vunpack.c.l.b16 %v3212
          %v3954 = vunpack.c.h.b16 %v3212
          %v3955 = vunpack.c.l.b16 %v3213
          %v3956 = vunpack.c.h.b16 %v3213
          %v3957 = vunpack.c.l.b16 %v3214
          %v3958 = vunpack.c.h.b16 %v3214
          %v3959 = vunpack.c.l.b16 %v3215
          %v3960 = vunpack.c.h.b16 %v3215
          %v3961 = vunpack.c.l.b16 %v3216
          %v3962 = vunpack.c.h.b16 %v3216
          %v3963 = vunpack.c.l.b16 %v3217
          %v3964 = vunpack.c.h.b16 %v3217
          %v3965 = vunpack.c.l.b16 %v3218
          %v3966 = vunpack.c.h.b16 %v3218
          %v3967 = vunpack.c.l.b16 %v3219
          %v3968 = vunpack.c.h.b16 %v3219
          %v3969 = vunpack.c.l.b16 %v3220
          %v3970 = vunpack.c.h.b16 %v3220
          %v3971 = vunpack.c.l.b16 %v3221
          %v3972 = vunpack.c.h.b16 %v3221
          %v3973 = vunpack.c.l.b16 %v3222
          %v3974 = vunpack.c.h.b16 %v3222
          %v3975 = vunpack.c.l.b16 %v3223
          %v3976 = vunpack.c.h.b16 %v3223
          %v3977 = vunpack.c.l.b16 %v3224
          %v3978 = vunpack.c.h.b16 %v3224
          %v3979 = vunpack.c.l.b16 %v3225
          %v3980 = vunpack.c.h.b16 %v3225
          %v3981 = vunpack.c.l.b16 %v3226
          %v3982 = vunpack.c.h.b16 %v3226
          %v3983 = vunpack.c.l.b16 %v3227
          %v3984 = vunpack.c.h.b16 %v3227
          %v3985 = vunpack.c.l.b16 %v3228
          %v3986 = vunpack.c.h.b16 %v3228
          %v3987 = vunpack.c.l.b16 %v3229
          %v3988 = vunpack.c.h.b16 %v3229
          %v3989 = vunpack.c.l.b16 %v3230
          %v3990 = vunpack.c.h.b16 %v3230
          %v3991 = vunpack.c.l.b16 %v3231
          %v3992 = vunpack.c.h.b16 %v3231
          %v3993 = vunpack.c.l.b16 %v3232
          %v3994 = vunpack.c.h.b16 %v3232
          %v3995 = vunpack.c.l.b16 %v3233
          %v3996 = vunpack.c.h.b16 %v3233
          %v3997 = vunpack.c.l.b16 %v3234
          %v3998 = vunpack.c.h.b16 %v3234
          %v3999 = vunpack.c.l.b16 %v3235
          %v4000 = vunpack.c.h.b16 %v3235
          %v4001 = vunpack.c.l.b16 %v3236
          %v4002 = vunpack.c.h.b16 %v3236
          %v4003 = vunpack.c.l.b16 %v3237
          %v4004 = vunpack.c.h.b16 %v3237
          %v4005 = vunpack.c.l.b16 %v3238
          %v4006 = vunpack.c.h.b16 %v3238
          %v4007 = vunpack.c.l.b16 %v3239
          %v4008 = vunpack.c.h.b16 %v3239
          %v4009 = vunpack.c.l.b16 %v3240
          %v4010 = vunpack.c.h.b16 %v3240
          %v4011 = vunpack.c.l.b16 %v3241
          %v4012 = vunpack.c.h.b16 %v3241
          %v4013 = vunpack.c.l.b16 %v3242
          %v4014 = vunpack.c.h.b16 %v3242
          %v4015 = vunpack.c.l.b16 %v3243
          %v4016 = vunpack.c.h.b16 %v3243
          %v4017 = vunpack.c.l.b16 %v3244
          %v4018 = vunpack.c.h.b16 %v3244
          %v4019 = vunpack.c.l.b16 %v3245
          %v4020 = vunpack.c.h.b16 %v3245
          %v4021 = vunpack.c.l.b16 %v3246
          %v4022 = vunpack.c.h.b16 %v3246
          %v4023 = vunpack.c.l.b16 %v3247
          %v4024 = vunpack.c.h.b16 %v3247
          %v4025 = vunpack.c.l.b16 %v3248
          %v4026 = vunpack.c.h.b16 %v3248
          %v4027 = vunpack.c.l.b16 %v3249
          %v4028 = vunpack.c.h.b16 %v3249
          %v4029 = vunpack.c.l.b16 %v3250
          %v4030 = vunpack.c.h.b16 %v3250
          %v4031 = vunpack.c.l.b16 %v3251
          %v4032 = vunpack.c.h.b16 %v3251
          %v4033 = vunpack.c.l.b16 %v3252
          %v4034 = vunpack.c.h.b16 %v3252
          %v4035 = vunpack.c.l.b16 %v3253
          %v4036 = vunpack.c.h.b16 %v3253
          %v4037 = vunpack.c.l.b16 %v3254
          %v4038 = vunpack.c.h.b16 %v3254
          %v4039 = vunpack.c.l.b16 %v3255
          %v4040 = vunpack.c.h.b16 %v3255
          %v4041 = vunpack.c.l.b16 %v3256
          %v4042 = vunpack.c.h.b16 %v3256
          %v4043 = vunpack.c.l.b16 %v3257
          %v4044 = vunpack.c.h.b16 %v3257
          %v4045 = vunpack.c.l.b16 %v3258
          %v4046 = vunpack.c.h.b16 %v3258
          %v4047 = vunpack.c.l.b16 %v3259
          %v4048 = vunpack.c.h.b16 %v3259
          %v4049 = vunpack.c.l.b16 %v3260
          %v4050 = vunpack.c.h.b16 %v3260
          %v4051 = vpack.c.b16 %v3543, %v3539
          %v4052 = vpack.c.b16 %v3544, %v3540
          %v4053 = vpack.c.b16 %v3545, %v3541
          %v4054 = vpack.c.b16 %v3546, %v3542
          %v4055 = vpack.c.b16 %v3551, %v3547
          %v4056 = vpack.c.b16 %v3552, %v3548
          %v4057 = vpack.c.b16 %v3553, %v3549
          %v4058 = vpack.c.b16 %v3554, %v3550
          %v4059 = vpack.c.b16 %v3559, %v3555
          %v4060 = vpack.c.b16 %v3560, %v3556
          %v4061 = vpack.c.b16 %v3561, %v3557
          %v4062 = vpack.c.b16 %v3562, %v3558
          %v4063 = vpack.c.b16 %v3567, %v3563
          %v4064 = vpack.c.b16 %v3568, %v3564
          %v4065 = vpack.c.b16 %v3569, %v3565
          %v4066 = vpack.c.b16 %v3570, %v3566
          %v4067 = vpack.c.b16 %v3575, %v3571
          %v4068 = vpack.c.b16 %v3576, %v3572
          %v4069 = vpack.c.b16 %v3577, %v3573
          %v4070 = vpack.c.b16 %v3578, %v3574
          %v4071 = vpack.c.b16 %v3583, %v3579
          %v4072 = vpack.c.b16 %v3584, %v3580
          %v4073 = vpack.c.b16 %v3585, %v3581
          %v4074 = vpack.c.b16 %v3586, %v3582
          %v4075 = vpack.c.b16 %v3591, %v3587
          %v4076 = vpack.c.b16 %v3592, %v3588
          %v4077 = vpack.c.b16 %v3593, %v3589
          %v4078 = vpack.c.b16 %v3594, %v3590
          %v4079 = vpack.c.b16 %v3599, %v3595
          %v4080 = vpack.c.b16 %v3600, %v3596
          %v4081 = vpack.c.b16 %v3601, %v3597
          %v4082 = vpack.c.b16 %v3602, %v3598
          %v4083 = vpack.c.b16 %v3607, %v3603
          %v4084 = vpack.c.b16 %v3608, %v3604
          %v4085 = vpack.c.b16 %v3609, %v3605
          %v4086 = vpack.c.b16 %v3610, %v3606
          %v4087 = vpack.c.b16 %v3615, %v3611
          %v4088 = vpack.c.b16 %v3616, %v3612
          %v4089 = vpack.c.b16 %v3617, %v3613
          %v4090 = vpack.c.b16 %v3618, %v3614
          %v4091 = vpack.c.b16 %v3623, %v3619
          %v4092 = vpack.c.b16 %v3624, %v3620
          %v4093 = vpack.c.b16 %v3625, %v3621
          %v4094 = vpack.c.b16 %v3626, %v3622
          %v4095 = vpack.c.b16 %v3631, %v3627
          %v4096 = vpack.c.b16 %v3632, %v3628
          %v4097 = vpack.c.b16 %v3633, %v3629
          %v4098 = vpack.c.b16 %v3634, %v3630
          %v4099 = vpack.c.b16 %v3639, %v3635
          %v4100 = vpack.c.b16 %v3640, %v3636
          %v4101 = vpack.c.b16 %v3641, %v3637
          %v4102 = vpack.c.b16 %v3642, %v3638
          %v4103 = vpack.c.b16 %v3647, %v3643
          %v4104 = vpack.c.b16 %v3648, %v3644
          %v4105 = vpack.c.b16 %v3649, %v3645
          %v4106 = vpack.c.b16 %v3650, %v3646
          %v4107 = vpack.c.b16 %v3655, %v3651
          %v4108 = vpack.c.b16 %v3656, %v3652
          %v4109 = vpack.c.b16 %v3657, %v3653
          %v4110 = vpack.c.b16 %v3658, %v3654
          %v4111 = vpack.c.b16 %v3663, %v3659
          %v4112 = vpack.c.b16 %v3664, %v3660
          %v4113 = vpack.c.b16 %v3665, %v3661
          %v4114 = vpack.c.b16 %v3666, %v3662
          %v4115 = vpack.c.b16 %v3671, %v3667
          %v4116 = vpack.c.b16 %v3672, %v3668
          %v4117 = vpack.c.b16 %v3673, %v3669
          %v4118 = vpack.c.b16 %v3674, %v3670
          %v4119 = vpack.c.b16 %v3679, %v3675
          %v4120 = vpack.c.b16 %v3680, %v3676
          %v4121 = vpack.c.b16 %v3681, %v3677
          %v4122 = vpack.c.b16 %v3682, %v3678
          %v4123 = vpack.c.b16 %v3687, %v3683
          %v4124 = vpack.c.b16 %v3688, %v3684
          %v4125 = vpack.c.b16 %v3689, %v3685
          %v4126 = vpack.c.b16 %v3690, %v3686
          %v4127 = vpack.c.b16 %v3695, %v3691
          %v4128 = vpack.c.b16 %v3696, %v3692
          %v4129 = vpack.c.b16 %v3697, %v3693
          %v4130 = vpack.c.b16 %v3698, %v3694
          %v4131 = vpack.c.b16 %v3703, %v3699
          %v4132 = vpack.c.b16 %v3704, %v3700
          %v4133 = vpack.c.b16 %v3705, %v3701
          %v4134 = vpack.c.b16 %v3706, %v3702
          %v4135 = vpack.c.b16 %v3711, %v3707
          %v4136 = vpack.c.b16 %v3712, %v3708
          %v4137 = vpack.c.b16 %v3713, %v3709
          %v4138 = vpack.c.b16 %v3714, %v3710
          %v4139 = vpack.c.b16 %v3719, %v3715
          %v4140 = vpack.c.b16 %v3720, %v3716
          %v4141 = vpack.c.b16 %v3721, %v3717
          %v4142 = vpack.c.b16 %v3722, %v3718
          %v4143 = vpack.c.b16 %v3727, %v3723
          %v4144 = vpack.c.b16 %v3728, %v3724
          %v4145 = vpack.c.b16 %v3729, %v3725
          %v4146 = vpack.c.b16 %v3730, %v3726
          %v4147 = vpack.c.b16 %v3735, %v3731
          %v4148 = vpack.c.b16 %v3736, %v3732
          %v4149 = vpack.c.b16 %v3737, %v3733
          %v4150 = vpack.c.b16 %v3738, %v3734
          %v4151 = vpack.c.b16 %v3743, %v3739
          %v4152 = vpack.c.b16 %v3744, %v3740
          %v4153 = vpack.c.b16 %v3745, %v3741
          %v4154 = vpack.c.b16 %v3746, %v3742
          %v4155 = vpack.c.b16 %v3751, %v3747
          %v4156 = vpack.c.b16 %v3752, %v3748
          %v4157 = vpack.c.b16 %v3753, %v3749
          %v4158 = vpack.c.b16 %v3754, %v3750
          %v4159 = vpack.c.b16 %v3759, %v3755
          %v4160 = vpack.c.b16 %v3760, %v3756
          %v4161 = vpack.c.b16 %v3761, %v3757
          %v4162 = vpack.c.b16 %v3762, %v3758
          %v4163 = vpack.c.b16 %v3767, %v3763
          %v4164 = vpack.c.b16 %v3768, %v3764
          %v4165 = vpack.c.b16 %v3769, %v3765
          %v4166 = vpack.c.b16 %v3770, %v3766
          %v4167 = vpack.c.b16 %v3775, %v3771
          %v4168 = vpack.c.b16 %v3776, %v3772
          %v4169 = vpack.c.b16 %v3777, %v3773
          %v4170 = vpack.c.b16 %v3778, %v3774
          %v4171 = vpack.c.b16 %v3783, %v3779
          %v4172 = vpack.c.b16 %v3784, %v3780
          %v4173 = vpack.c.b16 %v3785, %v3781
          %v4174 = vpack.c.b16 %v3786, %v3782
          %v4175 = vpack.c.b16 %v3791, %v3787
          %v4176 = vpack.c.b16 %v3792, %v3788
          %v4177 = vpack.c.b16 %v3793, %v3789
          %v4178 = vpack.c.b16 %v3794, %v3790
          %v4179 = vpack.c.b16 %v3799, %v3795
          %v4180 = vpack.c.b16 %v3800, %v3796
          %v4181 = vpack.c.b16 %v3801, %v3797
          %v4182 = vpack.c.b16 %v3802, %v3798
          %v4183 = vpack.c.b16 %v3807, %v3803
          %v4184 = vpack.c.b16 %v3808, %v3804
          %v4185 = vpack.c.b16 %v3809, %v3805
          %v4186 = vpack.c.b16 %v3810, %v3806
          %v4187 = vpack.c.b16 %v3815, %v3811
          %v4188 = vpack.c.b16 %v3816, %v3812
          %v4189 = vpack.c.b16 %v3817, %v3813
          %v4190 = vpack.c.b16 %v3818, %v3814
          %v4191 = vpack.c.b16 %v3823, %v3819
          %v4192 = vpack.c.b16 %v3824, %v3820
          %v4193 = vpack.c.b16 %v3825, %v3821
          %v4194 = vpack.c.b16 %v3826, %v3822
          %v4195 = vpack.c.b16 %v3831, %v3827
          %v4196 = vpack.c.b16 %v3832, %v3828
          %v4197 = vpack.c.b16 %v3833, %v3829
          %v4198 = vpack.c.b16 %v3834, %v3830
          %v4199 = vpack.c.b16 %v3839, %v3835
          %v4200 = vpack.c.b16 %v3840, %v3836
          %v4201 = vpack.c.b16 %v3841, %v3837
          %v4202 = vpack.c.b16 %v3842, %v3838
          %v4203 = vpack.c.b16 %v3847, %v3843
          %v4204 = vpack.c.b16 %v3848, %v3844
          %v4205 = vpack.c.b16 %v3849, %v3845
          %v4206 = vpack.c.b16 %v3850, %v3846
          %v4207 = vpack.c.b16 %v3855, %v3851
          %v4208 = vpack.c.b16 %v3856, %v3852
          %v4209 = vpack.c.b16 %v3857, %v3853
          %v4210 = vpack.c.b16 %v3858, %v3854
          %v4211 = vpack.c.b16 %v3863, %v3859
          %v4212 = vpack.c.b16 %v3864, %v3860
          %v4213 = vpack.c.b16 %v3865, %v3861
          %v4214 = vpack.c.b16 %v3866, %v3862
          %v4215 = vpack.c.b16 %v3871, %v3867
          %v4216 = vpack.c.b16 %v3872, %v3868
          %v4217 = vpack.c.b16 %v3873, %v3869
          %v4218 = vpack.c.b16 %v3874, %v3870
          %v4219 = vpack.c.b16 %v3879, %v3875
          %v4220 = vpack.c.b16 %v3880, %v3876
          %v4221 = vpack.c.b16 %v3881, %v3877
          %v4222 = vpack.c.b16 %v3882, %v3878
          %v4223 = vpack.c.b16 %v3887, %v3883
          %v4224 = vpack.c.b16 %v3888, %v3884
          %v4225 = vpack.c.b16 %v3889, %v3885
          %v4226 = vpack.c.b16 %v3890, %v3886
          %v4227 = vpack.c.b16 %v3895, %v3891
          %v4228 = vpack.c.b16 %v3896, %v3892
          %v4229 = vpack.c.b16 %v3897, %v3893
          %v4230 = vpack.c.b16 %v3898, %v3894
          %v4231 = vpack.c.b16 %v3903, %v3899
          %v4232 = vpack.c.b16 %v3904, %v3900
          %v4233 = vpack.c.b16 %v3905, %v3901
          %v4234 = vpack.c.b16 %v3906, %v3902
          %v4235 = vpack.c.b16 %v3911, %v3907
          %v4236 = vpack.c.b16 %v3912, %v3908
          %v4237 = vpack.c.b16 %v3913, %v3909
          %v4238 = vpack.c.b16 %v3914, %v3910
          %v4239 = vpack.c.b16 %v3919, %v3915
          %v4240 = vpack.c.b16 %v3920, %v3916
          %v4241 = vpack.c.b16 %v3921, %v3917
          %v4242 = vpack.c.b16 %v3922, %v3918
          %v4243 = vpack.c.b16 %v3927, %v3923
          %v4244 = vpack.c.b16 %v3928, %v3924
          %v4245 = vpack.c.b16 %v3929, %v3925
          %v4246 = vpack.c.b16 %v3930, %v3926
          %v4247 = vpack.c.b16 %v3935, %v3931
          %v4248 = vpack.c.b16 %v3936, %v3932
          %v4249 = vpack.c.b16 %v3937, %v3933
          %v4250 = vpack.c.b16 %v3938, %v3934
          %v4251 = vpack.c.b16 %v3943, %v3939
          %v4252 = vpack.c.b16 %v3944, %v3940
          %v4253 = vpack.c.b16 %v3945, %v3941
          %v4254 = vpack.c.b16 %v3946, %v3942
          %v4255 = vpack.c.b16 %v3951, %v3947
          %v4256 = vpack.c.b16 %v3952, %v3948
          %v4257 = vpack.c.b16 %v3953, %v3949
          %v4258 = vpack.c.b16 %v3954, %v3950
          %v4259 = vpack.c.b16 %v3959, %v3955
          %v4260 = vpack.c.b16 %v3960, %v3956
          %v4261 = vpack.c.b16 %v3961, %v3957
          %v4262 = vpack.c.b16 %v3962, %v3958
          %v4263 = vpack.c.b16 %v3967, %v3963
          %v4264 = vpack.c.b16 %v3968, %v3964
          %v4265 = vpack.c.b16 %v3969, %v3965
          %v4266 = vpack.c.b16 %v3970, %v3966
          %v4267 = vpack.c.b16 %v3975, %v3971
          %v4268 = vpack.c.b16 %v3976, %v3972
          %v4269 = vpack.c.b16 %v3977, %v3973
          %v4270 = vpack.c.b16 %v3978, %v3974
          %v4271 = vpack.c.b16 %v3983, %v3979
          %v4272 = vpack.c.b16 %v3984, %v3980
          %v4273 = vpack.c.b16 %v3985, %v3981
          %v4274 = vpack.c.b16 %v3986, %v3982
          %v4275 = vpack.c.b16 %v3991, %v3987
          %v4276 = vpack.c.b16 %v3992, %v3988
          %v4277 = vpack.c.b16 %v3993, %v3989
          %v4278 = vpack.c.b16 %v3994, %v3990
          %v4279 = vpack.c.b16 %v3999, %v3995
          %v4280 = vpack.c.b16 %v4000, %v3996
          %v4281 = vpack.c.b16 %v4001, %v3997
          %v4282 = vpack.c.b16 %v4002, %v3998
          %v4283 = vpack.c.b16 %v4007, %v4003
          %v4284 = vpack.c.b16 %v4008, %v4004
          %v4285 = vpack.c.b16 %v4009, %v4005
          %v4286 = vpack.c.b16 %v4010, %v4006
          %v4287 = vpack.c.b16 %v4015, %v4011
          %v4288 = vpack.c.b16 %v4016, %v4012
          %v4289 = vpack.c.b16 %v4017, %v4013
          %v4290 = vpack.c.b16 %v4018, %v4014
          %v4291 = vpack.c.b16 %v4023, %v4019
          %v4292 = vpack.c.b16 %v4024, %v4020
          %v4293 = vpack.c.b16 %v4025, %v4021
          %v4294 = vpack.c.b16 %v4026, %v4022
          %v4295 = vpack.c.b16 %v4031, %v4027
          %v4296 = vpack.c.b16 %v4032, %v4028
          %v4297 = vpack.c.b16 %v4033, %v4029
          %v4298 = vpack.c.b16 %v4034, %v4030
          %v4299 = vpack.c.b16 %v4039, %v4035
          %v4300 = vpack.c.b16 %v4040, %v4036
          %v4301 = vpack.c.b16 %v4041, %v4037
          %v4302 = vpack.c.b16 %v4042, %v4038
          %v4303 = vpack.c.b16 %v4047, %v4043
          %v4304 = vpack.c.b16 %v4048, %v4044
          %v4305 = vpack.c.b16 %v4049, %v4045
          %v4306 = vpack.c.b16 %v4050, %v4046
          %4563 = vmatprep.subr.bf16.mxu0 %v4052
          %4564 = vmatpush1.bf16.msra.mxu0 %v4051
          %4565 = vmatprep.subr.bf16.mxu0 %v4056
          %4566 = vmatpush1.bf16.msra.mxu0 %v4055
          %4567 = vmatprep.subr.bf16.mxu0 %v4060
          %4568 = vmatpush1.bf16.msra.mxu0 %v4059
          %4569 = vmatprep.subr.bf16.mxu0 %v4064
          %4570 = vmatpush1.bf16.msra.mxu0 %v4063
          %4571 = vmatprep.subr.bf16.mxu0 %v4068
          %4572 = vmatpush1.bf16.msra.mxu0 %v4067
          %4573 = vmatprep.subr.bf16.mxu0 %v4072
          %4574 = vmatpush1.bf16.msra.mxu0 %v4071
          %4575 = vmatprep.subr.bf16.mxu0 %v4076
          %4576 = vmatpush1.bf16.msra.mxu0 %v4075
          %4577 = vmatprep.subr.bf16.mxu0 %v4080
          %4578 = vmatpush1.bf16.msra.mxu0 %v4079
          %4579 = vmatprep.subr.bf16.mxu0 %v4084
          %4580 = vmatpush1.bf16.msra.mxu0 %v4083
          %4581 = vmatprep.subr.bf16.mxu0 %v4088
          %4582 = vmatpush1.bf16.msra.mxu0 %v4087
          %4583 = vmatprep.subr.bf16.mxu0 %v4092
          %4584 = vmatpush1.bf16.msra.mxu0 %v4091
          %4585 = vmatprep.subr.bf16.mxu0 %v4096
          %4586 = vmatpush1.bf16.msra.mxu0 %v4095
          %4587 = vmatprep.subr.bf16.mxu0 %v4100
          %4588 = vmatpush1.bf16.msra.mxu0 %v4099
          %4589 = vmatprep.subr.bf16.mxu0 %v4104
          %4590 = vmatpush1.bf16.msra.mxu0 %v4103
          %4591 = vmatprep.subr.bf16.mxu0 %v4108
          %4592 = vmatpush1.bf16.msra.mxu0 %v4107
          %4593 = vmatprep.subr.bf16.mxu0 %v4112
          %4594 = vmatpush1.bf16.msra.mxu0 %v4111
          %4595 = vmatprep.mubr.bf16.mxu0 %v2998
          %4596 = vmatmul.mubr.bf16.gmra.mrb[0].mxu0 %v2997
          %v4597 = vpop.f32.mrb[0].mxu0
          %v4598 = vadd.f32 %v3266, %v4597
          %v4599 = vpop.f32.mrb[0].mxu0
          %v4600 = vadd.f32 %v3270, %v4599
          %v4601 = vpop.f32.mrb[0].mxu0
          %v4602 = vpop.f32.mrb[0].mxu0
          %4603 = vdwg.mxu0
          %4604 = vmatprep.subr.bf16.mxu0 %v4116
          %4605 = vmatpush1.bf16.msra.mxu0 %v4115
          %4606 = vmatprep.subr.bf16.mxu0 %v4120
          %4607 = vmatpush1.bf16.msra.mxu0 %v4119
          %4608 = vmatprep.subr.bf16.mxu0 %v4124
          %4609 = vmatpush1.bf16.msra.mxu0 %v4123
          %4610 = vmatprep.subr.bf16.mxu0 %v4128
          %4611 = vmatpush1.bf16.msra.mxu0 %v4127
          %4612 = vmatprep.subr.bf16.mxu0 %v4132
          %4613 = vmatpush1.bf16.msra.mxu0 %v4131
          %4614 = vmatprep.subr.bf16.mxu0 %v4136
          %4615 = vmatpush1.bf16.msra.mxu0 %v4135
          %4616 = vmatprep.subr.bf16.mxu0 %v4140
          %4617 = vmatpush1.bf16.msra.mxu0 %v4139
          %4618 = vmatprep.subr.bf16.mxu0 %v4144
          %4619 = vmatpush1.bf16.msra.mxu0 %v4143
          %4620 = vmatprep.subr.bf16.mxu0 %v4148
          %4621 = vmatpush1.bf16.msra.mxu0 %v4147
          %4622 = vmatprep.subr.bf16.mxu0 %v4152
          %4623 = vmatpush1.bf16.msra.mxu0 %v4151
          %4624 = vmatprep.subr.bf16.mxu0 %v4156
          %4625 = vmatpush1.bf16.msra.mxu0 %v4155
          %4626 = vmatprep.subr.bf16.mxu0 %v4160
          %4627 = vmatpush1.bf16.msra.mxu0 %v4159
          %4628 = vmatprep.subr.bf16.mxu0 %v4164
          %4629 = vmatpush1.bf16.msra.mxu0 %v4163
          %4630 = vmatprep.subr.bf16.mxu0 %v4168
          %4631 = vmatpush1.bf16.msra.mxu0 %v4167
          %4632 = vmatprep.subr.bf16.mxu0 %v4172
          %4633 = vmatpush1.bf16.msra.mxu0 %v4171
          %4634 = vmatprep.subr.bf16.mxu0 %v4176
          %4635 = vmatpush1.bf16.msra.mxu0 %v4175
          %4636 = vmatprep.mubr.bf16.mxu0 %v3000
          %4637 = vmatmul.mubr.bf16.gmra.mrb[0].mxu0 %v2999
          %v4638 = vpop.f32.mrb[0].mxu0
          %v4639 = vadd.f32 %v4598, %v4638
          %v4640 = vpop.f32.mrb[0].mxu0
          %v4641 = vadd.f32 %v4600, %v4640
          %v4642 = vpop.f32.mrb[0].mxu0
          %v4643 = vpop.f32.mrb[0].mxu0
          %4644 = vdwg.mxu0
          %4645 = vmatprep.subr.bf16.mxu0 %v4180
          %4646 = vmatpush1.bf16.msra.mxu0 %v4179
          %4647 = vmatprep.subr.bf16.mxu0 %v4184
          %4648 = vmatpush1.bf16.msra.mxu0 %v4183
          %4649 = vmatprep.subr.bf16.mxu0 %v4188
          %4650 = vmatpush1.bf16.msra.mxu0 %v4187
          %4651 = vmatprep.subr.bf16.mxu0 %v4192
          %4652 = vmatpush1.bf16.msra.mxu0 %v4191
          %4653 = vmatprep.subr.bf16.mxu0 %v4196
          %4654 = vmatpush1.bf16.msra.mxu0 %v4195
          %4655 = vmatprep.subr.bf16.mxu0 %v4200
          %4656 = vmatpush1.bf16.msra.mxu0 %v4199
          %4657 = vmatprep.subr.bf16.mxu0 %v4204
          %4658 = vmatpush1.bf16.msra.mxu0 %v4203
          %4659 = vmatprep.subr.bf16.mxu0 %v4208
          %4660 = vmatpush1.bf16.msra.mxu0 %v4207
          %4661 = vmatprep.subr.bf16.mxu0 %v4212
          %4662 = vmatpush1.bf16.msra.mxu0 %v4211
          %4663 = vmatprep.subr.bf16.mxu0 %v4216
          %4664 = vmatpush1.bf16.msra.mxu0 %v4215
          %4665 = vmatprep.subr.bf16.mxu0 %v4220
          %4666 = vmatpush1.bf16.msra.mxu0 %v4219
          %4667 = vmatprep.subr.bf16.mxu0 %v4224
          %4668 = vmatpush1.bf16.msra.mxu0 %v4223
          %4669 = vmatprep.subr.bf16.mxu0 %v4228
          %4670 = vmatpush1.bf16.msra.mxu0 %v4227
          %4671 = vmatprep.subr.bf16.mxu0 %v4232
          %4672 = vmatpush1.bf16.msra.mxu0 %v4231
          %4673 = vmatprep.subr.bf16.mxu0 %v4236
          %4674 = vmatpush1.bf16.msra.mxu0 %v4235
          %4675 = vmatprep.subr.bf16.mxu0 %v4240
          %4676 = vmatpush1.bf16.msra.mxu0 %v4239
          %4677 = vmatprep.mubr.bf16.mxu0 %v3002
          %4678 = vmatmul.mubr.bf16.gmra.mrb[0].mxu0 %v3001
          %v4679 = vpop.f32.mrb[0].mxu0
          %v4680 = vadd.f32 %v4639, %v4679
          %v4681 = vpop.f32.mrb[0].mxu0
          %v4682 = vadd.f32 %v4641, %v4681
          %v4683 = vpop.f32.mrb[0].mxu0
          %v4684 = vpop.f32.mrb[0].mxu0
          %4685 = vdwg.mxu0
          %4686 = vmatprep.subr.bf16.mxu0 %v4244
          %4687 = vmatpush1.bf16.msra.mxu0 %v4243
          %4688 = vmatprep.subr.bf16.mxu0 %v4248
          %4689 = vmatpush1.bf16.msra.mxu0 %v4247
          %4690 = vmatprep.subr.bf16.mxu0 %v4252
          %4691 = vmatpush1.bf16.msra.mxu0 %v4251
          %4692 = vmatprep.subr.bf16.mxu0 %v4256
          %4693 = vmatpush1.bf16.msra.mxu0 %v4255
          %4694 = vmatprep.subr.bf16.mxu0 %v4260
          %4695 = vmatpush1.bf16.msra.mxu0 %v4259
          %4696 = vmatprep.subr.bf16.mxu0 %v4264
          %4697 = vmatpush1.bf16.msra.mxu0 %v4263
          %4698 = vmatprep.subr.bf16.mxu0 %v4268
          %4699 = vmatpush1.bf16.msra.mxu0 %v4267
          %4700 = vmatprep.subr.bf16.mxu0 %v4272
          %4701 = vmatpush1.bf16.msra.mxu0 %v4271
          %4702 = vmatprep.subr.bf16.mxu0 %v4276
          %4703 = vmatpush1.bf16.msra.mxu0 %v4275
          %4704 = vmatprep.subr.bf16.mxu0 %v4280
          %4705 = vmatpush1.bf16.msra.mxu0 %v4279
          %4706 = vmatprep.subr.bf16.mxu0 %v4284
          %4707 = vmatpush1.bf16.msra.mxu0 %v4283
          %4708 = vmatprep.subr.bf16.mxu0 %v4288
          %4709 = vmatpush1.bf16.msra.mxu0 %v4287
          %4710 = vmatprep.subr.bf16.mxu0 %v4292
          %4711 = vmatpush1.bf16.msra.mxu0 %v4291
          %4712 = vmatprep.subr.bf16.mxu0 %v4296
          %4713 = vmatpush1.bf16.msra.mxu0 %v4295
          %4714 = vmatprep.subr.bf16.mxu0 %v4300
          %4715 = vmatpush1.bf16.msra.mxu0 %v4299
          %4716 = vmatprep.subr.bf16.mxu0 %v4304
          %4717 = vmatpush1.bf16.msra.mxu0 %v4303
          %4718 = vmatprep.mubr.bf16.mxu0 %v3004
          %4719 = vmatmul.mubr.bf16.gmra.mrb[0].mxu0 %v3003
          %v4720 = vpop.f32.mrb[0].mxu0
          %v4721 = vadd.f32 %v4680, %v4720
          %v4722 = vpop.f32.mrb[0].mxu0
          %v4723 = vadd.f32 %v4682, %v4722
          %v4724 = vpop.f32.mrb[0].mxu0
          %v4725 = vpop.f32.mrb[0].mxu0
          %4726 = vdwg.mxu0
          %4727 = vmatprep.subr.bf16.mxu0 %v4054
          %4728 = vmatpush1.bf16.msra.mxu0 %v4053
          %4729 = vmatprep.subr.bf16.mxu0 %v4058
          %4730 = vmatpush1.bf16.msra.mxu0 %v4057
          %4731 = vmatprep.subr.bf16.mxu0 %v4062
          %4732 = vmatpush1.bf16.msra.mxu0 %v4061
          %4733 = vmatprep.subr.bf16.mxu0 %v4066
          %4734 = vmatpush1.bf16.msra.mxu0 %v4065
          %4735 = vmatprep.subr.bf16.mxu0 %v4070
          %4736 = vmatpush1.bf16.msra.mxu0 %v4069
          %4737 = vmatprep.subr.bf16.mxu0 %v4074
          %4738 = vmatpush1.bf16.msra.mxu0 %v4073
          %4739 = vmatprep.subr.bf16.mxu0 %v4078
          %4740 = vmatpush1.bf16.msra.mxu0 %v4077
          %4741 = vmatprep.subr.bf16.mxu0 %v4082
          %4742 = vmatpush1.bf16.msra.mxu0 %v4081
          %4743 = vmatprep.subr.bf16.mxu0 %v4086
          %4744 = vmatpush1.bf16.msra.mxu0 %v4085
          %4745 = vmatprep.subr.bf16.mxu0 %v4090
          %4746 = vmatpush1.bf16.msra.mxu0 %v4089
          %4747 = vmatprep.subr.bf16.mxu0 %v4094
          %4748 = vmatpush1.bf16.msra.mxu0 %v4093
          %4749 = vmatprep.subr.bf16.mxu0 %v4098
          %4750 = vmatpush1.bf16.msra.mxu0 %v4097
          %4751 = vmatprep.subr.bf16.mxu0 %v4102
          %4752 = vmatpush1.bf16.msra.mxu0 %v4101
          %4753 = vmatprep.subr.bf16.mxu0 %v4106
          %4754 = vmatpush1.bf16.msra.mxu0 %v4105
          %4755 = vmatprep.subr.bf16.mxu0 %v4110
          %4756 = vmatpush1.bf16.msra.mxu0 %v4109
          %4757 = vmatprep.subr.bf16.mxu0 %v4114
          %4758 = vmatpush1.bf16.msra.mxu0 %v4113
          %4759 = vmatprep.mubr.bf16.mxu0 %v2998
          %4760 = vmatmul.mubr.bf16.gmra.mrb[0].mxu0 %v2997
          %v4761 = vpop.f32.mrb[0].mxu0
          %v4762 = vadd.f32 %v3274, %v4761
          %v4763 = vpop.f32.mrb[0].mxu0
          %v4764 = vadd.f32 %v3278, %v4763
          %v4765 = vpop.f32.mrb[0].mxu0
          %v4766 = vpop.f32.mrb[0].mxu0
          %4767 = vdwg.mxu0
          %4768 = vmatprep.subr.bf16.mxu0 %v4118
          %4769 = vmatpush1.bf16.msra.mxu0 %v4117
          %4770 = vmatprep.subr.bf16.mxu0 %v4122
          %4771 = vmatpush1.bf16.msra.mxu0 %v4121
          %4772 = vmatprep.subr.bf16.mxu0 %v4126
          %4773 = vmatpush1.bf16.msra.mxu0 %v4125
          %4774 = vmatprep.subr.bf16.mxu0 %v4130
          %4775 = vmatpush1.bf16.msra.mxu0 %v4129
          %4776 = vmatprep.subr.bf16.mxu0 %v4134
          %4777 = vmatpush1.bf16.msra.mxu0 %v4133
          %4778 = vmatprep.subr.bf16.mxu0 %v4138
          %4779 = vmatpush1.bf16.msra.mxu0 %v4137
          %4780 = vmatprep.subr.bf16.mxu0 %v4142
          %4781 = vmatpush1.bf16.msra.mxu0 %v4141
          %4782 = vmatprep.subr.bf16.mxu0 %v4146
          %4783 = vmatpush1.bf16.msra.mxu0 %v4145
          %4784 = vmatprep.subr.bf16.mxu0 %v4150
          %4785 = vmatpush1.bf16.msra.mxu0 %v4149
          %4786 = vmatprep.subr.bf16.mxu0 %v4154
          %4787 = vmatpush1.bf16.msra.mxu0 %v4153
          %4788 = vmatprep.subr.bf16.mxu0 %v4158
          %4789 = vmatpush1.bf16.msra.mxu0 %v4157
          %4790 = vmatprep.subr.bf16.mxu0 %v4162
          %4791 = vmatpush1.bf16.msra.mxu0 %v4161
          %4792 = vmatprep.subr.bf16.mxu0 %v4166
          %4793 = vmatpush1.bf16.msra.mxu0 %v4165
          %4794 = vmatprep.subr.bf16.mxu0 %v4170
          %4795 = vmatpush1.bf16.msra.mxu0 %v4169
          %4796 = vmatprep.subr.bf16.mxu0 %v4174
          %4797 = vmatpush1.bf16.msra.mxu0 %v4173
          %4798 = vmatprep.subr.bf16.mxu0 %v4178
          %4799 = vmatpush1.bf16.msra.mxu0 %v4177
          %4800 = vmatprep.mubr.bf16.mxu0 %v3000
          %4801 = vmatmul.mubr.bf16.gmra.mrb[0].mxu0 %v2999
          %v4802 = vpop.f32.mrb[0].mxu0
          %v4803 = vadd.f32 %v4762, %v4802
          %v4804 = vpop.f32.mrb[0].mxu0
          %v4805 = vadd.f32 %v4764, %v4804
          %v4806 = vpop.f32.mrb[0].mxu0
          %v4807 = vpop.f32.mrb[0].mxu0
          %4808 = vdwg.mxu0
          %4809 = vmatprep.subr.bf16.mxu0 %v4182
          %4810 = vmatpush1.bf16.msra.mxu0 %v4181
          %4811 = vmatprep.subr.bf16.mxu0 %v4186
          %4812 = vmatpush1.bf16.msra.mxu0 %v4185
          %4813 = vmatprep.subr.bf16.mxu0 %v4190
          %4814 = vmatpush1.bf16.msra.mxu0 %v4189
          %4815 = vmatprep.subr.bf16.mxu0 %v4194
          %4816 = vmatpush1.bf16.msra.mxu0 %v4193
          %4817 = vmatprep.subr.bf16.mxu0 %v4198
          %4818 = vmatpush1.bf16.msra.mxu0 %v4197
          %4819 = vmatprep.subr.bf16.mxu0 %v4202
          %4820 = vmatpush1.bf16.msra.mxu0 %v4201
          %4821 = vmatprep.subr.bf16.mxu0 %v4206
          %4822 = vmatpush1.bf16.msra.mxu0 %v4205
          %4823 = vmatprep.subr.bf16.mxu0 %v4210
          %4824 = vmatpush1.bf16.msra.mxu0 %v4209
          %4825 = vmatprep.subr.bf16.mxu0 %v4214
          %4826 = vmatpush1.bf16.msra.mxu0 %v4213
          %4827 = vmatprep.subr.bf16.mxu0 %v4218
          %4828 = vmatpush1.bf16.msra.mxu0 %v4217
          %4829 = vmatprep.subr.bf16.mxu0 %v4222
          %4830 = vmatpush1.bf16.msra.mxu0 %v4221
          %4831 = vmatprep.subr.bf16.mxu0 %v4226
          %4832 = vmatpush1.bf16.msra.mxu0 %v4225
          %4833 = vmatprep.subr.bf16.mxu0 %v4230
          %4834 = vmatpush1.bf16.msra.mxu0 %v4229
          %4835 = vmatprep.subr.bf16.mxu0 %v4234
          %4836 = vmatpush1.bf16.msra.mxu0 %v4233
          %4837 = vmatprep.subr.bf16.mxu0 %v4238
          %4838 = vmatpush1.bf16.msra.mxu0 %v4237
          %4839 = vmatprep.subr.bf16.mxu0 %v4242
          %4840 = vmatpush1.bf16.msra.mxu0 %v4241
          %4841 = vmatprep.mubr.bf16.mxu0 %v3002
          %4842 = vmatmul.mubr.bf16.gmra.mrb[0].mxu0 %v3001
          %v4843 = vpop.f32.mrb[0].mxu0
          %v4844 = vadd.f32 %v4803, %v4843
          %v4845 = vpop.f32.mrb[0].mxu0
          %v4846 = vadd.f32 %v4805, %v4845
          %v4847 = vpop.f32.mrb[0].mxu0
          %v4848 = vpop.f32.mrb[0].mxu0
          %4849 = vdwg.mxu0
          %4850 = vmatprep.subr.bf16.mxu0 %v4246
          %4851 = vmatpush1.bf16.msra.mxu0 %v4245
          %4852 = vmatprep.subr.bf16.mxu0 %v4250
          %4853 = vmatpush1.bf16.msra.mxu0 %v4249
          %4854 = vmatprep.subr.bf16.mxu0 %v4254
          %4855 = vmatpush1.bf16.msra.mxu0 %v4253
          %4856 = vmatprep.subr.bf16.mxu0 %v4258
          %4857 = vmatpush1.bf16.msra.mxu0 %v4257
          %4858 = vmatprep.subr.bf16.mxu0 %v4262
          %4859 = vmatpush1.bf16.msra.mxu0 %v4261
          %4860 = vmatprep.subr.bf16.mxu0 %v4266
          %4861 = vmatpush1.bf16.msra.mxu0 %v4265
          %4862 = vmatprep.subr.bf16.mxu0 %v4270
          %4863 = vmatpush1.bf16.msra.mxu0 %v4269
          %4864 = vmatprep.subr.bf16.mxu0 %v4274
          %4865 = vmatpush1.bf16.msra.mxu0 %v4273
          %4866 = vmatprep.subr.bf16.mxu0 %v4278
          %4867 = vmatpush1.bf16.msra.mxu0 %v4277
          %4868 = vmatprep.subr.bf16.mxu0 %v4282
          %4869 = vmatpush1.bf16.msra.mxu0 %v4281
          %4870 = vmatprep.subr.bf16.mxu0 %v4286
          %4871 = vmatpush1.bf16.msra.mxu0 %v4285
          %4872 = vmatprep.subr.bf16.mxu0 %v4290
          %4873 = vmatpush1.bf16.msra.mxu0 %v4289
          %4874 = vmatprep.subr.bf16.mxu0 %v4294
          %4875 = vmatpush1.bf16.msra.mxu0 %v4293
          %4876 = vmatprep.subr.bf16.mxu0 %v4298
          %4877 = vmatpush1.bf16.msra.mxu0 %v4297
          %4878 = vmatprep.subr.bf16.mxu0 %v4302
          %4879 = vmatpush1.bf16.msra.mxu0 %v4301
          %4880 = vmatprep.subr.bf16.mxu0 %v4306
          %4881 = vmatpush1.bf16.msra.mxu0 %v4305
          %4882 = vmatprep.mubr.bf16.mxu0 %v3004
          %4883 = vmatmul.mubr.bf16.gmra.mrb[0].mxu0 %v3003
          %v4884 = vpop.f32.mrb[0].mxu0
          %v4885 = vadd.f32 %v4844, %v4884
          %v4886 = vpop.f32.mrb[0].mxu0
          %v4887 = vadd.f32 %v4846, %v4886
          %v4888 = vpop.f32.mrb[0].mxu0
          %v4889 = vpop.f32.mrb[0].mxu0
          %4890 = vdwg.mxu0
          %vm4891 = vcmask 1041408
          %v4892 = vsel %vm4891, %v4721, 0.0
          %v4893 = vrot.slane %v4892, 4
          %v4894 = vadd.f32 %v4892, %v4893
          %v4895 = vrot.slane %v4894, 2
          %v4896 = vadd.f32 %v4894, %v4895
          %v4897 = vrot.slane %v4896, 1
          %v4898 = vadd.f32 %v4896, %v4897
          %v4899 = vsel %vm4891, %v4723, 0.0
          %v4900 = vrot.slane %v4899, 4
          %v4901 = vadd.f32 %v4899, %v4900
          %v4902 = vrot.slane %v4901, 2
          %v4903 = vadd.f32 %v4901, %v4902
          %v4904 = vrot.slane %v4903, 1
          %v4905 = vadd.f32 %v4903, %v4904
          %v4906 = vsel %vm4891, %v4885, 0.0
          %v4907 = vrot.slane %v4906, 4
          %v4908 = vadd.f32 %v4906, %v4907
          %v4909 = vrot.slane %v4908, 2
          %v4910 = vadd.f32 %v4908, %v4909
          %v4911 = vrot.slane %v4910, 1
          %v4912 = vadd.f32 %v4910, %v4911
          %v4913 = vsel %vm4891, %v4887, 0.0
          %v4914 = vrot.slane %v4913, 4
          %v4915 = vadd.f32 %v4913, %v4914
          %v4916 = vrot.slane %v4915, 2
          %v4917 = vadd.f32 %v4915, %v4916
          %v4918 = vrot.slane %v4917, 1
          %v4919 = vadd.f32 %v4917, %v4918
          %v4920 = vrcp.pop 2.0
          %v4921 = vmul.f32 %v4898, %v4920
          %v4922 = vmul.f32 %v4905, %v4920
          %v4923 = vmul.f32 %v4912, %v4920
          %v4924 = vmul.f32 %v4919, %v4920
          %v4925 = vsub.f32 %v4721, %v4921
          %v4926 = vsub.f32 %v4723, %v4922
          %v4927 = vsub.f32 %v4885, %v4923
          %v4928 = vsub.f32 %v4887, %v4924
          %v4929 = vmul.f32 %v4925, %v4925
          %v4930 = vmul.f32 %v4926, %v4926
          %v4931 = vmul.f32 %v4927, %v4927
          %v4932 = vmul.f32 %v4928, %v4928
          %v4933 = vsel %vm4891, %v4929, 0.0
          %v4934 = vrot.slane %v4933, 4
          %v4935 = vadd.f32 %v4933, %v4934
          %v4936 = vrot.slane %v4935, 2
          %v4937 = vadd.f32 %v4935, %v4936
          %v4938 = vrot.slane %v4937, 1
          %v4939 = vadd.f32 %v4937, %v4938
          %v4940 = vsel %vm4891, %v4930, 0.0
          %v4941 = vrot.slane %v4940, 4
          %v4942 = vadd.f32 %v4940, %v4941
          %v4943 = vrot.slane %v4942, 2
          %v4944 = vadd.f32 %v4942, %v4943
          %v4945 = vrot.slane %v4944, 1
          %v4946 = vadd.f32 %v4944, %v4945
          %v4947 = vsel %vm4891, %v4931, 0.0
          %v4948 = vrot.slane %v4947, 4
          %v4949 = vadd.f32 %v4947, %v4948
          %v4950 = vrot.slane %v4949, 2
          %v4951 = vadd.f32 %v4949, %v4950
          %v4952 = vrot.slane %v4951, 1
          %v4953 = vadd.f32 %v4951, %v4952
          %v4954 = vsel %vm4891, %v4932, 0.0
          %v4955 = vrot.slane %v4954, 4
          %v4956 = vadd.f32 %v4954, %v4955
          %v4957 = vrot.slane %v4956, 2
          %v4958 = vadd.f32 %v4956, %v4957
          %v4959 = vrot.slane %v4958, 1
          %v4960 = vadd.f32 %v4958, %v4959
          %v4961 = vmul.f32 %v4939, %v4920
          %v4962 = vmul.f32 %v4946, %v4920
          %v4963 = vmul.f32 %v4953, %v4920
          %v4964 = vmul.f32 %v4960, %v4920
          %v4965 = vadd.f32 %v4961, 1e-05
          %v4966 = vadd.f32 %v4962, 1e-05
          %v4967 = vadd.f32 %v4963, 1e-05
          %v4968 = vadd.f32 %v4964, 1e-05
          %v4969 = vrsqrt.pop %v4965
          %v4970 = vrsqrt.pop %v4966
          %v4971 = vrsqrt.pop %v4967
          %v4972 = vrsqrt.pop %v4968
          %v4973 = vmul.f32 %v4925, %v4969
          %v4974 = vmul.f32 %v4926, %v4970
          %v4975 = vmul.f32 %v4927, %v4971
          %v4976 = vmul.f32 %v4928, %v4972
          %v4977 = vld [vmem:[%s14] sm:$0xf]
          %v4979 = vlaneseq
          %v4980 = vshrl.u32 %v4979, 7
          %v4981 = vsub.s32 0, %v4980
          %v4982 = vrot.slane %v4977, %v4981
          %v4983 = vlaneseq
          %v4984 = vshrl.u32 %v4983, 7
          %v4985 = vsub.s32 1, %v4984
          %v4986 = vrot.slane %v4977, %v4985
          %v4987 = vlaneseq
          %v4988 = vshrl.u32 %v4987, 7
          %v4989 = vsub.s32 2, %v4988
          %v4990 = vrot.slane %v4977, %v4989
          %v4991 = vlaneseq
          %v4992 = vshrl.u32 %v4991, 7
          %v4993 = vsub.s32 3, %v4992
          %v4994 = vrot.slane %v4977, %v4993
          %v4999 = vmul.f32 %v4973, %v4982
          %v5000 = vmul.f32 %v4974, %v4986
          %v5001 = vmul.f32 %v4975, %v4990
          %v5002 = vmul.f32 %v4976, %v4994
          %v5003 = vld [vmem:[%s15] sm:$0xf]
          %v5005 = vlaneseq
          %v5006 = vshrl.u32 %v5005, 7
          %v5007 = vsub.s32 0, %v5006
          %v5008 = vrot.slane %v5003, %v5007
          %v5009 = vlaneseq
          %v5010 = vshrl.u32 %v5009, 7
          %v5011 = vsub.s32 1, %v5010
          %v5012 = vrot.slane %v5003, %v5011
          %v5013 = vlaneseq
          %v5014 = vshrl.u32 %v5013, 7
          %v5015 = vsub.s32 2, %v5014
          %v5016 = vrot.slane %v5003, %v5015
          %v5017 = vlaneseq
          %v5018 = vshrl.u32 %v5017, 7
          %v5019 = vsub.s32 3, %v5018
          %v5020 = vrot.slane %v5003, %v5019
          %v5025 = vadd.f32 %v4999, %v5008
          %v5026 = vadd.f32 %v5000, %v5012
          %v5027 = vadd.f32 %v5001, %v5016
          %v5028 = vadd.f32 %v5002, %v5020
          %v5029 = vmax.f32 %v5025, 0.0
          %v5030 = vmax.f32 %v5026, 0.0
          %v5031 = vmax.f32 %v5027, 0.0
          %v5032 = vmax.f32 %v5028, 0.0
          %v5033 = vpack.c.bf16 %v5029, %v5029
          %v5034 = vpack.c.bf16 %v5030, %v5030
          %v5035 = vpack.c.bf16 %v5031, %v5031
          %v5036 = vpack.c.bf16 %v5032, %v5032
          %v5037 = vld [vmem:[%s16] sm:$0xff]
          %v5038 = vld [vmem:[%s16 + $0x8] sm:$0xff]
          %v5039 = vld [vmem:[%s16 + $0x10] sm:$0xff]
          %v5040 = vld [vmem:[%s16 + $0x18] sm:$0xff]
          %v5041 = vld [vmem:[%s16 + $0x20] sm:$0xff]
          %v5042 = vld [vmem:[%s16 + $0x28] sm:$0xff]
          %v5043 = vld [vmem:[%s16 + $0x30] sm:$0xff]
          %v5044 = vld [vmem:[%s16 + $0x38] sm:$0xff]
          %v5045 = vld [vmem:[%s16 + $0x40] sm:$0xff]
          %v5046 = vld [vmem:[%s16 + $0x48] sm:$0xff]
          %v5047 = vld [vmem:[%s16 + $0x50] sm:$0xff]
          %v5048 = vld [vmem:[%s16 + $0x58] sm:$0xff]
          %v5049 = vld [vmem:[%s16 + $0x60] sm:$0xff]
          %v5050 = vld [vmem:[%s16 + $0x68] sm:$0xff]
          %v5051 = vld [vmem:[%s16 + $0x70] sm:$0xff]
          %v5052 = vld [vmem:[%s16 + $0x78] sm:$0xff]
          %v5053 = vld [vmem:[%s16 + $0x80] sm:$0xff]
          %v5054 = vld [vmem:[%s16 + $0x88] sm:$0xff]
          %v5055 = vld [vmem:[%s16 + $0x90] sm:$0xff]
          %v5056 = vld [vmem:[%s16 + $0x98] sm:$0xff]
          %v5057 = vld [vmem:[%s16 + $0xa0] sm:$0xff]
          %v5058 = vld [vmem:[%s16 + $0xa8] sm:$0xff]
          %v5059 = vld [vmem:[%s16 + $0xb0] sm:$0xff]
          %v5060 = vld [vmem:[%s16 + $0xb8] sm:$0xff]
          %v5061 = vld [vmem:[%s16 + $0xc0] sm:$0xff]
          %v5062 = vld [vmem:[%s16 + $0xc8] sm:$0xff]
          %v5063 = vld [vmem:[%s16 + $0xd0] sm:$0xff]
          %v5064 = vld [vmem:[%s16 + $0xd8] sm:$0xff]
          %v5065 = vld [vmem:[%s16 + $0xe0] sm:$0xff]
          %v5066 = vld [vmem:[%s16 + $0xe8] sm:$0xff]
          %v5067 = vld [vmem:[%s16 + $0xf0] sm:$0xff]
          %v5068 = vld [vmem:[%s16 + $0xf8] sm:$0xff]
          %v5069 = vld [vmem:[%s16 + $0x100] sm:$0xff]
          %v5070 = vld [vmem:[%s16 + $0x108] sm:$0xff]
          %v5071 = vld [vmem:[%s16 + $0x110] sm:$0xff]
          %v5072 = vld [vmem:[%s16 + $0x118] sm:$0xff]
          %v5073 = vld [vmem:[%s16 + $0x120] sm:$0xff]
          %v5074 = vld [vmem:[%s16 + $0x128] sm:$0xff]
          %v5075 = vld [vmem:[%s16 + $0x130] sm:$0xff]
          %v5076 = vld [vmem:[%s16 + $0x138] sm:$0xff]
          %v5077 = vld [vmem:[%s16 + $0x140] sm:$0xff]
          %v5078 = vld [vmem:[%s16 + $0x148] sm:$0xff]
          %v5079 = vld [vmem:[%s16 + $0x150] sm:$0xff]
          %v5080 = vld [vmem:[%s16 + $0x158] sm:$0xff]
          %v5081 = vld [vmem:[%s16 + $0x160] sm:$0xff]
          %v5082 = vld [vmem:[%s16 + $0x168] sm:$0xff]
          %v5083 = vld [vmem:[%s16 + $0x170] sm:$0xff]
          %v5084 = vld [vmem:[%s16 + $0x178] sm:$0xff]
          %v5085 = vld [vmem:[%s16 + $0x180] sm:$0xff]
          %v5086 = vld [vmem:[%s16 + $0x188] sm:$0xff]
          %v5087 = vld [vmem:[%s16 + $0x190] sm:$0xff]
          %v5088 = vld [vmem:[%s16 + $0x198] sm:$0xff]
          %v5089 = vld [vmem:[%s16 + $0x1a0] sm:$0xff]
          %v5090 = vld [vmem:[%s16 + $0x1a8] sm:$0xff]
          %v5091 = vld [vmem:[%s16 + $0x1b0] sm:$0xff]
          %v5092 = vld [vmem:[%s16 + $0x1b8] sm:$0xff]
          %v5093 = vld [vmem:[%s16 + $0x1c0] sm:$0xff]
          %v5094 = vld [vmem:[%s16 + $0x1c8] sm:$0xff]
          %v5095 = vld [vmem:[%s16 + $0x1d0] sm:$0xff]
          %v5096 = vld [vmem:[%s16 + $0x1d8] sm:$0xff]
          %v5097 = vld [vmem:[%s16 + $0x1e0] sm:$0xff]
          %v5098 = vld [vmem:[%s16 + $0x1e8] sm:$0xff]
          %v5099 = vld [vmem:[%s16 + $0x1f0] sm:$0xff]
          %v5100 = vld [vmem:[%s16 + $0x1f8] sm:$0xff]
          %v5101 = vld [vmem:[%s17] sm:$0x3]
          %v5103 = vlaneseq
          %v5104 = vshrl.u32 %v5103, 7
          %v5105 = vsub.s32 0, %v5104
          %v5106 = vrot.slane %v5101, %v5105
          %v5107 = vlaneseq
          %v5108 = vshrl.u32 %v5107, 7
          %v5109 = vsub.s32 1, %v5108
          %v5110 = vrot.slane %v5101, %v5109
          %v5177 = vunpack.c.l.b16 %v5037
          %v5178 = vunpack.c.h.b16 %v5037
          %v5179 = vunpack.c.l.b16 %v5038
          %v5180 = vunpack.c.h.b16 %v5038
          %v5181 = vunpack.c.l.b16 %v5039
          %v5182 = vunpack.c.h.b16 %v5039
          %v5183 = vunpack.c.l.b16 %v5040
          %v5184 = vunpack.c.h.b16 %v5040
          %v5185 = vunpack.c.l.b16 %v5041
          %v5186 = vunpack.c.h.b16 %v5041
          %v5187 = vunpack.c.l.b16 %v5042
          %v5188 = vunpack.c.h.b16 %v5042
          %v5189 = vunpack.c.l.b16 %v5043
          %v5190 = vunpack.c.h.b16 %v5043
          %v5191 = vunpack.c.l.b16 %v5044
          %v5192 = vunpack.c.h.b16 %v5044
          %v5193 = vunpack.c.l.b16 %v5045
          %v5194 = vunpack.c.h.b16 %v5045
          %v5195 = vunpack.c.l.b16 %v5046
          %v5196 = vunpack.c.h.b16 %v5046
          %v5197 = vunpack.c.l.b16 %v5047
          %v5198 = vunpack.c.h.b16 %v5047
          %v5199 = vunpack.c.l.b16 %v5048
          %v5200 = vunpack.c.h.b16 %v5048
          %v5201 = vunpack.c.l.b16 %v5049
          %v5202 = vunpack.c.h.b16 %v5049
          %v5203 = vunpack.c.l.b16 %v5050
          %v5204 = vunpack.c.h.b16 %v5050
          %v5205 = vunpack.c.l.b16 %v5051
          %v5206 = vunpack.c.h.b16 %v5051
          %v5207 = vunpack.c.l.b16 %v5052
          %v5208 = vunpack.c.h.b16 %v5052
          %v5209 = vunpack.c.l.b16 %v5053
          %v5210 = vunpack.c.h.b16 %v5053
          %v5211 = vunpack.c.l.b16 %v5054
          %v5212 = vunpack.c.h.b16 %v5054
          %v5213 = vunpack.c.l.b16 %v5055
          %v5214 = vunpack.c.h.b16 %v5055
          %v5215 = vunpack.c.l.b16 %v5056
          %v5216 = vunpack.c.h.b16 %v5056
          %v5217 = vunpack.c.l.b16 %v5057
          %v5218 = vunpack.c.h.b16 %v5057
          %v5219 = vunpack.c.l.b16 %v5058
          %v5220 = vunpack.c.h.b16 %v5058
          %v5221 = vunpack.c.l.b16 %v5059
          %v5222 = vunpack.c.h.b16 %v5059
          %v5223 = vunpack.c.l.b16 %v5060
          %v5224 = vunpack.c.h.b16 %v5060
          %v5225 = vunpack.c.l.b16 %v5061
          %v5226 = vunpack.c.h.b16 %v5061
          %v5227 = vunpack.c.l.b16 %v5062
          %v5228 = vunpack.c.h.b16 %v5062
          %v5229 = vunpack.c.l.b16 %v5063
          %v5230 = vunpack.c.h.b16 %v5063
          %v5231 = vunpack.c.l.b16 %v5064
          %v5232 = vunpack.c.h.b16 %v5064
          %v5233 = vunpack.c.l.b16 %v5065
          %v5234 = vunpack.c.h.b16 %v5065
          %v5235 = vunpack.c.l.b16 %v5066
          %v5236 = vunpack.c.h.b16 %v5066
          %v5237 = vunpack.c.l.b16 %v5067
          %v5238 = vunpack.c.h.b16 %v5067
          %v5239 = vunpack.c.l.b16 %v5068
          %v5240 = vunpack.c.h.b16 %v5068
          %v5241 = vunpack.c.l.b16 %v5069
          %v5242 = vunpack.c.h.b16 %v5069
          %v5243 = vunpack.c.l.b16 %v5070
          %v5244 = vunpack.c.h.b16 %v5070
          %v5245 = vunpack.c.l.b16 %v5071
          %v5246 = vunpack.c.h.b16 %v5071
          %v5247 = vunpack.c.l.b16 %v5072
          %v5248 = vunpack.c.h.b16 %v5072
          %v5249 = vunpack.c.l.b16 %v5073
          %v5250 = vunpack.c.h.b16 %v5073
          %v5251 = vunpack.c.l.b16 %v5074
          %v5252 = vunpack.c.h.b16 %v5074
          %v5253 = vunpack.c.l.b16 %v5075
          %v5254 = vunpack.c.h.b16 %v5075
          %v5255 = vunpack.c.l.b16 %v5076
          %v5256 = vunpack.c.h.b16 %v5076
          %v5257 = vunpack.c.l.b16 %v5077
          %v5258 = vunpack.c.h.b16 %v5077
          %v5259 = vunpack.c.l.b16 %v5078
          %v5260 = vunpack.c.h.b16 %v5078
          %v5261 = vunpack.c.l.b16 %v5079
          %v5262 = vunpack.c.h.b16 %v5079
          %v5263 = vunpack.c.l.b16 %v5080
          %v5264 = vunpack.c.h.b16 %v5080
          %v5265 = vunpack.c.l.b16 %v5081
          %v5266 = vunpack.c.h.b16 %v5081
          %v5267 = vunpack.c.l.b16 %v5082
          %v5268 = vunpack.c.h.b16 %v5082
          %v5269 = vunpack.c.l.b16 %v5083
          %v5270 = vunpack.c.h.b16 %v5083
          %v5271 = vunpack.c.l.b16 %v5084
          %v5272 = vunpack.c.h.b16 %v5084
          %v5273 = vunpack.c.l.b16 %v5085
          %v5274 = vunpack.c.h.b16 %v5085
          %v5275 = vunpack.c.l.b16 %v5086
          %v5276 = vunpack.c.h.b16 %v5086
          %v5277 = vunpack.c.l.b16 %v5087
          %v5278 = vunpack.c.h.b16 %v5087
          %v5279 = vunpack.c.l.b16 %v5088
          %v5280 = vunpack.c.h.b16 %v5088
          %v5281 = vunpack.c.l.b16 %v5089
          %v5282 = vunpack.c.h.b16 %v5089
          %v5283 = vunpack.c.l.b16 %v5090
          %v5284 = vunpack.c.h.b16 %v5090
          %v5285 = vunpack.c.l.b16 %v5091
          %v5286 = vunpack.c.h.b16 %v5091
          %v5287 = vunpack.c.l.b16 %v5092
          %v5288 = vunpack.c.h.b16 %v5092
          %v5289 = vunpack.c.l.b16 %v5093
          %v5290 = vunpack.c.h.b16 %v5093
          %v5291 = vunpack.c.l.b16 %v5094
          %v5292 = vunpack.c.h.b16 %v5094
          %v5293 = vunpack.c.l.b16 %v5095
          %v5294 = vunpack.c.h.b16 %v5095
          %v5295 = vunpack.c.l.b16 %v5096
          %v5296 = vunpack.c.h.b16 %v5096
          %v5297 = vunpack.c.l.b16 %v5097
          %v5298 = vunpack.c.h.b16 %v5097
          %v5299 = vunpack.c.l.b16 %v5098
          %v5300 = vunpack.c.h.b16 %v5098
          %v5301 = vunpack.c.l.b16 %v5099
          %v5302 = vunpack.c.h.b16 %v5099
          %v5303 = vunpack.c.l.b16 %v5100
          %v5304 = vunpack.c.h.b16 %v5100
          %v5305 = vpack.c.b16 %v5179, %v5177
          %v5306 = vpack.c.b16 %v5180, %v5178
          %v5307 = vpack.c.b16 %v5183, %v5181
          %v5308 = vpack.c.b16 %v5184, %v5182
          %v5309 = vpack.c.b16 %v5187, %v5185
          %v5310 = vpack.c.b16 %v5188, %v5186
          %v5311 = vpack.c.b16 %v5191, %v5189
          %v5312 = vpack.c.b16 %v5192, %v5190
          %v5313 = vpack.c.b16 %v5195, %v5193
          %v5314 = vpack.c.b16 %v5196, %v5194
          %v5315 = vpack.c.b16 %v5199, %v5197
          %v5316 = vpack.c.b16 %v5200, %v5198
          %v5317 = vpack.c.b16 %v5203, %v5201
          %v5318 = vpack.c.b16 %v5204, %v5202
          %v5319 = vpack.c.b16 %v5207, %v5205
          %v5320 = vpack.c.b16 %v5208, %v5206
          %v5321 = vpack.c.b16 %v5211, %v5209
          %v5322 = vpack.c.b16 %v5212, %v5210
          %v5323 = vpack.c.b16 %v5215, %v5213
          %v5324 = vpack.c.b16 %v5216, %v5214
          %v5325 = vpack.c.b16 %v5219, %v5217
          %v5326 = vpack.c.b16 %v5220, %v5218
          %v5327 = vpack.c.b16 %v5223, %v5221
          %v5328 = vpack.c.b16 %v5224, %v5222
          %v5329 = vpack.c.b16 %v5227, %v5225
          %v5330 = vpack.c.b16 %v5228, %v5226
          %v5331 = vpack.c.b16 %v5231, %v5229
          %v5332 = vpack.c.b16 %v5232, %v5230
          %v5333 = vpack.c.b16 %v5235, %v5233
          %v5334 = vpack.c.b16 %v5236, %v5234
          %v5335 = vpack.c.b16 %v5239, %v5237
          %v5336 = vpack.c.b16 %v5240, %v5238
          %v5337 = vpack.c.b16 %v5243, %v5241
          %v5338 = vpack.c.b16 %v5244, %v5242
          %v5339 = vpack.c.b16 %v5247, %v5245
          %v5340 = vpack.c.b16 %v5248, %v5246
          %v5341 = vpack.c.b16 %v5251, %v5249
          %v5342 = vpack.c.b16 %v5252, %v5250
          %v5343 = vpack.c.b16 %v5255, %v5253
          %v5344 = vpack.c.b16 %v5256, %v5254
          %v5345 = vpack.c.b16 %v5259, %v5257
          %v5346 = vpack.c.b16 %v5260, %v5258
          %v5347 = vpack.c.b16 %v5263, %v5261
          %v5348 = vpack.c.b16 %v5264, %v5262
          %v5349 = vpack.c.b16 %v5267, %v5265
          %v5350 = vpack.c.b16 %v5268, %v5266
          %v5351 = vpack.c.b16 %v5271, %v5269
          %v5352 = vpack.c.b16 %v5272, %v5270
          %v5353 = vpack.c.b16 %v5275, %v5273
          %v5354 = vpack.c.b16 %v5276, %v5274
          %v5355 = vpack.c.b16 %v5279, %v5277
          %v5356 = vpack.c.b16 %v5280, %v5278
          %v5357 = vpack.c.b16 %v5283, %v5281
          %v5358 = vpack.c.b16 %v5284, %v5282
          %v5359 = vpack.c.b16 %v5287, %v5285
          %v5360 = vpack.c.b16 %v5288, %v5286
          %v5361 = vpack.c.b16 %v5291, %v5289
          %v5362 = vpack.c.b16 %v5292, %v5290
          %v5363 = vpack.c.b16 %v5295, %v5293
          %v5364 = vpack.c.b16 %v5296, %v5294
          %v5365 = vpack.c.b16 %v5299, %v5297
          %v5366 = vpack.c.b16 %v5300, %v5298
          %v5367 = vpack.c.b16 %v5303, %v5301
          %v5368 = vpack.c.b16 %v5304, %v5302
          %5433 = vmatprep.subr.bf16.mxu0 %v5306
          %5434 = vmatpush1.bf16.msra.mxu0 %v5305
          %5435 = vmatprep.subr.bf16.mxu0 %v5308
          %5436 = vmatpush1.bf16.msra.mxu0 %v5307
          %5437 = vmatprep.subr.bf16.mxu0 %v5310
          %5438 = vmatpush1.bf16.msra.mxu0 %v5309
          %5439 = vmatprep.subr.bf16.mxu0 %v5312
          %5440 = vmatpush1.bf16.msra.mxu0 %v5311
          %5441 = vmatprep.subr.bf16.mxu0 %v5314
          %5442 = vmatpush1.bf16.msra.mxu0 %v5313
          %5443 = vmatprep.subr.bf16.mxu0 %v5316
          %5444 = vmatpush1.bf16.msra.mxu0 %v5315
          %5445 = vmatprep.subr.bf16.mxu0 %v5318
          %5446 = vmatpush1.bf16.msra.mxu0 %v5317
          %5447 = vmatprep.subr.bf16.mxu0 %v5320
          %5448 = vmatpush1.bf16.msra.mxu0 %v5319
          %5449 = vmatprep.subr.bf16.mxu0 %v5322
          %5450 = vmatpush1.bf16.msra.mxu0 %v5321
          %5451 = vmatprep.subr.bf16.mxu0 %v5324
          %5452 = vmatpush1.bf16.msra.mxu0 %v5323
          %5453 = vmatprep.subr.bf16.mxu0 %v5326
          %5454 = vmatpush1.bf16.msra.mxu0 %v5325
          %5455 = vmatprep.subr.bf16.mxu0 %v5328
          %5456 = vmatpush1.bf16.msra.mxu0 %v5327
          %5457 = vmatprep.subr.bf16.mxu0 %v5330
          %5458 = vmatpush1.bf16.msra.mxu0 %v5329
          %5459 = vmatprep.subr.bf16.mxu0 %v5332
          %5460 = vmatpush1.bf16.msra.mxu0 %v5331
          %5461 = vmatprep.subr.bf16.mxu0 %v5334
          %5462 = vmatpush1.bf16.msra.mxu0 %v5333
          %5463 = vmatprep.subr.bf16.mxu0 %v5336
          %5464 = vmatpush1.bf16.msra.mxu0 %v5335
          %5465 = vmatprep.mubr.bf16.mxu0 %v5034
          %5466 = vmatmul.mubr.bf16.gmra.mrb[0].mxu0 %v5033
          %v5467 = vpop.f32.mrb[0].mxu0
          %v5468 = vadd.f32 %v5106, %v5467
          %v5469 = vpop.f32.mrb[0].mxu0
          %v5470 = vadd.f32 %v5110, %v5469
          %v5471 = vpop.f32.mrb[0].mxu0
          %v5472 = vpop.f32.mrb[0].mxu0
          %5473 = vdwg.mxu0
          %5474 = vmatprep.subr.bf16.mxu0 %v5338
          %5475 = vmatpush1.bf16.msra.mxu0 %v5337
          %5476 = vmatprep.subr.bf16.mxu0 %v5340
          %5477 = vmatpush1.bf16.msra.mxu0 %v5339
          %5478 = vmatprep.subr.bf16.mxu0 %v5342
          %5479 = vmatpush1.bf16.msra.mxu0 %v5341
          %5480 = vmatprep.subr.bf16.mxu0 %v5344
          %5481 = vmatpush1.bf16.msra.mxu0 %v5343
          %5482 = vmatprep.subr.bf16.mxu0 %v5346
          %5483 = vmatpush1.bf16.msra.mxu0 %v5345
          %5484 = vmatprep.subr.bf16.mxu0 %v5348
          %5485 = vmatpush1.bf16.msra.mxu0 %v5347
          %5486 = vmatprep.subr.bf16.mxu0 %v5350
          %5487 = vmatpush1.bf16.msra.mxu0 %v5349
          %5488 = vmatprep.subr.bf16.mxu0 %v5352
          %5489 = vmatpush1.bf16.msra.mxu0 %v5351
          %5490 = vmatprep.subr.bf16.mxu0 %v5354
          %5491 = vmatpush1.bf16.msra.mxu0 %v5353
          %5492 = vmatprep.subr.bf16.mxu0 %v5356
          %5493 = vmatpush1.bf16.msra.mxu0 %v5355
          %5494 = vmatprep.subr.bf16.mxu0 %v5358
          %5495 = vmatpush1.bf16.msra.mxu0 %v5357
          %5496 = vmatprep.subr.bf16.mxu0 %v5360
          %5497 = vmatpush1.bf16.msra.mxu0 %v5359
          %5498 = vmatprep.subr.bf16.mxu0 %v5362
          %5499 = vmatpush1.bf16.msra.mxu0 %v5361
          %5500 = vmatprep.subr.bf16.mxu0 %v5364
          %5501 = vmatpush1.bf16.msra.mxu0 %v5363
          %5502 = vmatprep.subr.bf16.mxu0 %v5366
          %5503 = vmatpush1.bf16.msra.mxu0 %v5365
          %5504 = vmatprep.subr.bf16.mxu0 %v5368
          %5505 = vmatpush1.bf16.msra.mxu0 %v5367
          %5506 = vmatprep.mubr.bf16.mxu0 %v5036
          %5507 = vmatmul.mubr.bf16.gmra.mrb[0].mxu0 %v5035
          %v5508 = vpop.f32.mrb[0].mxu0
          %v5509 = vadd.f32 %v5468, %v5508
          %v5510 = vpop.f32.mrb[0].mxu0
          %v5511 = vadd.f32 %v5470, %v5510
          %v5512 = vpop.f32.mrb[0].mxu0
          %v5513 = vpop.f32.mrb[0].mxu0
          %5514 = vdwg.mxu0
          %v5515 = vsel %vm4891, %v5509, 0.0
          %v5516 = vrot.slane %v5515, 4
          %v5517 = vadd.f32 %v5515, %v5516
          %v5518 = vrot.slane %v5517, 2
          %v5519 = vadd.f32 %v5517, %v5518
          %v5520 = vrot.slane %v5519, 1
          %v5521 = vadd.f32 %v5519, %v5520
          %v5522 = vsel %vm4891, %v5511, 0.0
          %v5523 = vrot.slane %v5522, 4
          %v5524 = vadd.f32 %v5522, %v5523
          %v5525 = vrot.slane %v5524, 2
          %v5526 = vadd.f32 %v5524, %v5525
          %v5527 = vrot.slane %v5526, 1
          %v5528 = vadd.f32 %v5526, %v5527
          %v5529 = vmul.f32 %v5521, %v4920
          %v5530 = vmul.f32 %v5528, %v4920
          %v5531 = vsub.f32 %v5509, %v5529
          %v5532 = vsub.f32 %v5511, %v5530
          %v5533 = vmul.f32 %v5531, %v5531
          %v5534 = vmul.f32 %v5532, %v5532
          %v5535 = vsel %vm4891, %v5533, 0.0
          %v5536 = vrot.slane %v5535, 4
          %v5537 = vadd.f32 %v5535, %v5536
          %v5538 = vrot.slane %v5537, 2
          %v5539 = vadd.f32 %v5537, %v5538
          %v5540 = vrot.slane %v5539, 1
          %v5541 = vadd.f32 %v5539, %v5540
          %v5542 = vsel %vm4891, %v5534, 0.0
          %v5543 = vrot.slane %v5542, 4
          %v5544 = vadd.f32 %v5542, %v5543
          %v5545 = vrot.slane %v5544, 2
          %v5546 = vadd.f32 %v5544, %v5545
          %v5547 = vrot.slane %v5546, 1
          %v5548 = vadd.f32 %v5546, %v5547
          %v5549 = vmul.f32 %v5541, %v4920
          %v5550 = vmul.f32 %v5548, %v4920
          %v5551 = vadd.f32 %v5549, 1e-05
          %v5552 = vadd.f32 %v5550, 1e-05
          %v5553 = vrsqrt.pop %v5551
          %v5554 = vrsqrt.pop %v5552
          %v5555 = vmul.f32 %v5531, %v5553
          %v5556 = vmul.f32 %v5532, %v5554
          %v5557 = vld [vmem:[%s18] sm:$0x3]
          %v5559 = vlaneseq
          %v5560 = vshrl.u32 %v5559, 7
          %v5561 = vsub.s32 0, %v5560
          %v5562 = vrot.slane %v5557, %v5561
          %v5563 = vlaneseq
          %v5564 = vshrl.u32 %v5563, 7
          %v5565 = vsub.s32 1, %v5564
          %v5566 = vrot.slane %v5557, %v5565
          %v5569 = vmul.f32 %v5555, %v5562
          %v5570 = vmul.f32 %v5556, %v5566
          %v5571 = vld [vmem:[%s19] sm:$0x3]
          %v5573 = vlaneseq
          %v5574 = vshrl.u32 %v5573, 7
          %v5575 = vsub.s32 0, %v5574
          %v5576 = vrot.slane %v5571, %v5575
          %v5577 = vlaneseq
          %v5578 = vshrl.u32 %v5577, 7
          %v5579 = vsub.s32 1, %v5578
          %v5580 = vrot.slane %v5571, %v5579
          %v5583 = vadd.f32 %v5569, %v5576
          %v5584 = vadd.f32 %v5570, %v5580
          %v5585 = vmax.f32 %v5583, 0.0
          %v5586 = vmax.f32 %v5584, 0.0
          %v5587 = vld [vmem:[%s20] sm:$0xff]
          %v5588 = vld [vmem:[%s20 + $0x8] sm:$0xff]
          %v5589 = vld [vmem:[%s20 + $0x10] sm:$0xff]
          %v5590 = vld [vmem:[%s20 + $0x18] sm:$0xff]
          %v5591 = vld [vmem:[%s20 + $0x20] sm:$0xff]
          %v5592 = vld [vmem:[%s20 + $0x28] sm:$0xff]
          %v5593 = vld [vmem:[%s20 + $0x30] sm:$0xff]
          %v5594 = vld [vmem:[%s20 + $0x38] sm:$0xff]
          %v5595 = vld [vmem:[%s20 + $0x40] sm:$0xff]
          %v5596 = vld [vmem:[%s20 + $0x48] sm:$0xff]
          %v5597 = vld [vmem:[%s20 + $0x50] sm:$0xff]
          %v5598 = vld [vmem:[%s20 + $0x58] sm:$0xff]
          %v5599 = vld [vmem:[%s20 + $0x60] sm:$0xff]
          %v5600 = vld [vmem:[%s20 + $0x68] sm:$0xff]
          %v5601 = vld [vmem:[%s20 + $0x70] sm:$0xff]
          %v5602 = vld [vmem:[%s20 + $0x78] sm:$0xff]
          %v5603 = vld [vmem:[%s20 + $0x80] sm:$0xff]
          %v5604 = vld [vmem:[%s20 + $0x88] sm:$0xff]
          %v5605 = vld [vmem:[%s20 + $0x90] sm:$0xff]
          %v5606 = vld [vmem:[%s20 + $0x98] sm:$0xff]
          %v5607 = vld [vmem:[%s20 + $0xa0] sm:$0xff]
          %v5608 = vld [vmem:[%s20 + $0xa8] sm:$0xff]
          %v5609 = vld [vmem:[%s20 + $0xb0] sm:$0xff]
          %v5610 = vld [vmem:[%s20 + $0xb8] sm:$0xff]
          %v5611 = vld [vmem:[%s20 + $0xc0] sm:$0xff]
          %v5612 = vld [vmem:[%s20 + $0xc8] sm:$0xff]
          %v5613 = vld [vmem:[%s20 + $0xd0] sm:$0xff]
          %v5614 = vld [vmem:[%s20 + $0xd8] sm:$0xff]
          %v5615 = vld [vmem:[%s20 + $0xe0] sm:$0xff]
          %v5616 = vld [vmem:[%s20 + $0xe8] sm:$0xff]
          %v5617 = vld [vmem:[%s20 + $0xf0] sm:$0xff]
          %v5618 = vld [vmem:[%s20 + $0xf8] sm:$0xff]
          %v5619 = vld [vmem:[%s21] sm:$0x1]
          %v5621 = vlaneseq
          %v5622 = vshrl.u32 %v5621, 7
          %v5623 = vsub.s32 0, %v5622
          %v5624 = vrot.slane %v5619, %v5623
          %5626 = vmatprep.subr.mxu0 0.0
          %5627 = vmatpush1.msra.mxu0 %v5587
          %5628 = vmatprep.subr.mxu0 0.0
          %5629 = vmatpush1.msra.mxu0 %v5588
          %5630 = vmatprep.subr.mxu0 0.0
          %5631 = vmatpush1.msra.mxu0 %v5589
          %5632 = vmatprep.subr.mxu0 0.0
          %5633 = vmatpush1.msra.mxu0 %v5590
          %5634 = vmatprep.subr.mxu0 0.0
          %5635 = vmatpush1.msra.mxu0 %v5591
          %5636 = vmatprep.subr.mxu0 0.0
          %5637 = vmatpush1.msra.mxu0 %v5592
          %5638 = vmatprep.subr.mxu0 0.0
          %5639 = vmatpush1.msra.mxu0 %v5593
          %5640 = vmatprep.subr.mxu0 0.0
          %5641 = vmatpush1.msra.mxu0 %v5594
          %5642 = vmatprep.subr.mxu0 0.0
          %5643 = vmatpush1.msra.mxu0 %v5595
          %5644 = vmatprep.subr.mxu0 0.0
          %5645 = vmatpush1.msra.mxu0 %v5596
          %5646 = vmatprep.subr.mxu0 0.0
          %5647 = vmatpush1.msra.mxu0 %v5597
          %5648 = vmatprep.subr.mxu0 0.0
          %5649 = vmatpush1.msra.mxu0 %v5598
          %5650 = vmatprep.subr.mxu0 0.0
          %5651 = vmatpush1.msra.mxu0 %v5599
          %5652 = vmatprep.subr.mxu0 0.0
          %5653 = vmatpush1.msra.mxu0 %v5600
          %5654 = vmatprep.subr.mxu0 0.0
          %5655 = vmatpush1.msra.mxu0 %v5601
          %5656 = vmatprep.subr.mxu0 0.0
          %5657 = vmatpush1.msra.mxu0 %v5602
          %5658 = vmatprep.subr.mxu0 0.0
          %5659 = vmatpush1.msra.mxu0 %v5603
          %5660 = vmatprep.subr.mxu0 0.0
          %5661 = vmatpush1.msra.mxu0 %v5604
          %5662 = vmatprep.subr.mxu0 0.0
          %5663 = vmatpush1.msra.mxu0 %v5605
          %5664 = vmatprep.subr.mxu0 0.0
          %5665 = vmatpush1.msra.mxu0 %v5606
          %5666 = vmatprep.subr.mxu0 0.0
          %5667 = vmatpush1.msra.mxu0 %v5607
          %5668 = vmatprep.subr.mxu0 0.0
          %5669 = vmatpush1.msra.mxu0 %v5608
          %5670 = vmatprep.subr.mxu0 0.0
          %5671 = vmatpush1.msra.mxu0 %v5609
          %5672 = vmatprep.subr.mxu0 0.0
          %5673 = vmatpush1.msra.mxu0 %v5610
          %5674 = vmatprep.subr.mxu0 0.0
          %5675 = vmatpush1.msra.mxu0 %v5611
          %5676 = vmatprep.subr.mxu0 0.0
          %5677 = vmatpush1.msra.mxu0 %v5612
          %5678 = vmatprep.subr.mxu0 0.0
          %5679 = vmatpush1.msra.mxu0 %v5613
          %5680 = vmatprep.subr.mxu0 0.0
          %5681 = vmatpush1.msra.mxu0 %v5614
          %5682 = vmatprep.subr.mxu0 0.0
          %5683 = vmatpush1.msra.mxu0 %v5615
          %5684 = vmatprep.subr.mxu0 0.0
          %5685 = vmatpush1.msra.mxu0 %v5616
          %5686 = vmatprep.subr.mxu0 0.0
          %5687 = vmatpush1.msra.mxu0 %v5617
          %5688 = vmatprep.subr.mxu0 0.0
          %5689 = vmatpush1.msra.mxu0 %v5618
          %5690 = vmatprep.mubr.f32.mxu0 %v5586
          %5691 = vmatmul.mubr.f32.gmra.mrb[0].mxu0 %v5585
          %v5692 = vpop.f32.mrb[0].mxu0
          %v5693 = vadd.f32 %v5624, %v5692
          %v5694 = vpop.f32.mrb[0].mxu0
          %5695 = vdwg.mxu0
          %v5696 = vld [vmem:[%s22] sm:$0x1]
          %v5698 = vlaneseq
          %v5699 = vshrl.u32 %v5698, 7
          %v5700 = vsub.s32 0, %v5699
          %v5701 = vrot.slane %v5696, %v5700
          %v5703 = vadd.f32 %v5693, %v5701
          %vm5704 = vcmask 66560
          %5705 = vst.msk [vmem:[%s23] sm:$0x3] %vm5704, %v5703
        $region136: #{tnet_forward.1} parent=123 // pred_fallthru
          _
      $region124: #{tnet_forward.1} parent=111 // pred_fallthru
        _
      // Predicated region
      $region137: #{tnet_forward.1} parent=111 // pred_check
        %p5706 = pneg %p556
      $region138: #{tnet_forward.1} parent=111 // pred_check_branch
        %5708 = sbr.rel (%p5706) target = $region140
      $region139: #{tnet_forward.1} parent=111 // pred_region
        _
      $region140: #{tnet_forward.1} parent=111 // pred_fallthru
        _
      // Predicated region
      $region141: #{tnet_forward.1} parent=111 // pred_check
        %p5709 = pneg %p556
      $region142: #{tnet_forward.1} parent=111 // pred_check_branch
        %5711 = sbr.rel (%p5709) target = $region144
      $region143: #{tnet_forward.1} parent=111 // pred_region
        _
      $region144: #{tnet_forward.1} parent=111 // pred_fallthru
        _
    $region112: #{tnet_forward.1} parent=5 // pred_fallthru
      _
    %p5712 = scmp.le.s32.totalorder 2, %s29
    // Predicated region
    $region145: #{tnet_forward.1} parent=5 // pred_check
      %p5713 = pneg %p5712
    $region146: #{tnet_forward.1} parent=5 // pred_check_branch
      %5715 = sbr.rel (%p5713) target = $region148
    $region147: #{tnet_forward.1} parent=5 // pred_region
      %s5716 = ssub.s32 %s29, 2
    $region148: #{tnet_forward.1} parent=5 // pred_fallthru
      _
  $region6: #{tnet_forward.1} parent=0 // loop_footer
    %s33 = sadd.s32 1, %s29
  $region7: #{tnet_forward.1} parent=0 // loop_footer_branch
    %28 = sbr.rel target = $region3
  $region8: #{tnet_forward.1} parent=0 // loop_exit
    _

</llo_original>
